<compile_context>
chip_gen: v7x
topology: tpu7x:2x2x1
jax: 0.10.0
libtpu: 0.0.40
codegen_flags: <defaults>
</compile_context>

<pallas_src>
import functools

import jax
import jax.numpy as jnp
from jax import lax
from jax.experimental import pallas as pl
from jax.experimental.pallas import tpu as pltpu


# ---------------------------------------------------------------------------
# helpers
# ---------------------------------------------------------------------------
def _round_up(x, m):
    return ((x + m - 1) // m) * m


def _vmem_budget_bytes():
    """Generation-aware VMEM limit: ~3/4 of physical, capped at 100 MiB.

    -> ~48 MiB on v7x (64 MiB physical), ~96 MiB on v5e/v6e (128 MiB physical).
    """
    phys = 64 * 1024 * 1024  # conservative default (v7x per-core VMEM)
    try:
        phys = int(getattr(pltpu.get_tpu_info(), "vmem_capacity_bytes", phys))
    except Exception:
        pass
    return min(phys * 3 // 4, 100 * 1024 * 1024)


def _pick_time_chunk(T, Bp, In_p, Hp, itemsize, budget, max_chunk=32):
    """Largest Tc (<= max_chunk) whose per-layer VMEM working set fits `budget`."""
    fixed = (2 * (In_p + Hp) * 3 * Hp * itemsize   # wi, wh (double-buffered)
             + 2 * 4 * (3 * Hp + Hp)               # bi, bhn (f32, double-buffered)
             + 2 * Bp * Hp * 4                     # hT output block
             + Bp * Hp * 4)                        # h scratch
    per_t = Bp * (2 * In_p * itemsize              # x block (double-buffered)
                  + 2 * Hp * itemsize              # out block (double-buffered)
                  + 3 * Hp * 4)                    # gx scratch (f32)
    avail = budget - fixed
    tc = min(max_chunk, T, avail // per_t if per_t > 0 else max_chunk)
    return int(max(1, tc))


def _pad2(w, rows, cols):
    return jnp.pad(w, ((0, rows - w.shape[0]), (0, cols - w.shape[1])))


def pack_gru_params(p, in_padded, h_padded, compute_dtype):
    """Fuse + pad per-layer GRU weights.

    wi: (In_p, 3Hp)  = [Wir | Wiz | Win], zero-padded
    wh: (Hp,  3Hp)   = [Whr | Whz | Whn], zero-padded
    bi: (1,   3Hp)   = [bir+bhr | biz+bhz | bin]   (folded into the input path)
    bhn:(1,   Hp)                                   (stays inside r*(hWhn+bhn))
    """
    wi = jnp.concatenate([_pad2(p["wir"], in_padded, h_padded),
                          _pad2(p["wiz"], in_padded, h_padded),
                          _pad2(p["win"], in_padded, h_padded)], axis=1)
    wh = jnp.concatenate([_pad2(p["whr"], h_padded, h_padded),
                          _pad2(p["whz"], h_padded, h_padded),
                          _pad2(p["whn"], h_padded, h_padded)], axis=1)
    bi = jnp.concatenate([_pad2(p["bir"] + p["bhr"], 1, h_padded),
                          _pad2(p["biz"] + p["bhz"], 1, h_padded),
                          _pad2(p["bin"], 1, h_padded)], axis=1)
    bhn = _pad2(p["bhn"], 1, h_padded)
    return {
        "wi": wi.astype(compute_dtype),
        "wh": wh.astype(compute_dtype),
        "bi": bi.astype(jnp.float32),
        "bhn": bhn.astype(jnp.float32),
    }


# ---------------------------------------------------------------------------
# Pallas kernel: fused input projection + serial GRU recurrence
# ---------------------------------------------------------------------------
def gru_fused_kernel(x_ref, wi_ref, wh_ref, bi_ref, bhn_ref,
                     out_ref, hT_ref, h_scratch, gx_scratch,
                     *, seq_len, chunk, unroll):
    # grid = (time_chunks,)  ["arbitrary" -- the recurrence is serial in time]
    t = pl.program_id(0)
    nb, hp = h_scratch.shape

    @pl.when(t == 0)
    def _():
        h_scratch[...] = jnp.zeros_like(h_scratch)

    # ---- chunk input projection: one (Tc*Bp, In) x (In, 3Hp) MXU matmul ----
    # Parallel work hoisted off the serial path; gx never touches HBM.
    # (Folded input+hidden r/z biases and the n input bias ride along in bi.)
    gx_scratch[...] = (
        jnp.dot(x_ref[...], wi_ref[...], preferred_element_type=jnp.float32)
        + bi_ref[...]
    )

    wh = wh_ref[...]                                        # (Hp, 3Hp), resident
    bhn = jnp.broadcast_to(bhn_ref[...], (nb, hp))          # hoisted broadcast

    def sigmoid(v):                                         # single EUP op/gate
        return 0.5 * jnp.tanh(0.5 * v) + 0.5

    def step(s, h):
        row = pl.multiple_of(s * nb, 8)
        g = gx_scratch[pl.ds(row, nb), :]                   # (Bp, 3Hp) f32
        gh = jnp.dot(h.astype(wh.dtype), wh,                # one MXU push/step
                     preferred_element_type=jnp.float32)    # (Bp, 3Hp)
        r = sigmoid(g[:, :hp] + gh[:, :hp])
        z = sigmoid(g[:, hp:2 * hp] + gh[:, hp:2 * hp])
        n = jnp.tanh(g[:, 2 * hp:] + r * (gh[:, 2 * hp:] + bhn))
        h_new = n + z * (h - n)                             # == (1-z)*n + z*h
        if seq_len % chunk != 0:                            # static: T was padded
            keep = ((t * chunk + s) < seq_len).astype(h_new.dtype)
            h_new = h + keep * (h_new - h)                  # padded step: identity
        out_ref[pl.ds(row, nb), :] = h_new.astype(out_ref.dtype)
        return h_new

    h_final = lax.fori_loop(0, chunk, step, h_scratch[...], unroll=unroll)
    h_scratch[...] = h_final

    @pl.when(t == pl.num_programs(0) - 1)
    def _():
        hT_ref[...] = h_final.astype(hT_ref.dtype)


def gru_layer(x_flat, packed, *, T, T_pad, Tc, Bp, compute_dtype, vmem_limit):
    """One GRU layer over a flattened (T_pad*Bp, In_p) time-major input.

    Returns (out_flat (T_pad*Bp, Hp) compute_dtype, hT (Bp, Hp) f32), padded.
    """
    _, In_p = x_flat.shape
    Hp = packed["bhn"].shape[-1]
    assert Bp % 8 == 0 and Hp % 128 == 0 and In_p % 8 == 0
    nt = T_pad // Tc
    unroll = True if Hp <= 512 else 4

    kernel = functools.partial(gru_fused_kernel,
                               seq_len=T, chunk=Tc, unroll=unroll)

    out_flat, hT = pl.pallas_call(
        kernel,
        grid=(nt,),
        in_specs=[
            pl.BlockSpec((Tc * Bp, In_p), lambda t: (t, 0)),   # raw x chunk
            pl.BlockSpec((In_p, 3 * Hp), lambda t: (0, 0)),    # fused Wi (resident)
            pl.BlockSpec((Hp, 3 * Hp), lambda t: (0, 0)),      # fused Wh (resident)
            pl.BlockSpec((1, 3 * Hp), lambda t: (0, 0)),       # folded input bias
            pl.BlockSpec((1, Hp), lambda t: (0, 0)),           # bhn
        ],
        out_specs=(
            pl.BlockSpec((Tc * Bp, Hp), lambda t: (t, 0)),     # lane-dense outputs
            pl.BlockSpec((Bp, Hp), lambda t: (0, 0)),          # final h
        ),
        out_shape=(
            jax.ShapeDtypeStruct((T_pad * Bp, Hp), compute_dtype),
            jax.ShapeDtypeStruct((Bp, Hp), jnp.float32),
        ),
        scratch_shapes=[
            pltpu.VMEM((Bp, Hp), jnp.float32),                 # h carry
            pltpu.VMEM((Tc * Bp, 3 * Hp), jnp.float32),        # gx chunk
        ],
        compiler_params=pltpu.CompilerParams(
            dimension_semantics=("arbitrary",),
            vmem_limit_bytes=int(vmem_limit),
        ),
    )(x_flat, packed["wi"], packed["wh"], packed["bi"], packed["bhn"])
    return out_flat, hT


# ---------------------------------------------------------------------------
# encoder forward (embedding lookup is plain-JAX glue)
# ---------------------------------------------------------------------------
def seq2seq_encoder_forward(X, emb_weight, layer_params, *,
                            compute_dtype=jnp.float32):
    """X: (B, T) int32.  Returns (output (T,B,H), state (L,B,H)) like nn.GRU."""
    B, T = X.shape
    H = layer_params[0]["whr"].shape[0]
    E = emb_weight.shape[1]

    Bp = _round_up(B, 8)          # sublane padding
    Hp = _round_up(H, 128)        # lane padding (3Hp is then 128-aligned too)
    Ep = _round_up(E, 8)
    isz = jnp.dtype(compute_dtype).itemsize

    vmem_limit = _vmem_budget_bytes()
    in_worst = max(Ep, Hp)        # one Tc for the whole stack (worst-case layer)
    Tc = _pick_time_chunk(T, Bp, in_worst, Hp, isz, int(vmem_limit * 0.85))
    T_pad = _round_up(T, Tc)

    emb = jnp.take(emb_weight, X, axis=0)          # (B, T, E)   gather glue
    x = jnp.transpose(emb, (1, 0, 2))              # (T, B, E) == X.permute(1,0,2)
    x = jnp.pad(x, ((0, T_pad - T), (0, Bp - B), (0, Ep - E)))
    x_flat = x.reshape(T_pad * Bp, Ep).astype(compute_dtype)

    states = []
    for p in layer_params:
        in_p = x_flat.shape[-1]                    # Ep for layer 0, Hp afterwards
        packed = pack_gru_params(p, in_p, Hp, compute_dtype)
        x_flat, hT = gru_layer(x_flat, packed, T=T, T_pad=T_pad, Tc=Tc, Bp=Bp,
                               compute_dtype=compute_dtype, vmem_limit=vmem_limit)
        states.append(hT[:B, :H])
    # inter-layer activations stay flattened/padded/lane-dense; slice at the end
    output = x_flat.reshape(T_pad, Bp, Hp)[:T, :B, :H].astype(jnp.float32)
    state = jnp.stack(states, axis=0)              # (L, B, H)
    return output, state


# ---------------------------------------------------------------------------
# parameter init + pure-JAX reference (PyTorch GRU gate math)
# ---------------------------------------------------------------------------
def init_params(key, vocab_size, embed_size, num_hiddens, num_layers):
    keys = jax.random.split(key, 1 + num_layers)
    emb_weight = jax.random.normal(keys[0], (vocab_size, embed_size), jnp.float32) * 0.1
    scale = 1.0 / jnp.sqrt(jnp.float32(num_hiddens))
    layer_params = []
    for l in range(num_layers):
        in_size = embed_size if l == 0 else num_hiddens
        ks = jax.random.split(keys[1 + l], 12)

        def u(k, shape):
            return jax.random.uniform(k, shape, jnp.float32, -scale, scale)

        p = {
            "wir": u(ks[0], (in_size, num_hiddens)),
            "wiz": u(ks[1], (in_size, num_hiddens)),
            "win": u(ks[2], (in_size, num_hiddens)),
            "whr": u(ks[3], (num_hiddens, num_hiddens)),
            "whz": u(ks[4], (num_hiddens, num_hiddens)),
            "whn": u(ks[5], (num_hiddens, num_hiddens)),
            "bir": u(ks[6], (1, num_hiddens)),
            "biz": u(ks[7], (1, num_hiddens)),
            "bin": u(ks[8], (1, num_hiddens)),
            "bhr": u(ks[9], (1, num_hiddens)),
            "bhz": u(ks[10], (1, num_hiddens)),
            "bhn": u(ks[11], (1, num_hiddens)),
        }
        layer_params.append(p)
    return emb_weight, layer_params


def gru_reference(X, emb_weight, layer_params):
    """Pure-JAX reference (lax.scan) with the same gate math, for validation."""
    emb = jnp.take(emb_weight, X, axis=0)
    out = jnp.transpose(emb, (1, 0, 2))
    hp = lax.Precision.HIGHEST
    states = []
    for p in layer_params:
        H = p["whr"].shape[0]
        B = out.shape[1]

        def step(h, x, p=p):
            r = jax.nn.sigmoid(jnp.dot(x, p["wir"], precision=hp) + p["bir"]
                               + jnp.dot(h, p["whr"], precision=hp) + p["bhr"])
            z = jax.nn.sigmoid(jnp.dot(x, p["wiz"], precision=hp) + p["biz"]
                               + jnp.dot(h, p["whz"], precision=hp) + p["bhz"])
            n = jnp.tanh(jnp.dot(x, p["win"], precision=hp) + p["bin"]
                         + r * (jnp.dot(h, p["whn"], precision=hp) + p["bhn"]))
            h_new = (1.0 - z) * n + z * h
            return h_new, h_new

        h0 = jnp.zeros((B, H), jnp.float32)
        hT, out = lax.scan(step, h0, out)
        states.append(hT)
    return out, jnp.stack(states, axis=0)


# ---------------------------------------------------------------------------
if __name__ == "__main__":
    vocab_size, embed_size, num_hiddens, num_layers = 20, 16, 32, 2
    batch, seq_len = 4, 8

    key = jax.random.PRNGKey(0)
    k_param, k_x = jax.random.split(key)
    emb_weight, layer_params = init_params(
        k_param, vocab_size, embed_size, num_hiddens, num_layers)
    X = jax.random.randint(k_x, (batch, seq_len), 0, vocab_size, dtype=jnp.int32)

    # f32 path.  The in-kernel MXU matmuls use default precision while the
    # reference uses Precision.HIGHEST, so the tolerance is 1e-3 (per review).
    fwd_f32 = jax.jit(functools.partial(seq2seq_encoder_forward,
                                        compute_dtype=jnp.float32))
    output, state = fwd_f32(X, emb_weight, layer_params)
    output = jax.block_until_ready(output)
    state = jax.block_until_ready(state)

    assert output.shape == (seq_len, batch, num_hiddens)
    assert state.shape == (num_layers, batch, num_hiddens)

    ref_out, ref_state = gru_reference(X, emb_weight, layer_params)
    assert jnp.allclose(output, ref_out, atol=1e-3, rtol=1e-3)
    assert jnp.allclose(state, ref_state, atol=1e-3, rtol=1e-3)

    # bf16 MXU path (recommended on v6e/v7x): bf16 weights + bf16 inter-layer
    # activations, f32 accumulation inside the kernel; loose-tolerance check.
    fwd_bf16 = jax.jit(functools.partial(seq2seq_encoder_forward,
                                         compute_dtype=jnp.bfloat16))
    out_bf, st_bf = fwd_bf16(X, emb_weight, layer_params)
    out_bf = jax.block_until_ready(out_bf)
    st_bf = jax.block_until_ready(st_bf)
    assert out_bf.shape == output.shape and st_bf.shape == state.shape
    assert float(jnp.max(jnp.abs(out_bf - ref_out))) < 5e-2
    assert float(jnp.max(jnp.abs(st_bf - ref_state))) < 5e-2

    print("KERNEL_OK")
</pallas_src>

<mosaic_0001>
module attributes {stable_mosaic.version = 11 : i64} {
  func.func @gru_fused_kernel(%arg0: i32, %arg1: memref<64x16xf32, #tpu.memory_space<vmem>>, %arg2: memref<16x384xf32, #tpu.memory_space<vmem>>, %arg3: memref<128x384xf32, #tpu.memory_space<vmem>>, %arg4: memref<1x384xf32, #tpu.memory_space<vmem>>, %arg5: memref<1x128xf32, #tpu.memory_space<vmem>>, %arg6: memref<64x128xf32, #tpu.memory_space<vmem>>, %arg7: memref<8x128xf32, #tpu.memory_space<vmem>>, %arg8: memref<8x128xf32, #tpu.memory_space<vmem>>, %arg9: memref<64x384xf32, #tpu.memory_space<vmem>>) attributes {dimension_semantics = [#tpu.dimension_semantics<arbitrary>], iteration_bounds = array<i64: 1>, scalar_prefetch = 0 : i64, scratch_operands = 2 : i64, tpu.core_type = #tpu.core_type<tc>, window_params = [{transform_indices = @transform_0, window_bounds = array<i64: 64, 16>}, {pipeline_mode = #tpu.pipeline_mode<synchronous>, transform_indices = @transform_1, window_bounds = array<i64: 16, 384>}, {pipeline_mode = #tpu.pipeline_mode<synchronous>, transform_indices = @transform_2, window_bounds = array<i64: 128, 384>}, {pipeline_mode = #tpu.pipeline_mode<synchronous>, transform_indices = @transform_3, window_bounds = array<i64: 1, 384>}, {pipeline_mode = #tpu.pipeline_mode<synchronous>, transform_indices = @transform_4, window_bounds = array<i64: 1, 128>}, {transform_indices = @transform_5, window_bounds = array<i64: 64, 128>}, {pipeline_mode = #tpu.pipeline_mode<synchronous>, transform_indices = @transform_6, window_bounds = array<i64: 8, 128>}]} {
    %c0_i32 = arith.constant 0 : i32
    %0 = arith.cmpi eq, %arg0, %c0_i32 : i32
    %1 = arith.extui %0 : i1 to i32
    %c0_i32_0 = arith.constant 0 : i32
    %2 = arith.cmpi ne, %1, %c0_i32_0 : i32
    scf.if %2 {
      %cst_99 = arith.constant 0.000000e+00 : f32
      %307 = vector.broadcast %cst_99 : f32 to vector<8x128xf32>
      %c0_100 = arith.constant 0 : index
      %c0_101 = arith.constant 0 : index
      %308 = vector.load %arg8[%c0_100, %c0_101] : memref<8x128xf32, #tpu.memory_space<vmem>>, vector<8x128xf32>
      tpu.vector_store %arg8[%c0_100, %c0_101], %307 {strides = array<i32>} : memref<8x128xf32, #tpu.memory_space<vmem>>, vector<8x128xf32>,
    } else {
    }
    %c0 = arith.constant 0 : index
    %c0_1 = arith.constant 0 : index
    %3 = vector.load %arg1[%c0, %c0_1] : memref<64x16xf32, #tpu.memory_space<vmem>>, vector<64x16xf32>
    %c0_2 = arith.constant 0 : index
    %c0_3 = arith.constant 0 : index
    %4 = vector.load %arg2[%c0_2, %c0_3] : memref<16x384xf32, #tpu.memory_space<vmem>>, vector<16x384xf32>
    %cst = arith.constant dense<0.000000e+00> : vector<64x384xf32>
    %5 = tpu.matmul %3, %4, %cst {dimension_numbers = #tpu.dot_dimension_numbers<[1], [0], [0], [1], [0, 0, 1, 1], [], []>} : vector<64x16xf32>, vector<16x384xf32>, vector<64x384xf32> -> vector<64x384xf32>
    %c0_4 = arith.constant 0 : index
    %c0_5 = arith.constant 0 : index
    %6 = vector.load %arg4[%c0_4, %c0_5] : memref<1x384xf32, #tpu.memory_space<vmem>>, vector<1x384xf32>
    %7 = vector.broadcast %6 : vector<1x384xf32> to vector<64x384xf32>
    %8 = arith.addf %5, %7 : vector<64x384xf32>
    %c0_6 = arith.constant 0 : index
    %c0_7 = arith.constant 0 : index
    %9 = vector.load %arg9[%c0_6, %c0_7] : memref<64x384xf32, #tpu.memory_space<vmem>>, vector<64x384xf32>
    tpu.vector_store %arg9[%c0_6, %c0_7], %8 {strides = array<i32>} : memref<64x384xf32, #tpu.memory_space<vmem>>, vector<64x384xf32>,
    %c0_8 = arith.constant 0 : index
    %c0_9 = arith.constant 0 : index
    %10 = vector.load %arg3[%c0_8, %c0_9] : memref<128x384xf32, #tpu.memory_space<vmem>>, vector<128x384xf32>
    %c0_10 = arith.constant 0 : index
    %c0_11 = arith.constant 0 : index
    %11 = vector.load %arg5[%c0_10, %c0_11] : memref<1x128xf32, #tpu.memory_space<vmem>>, vector<1x128xf32>
    %12 = vector.shape_cast %11 : vector<1x128xf32> to vector<1x128xf32>
    %13 = vector.broadcast %12 : vector<1x128xf32> to vector<8x128xf32>
    %c0_12 = arith.constant 0 : index
    %c0_13 = arith.constant 0 : index
    %14 = vector.load %arg8[%c0_12, %c0_13] : memref<8x128xf32, #tpu.memory_space<vmem>>, vector<8x128xf32>
    %c0_i32_14 = arith.constant 0 : i32
    %c8_i32 = arith.constant 8 : i32
    %15 = arith.muli %c0_i32_14, %c8_i32 : i32
    %16 = tpu.assume_multiple %15, 8 : i32
    %17 = arith.index_cast %16 : i32 to index
    %c0_15 = arith.constant 0 : index
    %18 = vector.load %arg9[%17, %c0_15] : memref<64x384xf32, #tpu.memory_space<vmem>>, vector<8x384xf32>
    %cst_16 = arith.constant dense<0.000000e+00> : vector<8x384xf32>
    %19 = tpu.matmul %14, %10, %cst_16 {dimension_numbers = #tpu.dot_dimension_numbers<[1], [0], [0], [1], [0, 0, 1, 1], [], []>} : vector<8x128xf32>, vector<128x384xf32>, vector<8x384xf32> -> vector<8x384xf32>
    %20 = vector.extract_strided_slice %18 {offsets = [0, 0], sizes = [8, 128], strides = [1, 1]} : vector<8x384xf32> to vector<8x128xf32>
    %21 = vector.extract_strided_slice %19 {offsets = [0, 0], sizes = [8, 128], strides = [1, 1]} : vector<8x384xf32> to vector<8x128xf32>
    %22 = arith.addf %20, %21 : vector<8x128xf32>
    %cst_17 = arith.constant 5.000000e-01 : f32
    %23 = vector.broadcast %cst_17 : f32 to vector<8x128xf32>
    %24 = arith.mulf %23, %22 : vector<8x128xf32>
    %25 = math.tanh %24 : vector<8x128xf32>
    %cst_18 = arith.constant 5.000000e-01 : f32
    %26 = vector.broadcast %cst_18 : f32 to vector<8x128xf32>
    %27 = arith.mulf %26, %25 : vector<8x128xf32>
    %cst_19 = arith.constant 5.000000e-01 : f32
    %28 = vector.broadcast %cst_19 : f32 to vector<8x128xf32>
    %29 = arith.addf %27, %28 : vector<8x128xf32>
    %30 = vector.extract_strided_slice %18 {offsets = [0, 128], sizes = [8, 128], strides = [1, 1]} : vector<8x384xf32> to vector<8x128xf32>
    %31 = vector.extract_strided_slice %19 {offsets = [0, 128], sizes = [8, 128], strides = [1, 1]} : vector<8x384xf32> to vector<8x128xf32>
    %32 = arith.addf %30, %31 : vector<8x128xf32>
    %cst_20 = arith.constant 5.000000e-01 : f32
    %33 = vector.broadcast %cst_20 : f32 to vector<8x128xf32>
    %34 = arith.mulf %33, %32 : vector<8x128xf32>
    %35 = math.tanh %34 : vector<8x128xf32>
    %cst_21 = arith.constant 5.000000e-01 : f32
    %36 = vector.broadcast %cst_21 : f32 to vector<8x128xf32>
    %37 = arith.mulf %36, %35 : vector<8x128xf32>
    %cst_22 = arith.constant 5.000000e-01 : f32
    %38 = vector.broadcast %cst_22 : f32 to vector<8x128xf32>
    %39 = arith.addf %37, %38 : vector<8x128xf32>
    %40 = vector.extract_strided_slice %18 {offsets = [0, 256], sizes = [8, 128], strides = [1, 1]} : vector<8x384xf32> to vector<8x128xf32>
    %41 = vector.extract_strided_slice %19 {offsets = [0, 256], sizes = [8, 128], strides = [1, 1]} : vector<8x384xf32> to vector<8x128xf32>
    %42 = arith.addf %41, %13 : vector<8x128xf32>
    %43 = arith.mulf %29, %42 : vector<8x128xf32>
    %44 = arith.addf %40, %43 : vector<8x128xf32>
    %45 = math.tanh %44 : vector<8x128xf32>
    %46 = arith.subf %14, %45 : vector<8x128xf32>
    %47 = arith.mulf %39, %46 : vector<8x128xf32>
    %48 = arith.addf %45, %47 : vector<8x128xf32>
    %49 = arith.index_cast %16 : i32 to index
    %c0_23 = arith.constant 0 : index
    %50 = vector.load %arg6[%49, %c0_23] : memref<64x128xf32, #tpu.memory_space<vmem>>, vector<8x128xf32>
    tpu.vector_store %arg6[%49, %c0_23], %48 {strides = array<i32>} : memref<64x128xf32, #tpu.memory_space<vmem>>, vector<8x128xf32>,
    %c1_i32 = arith.constant 1 : i32
    %c8_i32_24 = arith.constant 8 : i32
    %51 = arith.muli %c1_i32, %c8_i32_24 : i32
    %52 = tpu.assume_multiple %51, 8 : i32
    %53 = arith.index_cast %52 : i32 to index
    %c0_25 = arith.constant 0 : index
    %54 = vector.load %arg9[%53, %c0_25] : memref<64x384xf32, #tpu.memory_space<vmem>>, vector<8x384xf32>
    %cst_26 = arith.constant dense<0.000000e+00> : vector<8x384xf32>
    %55 = tpu.matmul %48, %10, %cst_26 {dimension_numbers = #tpu.dot_dimension_numbers<[1], [0], [0], [1], [0, 0, 1, 1], [], []>} : vector<8x128xf32>, vector<128x384xf32>, vector<8x384xf32> -> vector<8x384xf32>
    %56 = vector.extract_strided_slice %54 {offsets = [0, 0], sizes = [8, 128], strides = [1, 1]} : vector<8x384xf32> to vector<8x128xf32>
    %57 = vector.extract_strided_slice %55 {offsets = [0, 0], sizes = [8, 128], strides = [1, 1]} : vector<8x384xf32> to vector<8x128xf32>
    %58 = arith.addf %56, %57 : vector<8x128xf32>
    %cst_27 = arith.constant 5.000000e-01 : f32
    %59 = vector.broadcast %cst_27 : f32 to vector<8x128xf32>
    %60 = arith.mulf %59, %58 : vector<8x128xf32>
    %61 = math.tanh %60 : vector<8x128xf32>
    %cst_28 = arith.constant 5.000000e-01 : f32
    %62 = vector.broadcast %cst_28 : f32 to vector<8x128xf32>
    %63 = arith.mulf %62, %61 : vector<8x128xf32>
    %cst_29 = arith.constant 5.000000e-01 : f32
    %64 = vector.broadcast %cst_29 : f32 to vector<8x128xf32>
    %65 = arith.addf %63, %64 : vector<8x128xf32>
    %66 = vector.extract_strided_slice %54 {offsets = [0, 128], sizes = [8, 128], strides = [1, 1]} : vector<8x384xf32> to vector<8x128xf32>
    %67 = vector.extract_strided_slice %55 {offsets = [0, 128], sizes = [8, 128], strides = [1, 1]} : vector<8x384xf32> to vector<8x128xf32>
    %68 = arith.addf %66, %67 : vector<8x128xf32>
    %cst_30 = arith.constant 5.000000e-01 : f32
    %69 = vector.broadcast %cst_30 : f32 to vector<8x128xf32>
    %70 = arith.mulf %69, %68 : vector<8x128xf32>
    %71 = math.tanh %70 : vector<8x128xf32>
    %cst_31 = arith.constant 5.000000e-01 : f32
    %72 = vector.broadcast %cst_31 : f32 to vector<8x128xf32>
    %73 = arith.mulf %72, %71 : vector<8x128xf32>
    %cst_32 = arith.constant 5.000000e-01 : f32
    %74 = vector.broadcast %cst_32 : f32 to vector<8x128xf32>
    %75 = arith.addf %73, %74 : vector<8x128xf32>
    %76 = vector.extract_strided_slice %54 {offsets = [0, 256], sizes = [8, 128], strides = [1, 1]} : vector<8x384xf32> to vector<8x128xf32>
    %77 = vector.extract_strided_slice %55 {offsets = [0, 256], sizes = [8, 128], strides = [1, 1]} : vector<8x384xf32> to vector<8x128xf32>
    %78 = arith.addf %77, %13 : vector<8x128xf32>
    %79 = arith.mulf %65, %78 : vector<8x128xf32>
    %80 = arith.addf %76, %79 : vector<8x128xf32>
    %81 = math.tanh %80 : vector<8x128xf32>
    %82 = arith.subf %48, %81 : vector<8x128xf32>
    %83 = arith.mulf %75, %82 : vector<8x128xf32>
    %84 = arith.addf %81, %83 : vector<8x128xf32>
    %85 = arith.index_cast %52 : i32 to index
    %c0_33 = arith.constant 0 : index
    %86 = vector.load %arg6[%85, %c0_33] : memref<64x128xf32, #tpu.memory_space<vmem>>, vector<8x128xf32>
    tpu.vector_store %arg6[%85, %c0_33], %84 {strides = array<i32>} : memref<64x128xf32, #tpu.memory_space<vmem>>, vector<8x128xf32>,
    %c2_i32 = arith.constant 2 : i32
    %c8_i32_34 = arith.constant 8 : i32
    %87 = arith.muli %c2_i32, %c8_i32_34 : i32
    %88 = tpu.assume_multiple %87, 8 : i32
    %89 = arith.index_cast %88 : i32 to index
    %c0_35 = arith.constant 0 : index
    %90 = vector.load %arg9[%89, %c0_35] : memref<64x384xf32, #tpu.memory_space<vmem>>, vector<8x384xf32>
    %cst_36 = arith.constant dense<0.000000e+00> : vector<8x384xf32>
    %91 = tpu.matmul %84, %10, %cst_36 {dimension_numbers = #tpu.dot_dimension_numbers<[1], [0], [0], [1], [0, 0, 1, 1], [], []>} : vector<8x128xf32>, vector<128x384xf32>, vector<8x384xf32> -> vector<8x384xf32>
    %92 = vector.extract_strided_slice %90 {offsets = [0, 0], sizes = [8, 128], strides = [1, 1]} : vector<8x384xf32> to vector<8x128xf32>
    %93 = vector.extract_strided_slice %91 {offsets = [0, 0], sizes = [8, 128], strides = [1, 1]} : vector<8x384xf32> to vector<8x128xf32>
    %94 = arith.addf %92, %93 : vector<8x128xf32>
    %cst_37 = arith.constant 5.000000e-01 : f32
    %95 = vector.broadcast %cst_37 : f32 to vector<8x128xf32>
    %96 = arith.mulf %95, %94 : vector<8x128xf32>
    %97 = math.tanh %96 : vector<8x128xf32>
    %cst_38 = arith.constant 5.000000e-01 : f32
    %98 = vector.broadcast %cst_38 : f32 to vector<8x128xf32>
    %99 = arith.mulf %98, %97 : vector<8x128xf32>
    %cst_39 = arith.constant 5.000000e-01 : f32
    %100 = vector.broadcast %cst_39 : f32 to vector<8x128xf32>
    %101 = arith.addf %99, %100 : vector<8x128xf32>
    %102 = vector.extract_strided_slice %90 {offsets = [0, 128], sizes = [8, 128], strides = [1, 1]} : vector<8x384xf32> to vector<8x128xf32>
    %103 = vector.extract_strided_slice %91 {offsets = [0, 128], sizes = [8, 128], strides = [1, 1]} : vector<8x384xf32> to vector<8x128xf32>
    %104 = arith.addf %102, %103 : vector<8x128xf32>
    %cst_40 = arith.constant 5.000000e-01 : f32
    %105 = vector.broadcast %cst_40 : f32 to vector<8x128xf32>
    %106 = arith.mulf %105, %104 : vector<8x128xf32>
    %107 = math.tanh %106 : vector<8x128xf32>
    %cst_41 = arith.constant 5.000000e-01 : f32
    %108 = vector.broadcast %cst_41 : f32 to vector<8x128xf32>
    %109 = arith.mulf %108, %107 : vector<8x128xf32>
    %cst_42 = arith.constant 5.000000e-01 : f32
    %110 = vector.broadcast %cst_42 : f32 to vector<8x128xf32>
    %111 = arith.addf %109, %110 : vector<8x128xf32>
    %112 = vector.extract_strided_slice %90 {offsets = [0, 256], sizes = [8, 128], strides = [1, 1]} : vector<8x384xf32> to vector<8x128xf32>
    %113 = vector.extract_strided_slice %91 {offsets = [0, 256], sizes = [8, 128], strides = [1, 1]} : vector<8x384xf32> to vector<8x128xf32>
    %114 = arith.addf %113, %13 : vector<8x128xf32>
    %115 = arith.mulf %101, %114 : vector<8x128xf32>
    %116 = arith.addf %112, %115 : vector<8x128xf32>
    %117 = math.tanh %116 : vector<8x128xf32>
    %118 = arith.subf %84, %117 : vector<8x128xf32>
    %119 = arith.mulf %111, %118 : vector<8x128xf32>
    %120 = arith.addf %117, %119 : vector<8x128xf32>
    %121 = arith.index_cast %88 : i32 to index
    %c0_43 = arith.constant 0 : index
    %122 = vector.load %arg6[%121, %c0_43] : memref<64x128xf32, #tpu.memory_space<vmem>>, vector<8x128xf32>
    tpu.vector_store %arg6[%121, %c0_43], %120 {strides = array<i32>} : memref<64x128xf32, #tpu.memory_space<vmem>>, vector<8x128xf32>,
    %c3_i32 = arith.constant 3 : i32
    %c8_i32_44 = arith.constant 8 : i32
    %123 = arith.muli %c3_i32, %c8_i32_44 : i32
    %124 = tpu.assume_multiple %123, 8 : i32
    %125 = arith.index_cast %124 : i32 to index
    %c0_45 = arith.constant 0 : index
    %126 = vector.load %arg9[%125, %c0_45] : memref<64x384xf32, #tpu.memory_space<vmem>>, vector<8x384xf32>
    %cst_46 = arith.constant dense<0.000000e+00> : vector<8x384xf32>
    %127 = tpu.matmul %120, %10, %cst_46 {dimension_numbers = #tpu.dot_dimension_numbers<[1], [0], [0], [1], [0, 0, 1, 1], [], []>} : vector<8x128xf32>, vector<128x384xf32>, vector<8x384xf32> -> vector<8x384xf32>
    %128 = vector.extract_strided_slice %126 {offsets = [0, 0], sizes = [8, 128], strides = [1, 1]} : vector<8x384xf32> to vector<8x128xf32>
    %129 = vector.extract_strided_slice %127 {offsets = [0, 0], sizes = [8, 128], strides = [1, 1]} : vector<8x384xf32> to vector<8x128xf32>
    %130 = arith.addf %128, %129 : vector<8x128xf32>
    %cst_47 = arith.constant 5.000000e-01 : f32
    %131 = vector.broadcast %cst_47 : f32 to vector<8x128xf32>
    %132 = arith.mulf %131, %130 : vector<8x128xf32>
    %133 = math.tanh %132 : vector<8x128xf32>
    %cst_48 = arith.constant 5.000000e-01 : f32
    %134 = vector.broadcast %cst_48 : f32 to vector<8x128xf32>
    %135 = arith.mulf %134, %133 : vector<8x128xf32>
    %cst_49 = arith.constant 5.000000e-01 : f32
    %136 = vector.broadcast %cst_49 : f32 to vector<8x128xf32>
    %137 = arith.addf %135, %136 : vector<8x128xf32>
    %138 = vector.extract_strided_slice %126 {offsets = [0, 128], sizes = [8, 128], strides = [1, 1]} : vector<8x384xf32> to vector<8x128xf32>
    %139 = vector.extract_strided_slice %127 {offsets = [0, 128], sizes = [8, 128], strides = [1, 1]} : vector<8x384xf32> to vector<8x128xf32>
    %140 = arith.addf %138, %139 : vector<8x128xf32>
    %cst_50 = arith.constant 5.000000e-01 : f32
    %141 = vector.broadcast %cst_50 : f32 to vector<8x128xf32>
    %142 = arith.mulf %141, %140 : vector<8x128xf32>
    %143 = math.tanh %142 : vector<8x128xf32>
    %cst_51 = arith.constant 5.000000e-01 : f32
    %144 = vector.broadcast %cst_51 : f32 to vector<8x128xf32>
    %145 = arith.mulf %144, %143 : vector<8x128xf32>
    %cst_52 = arith.constant 5.000000e-01 : f32
    %146 = vector.broadcast %cst_52 : f32 to vector<8x128xf32>
    %147 = arith.addf %145, %146 : vector<8x128xf32>
    %148 = vector.extract_strided_slice %126 {offsets = [0, 256], sizes = [8, 128], strides = [1, 1]} : vector<8x384xf32> to vector<8x128xf32>
    %149 = vector.extract_strided_slice %127 {offsets = [0, 256], sizes = [8, 128], strides = [1, 1]} : vector<8x384xf32> to vector<8x128xf32>
    %150 = arith.addf %149, %13 : vector<8x128xf32>
    %151 = arith.mulf %137, %150 : vector<8x128xf32>
    %152 = arith.addf %148, %151 : vector<8x128xf32>
    %153 = math.tanh %152 : vector<8x128xf32>
    %154 = arith.subf %120, %153 : vector<8x128xf32>
    %155 = arith.mulf %147, %154 : vector<8x128xf32>
    %156 = arith.addf %153, %155 : vector<8x128xf32>
    %157 = arith.index_cast %124 : i32 to index
    %c0_53 = arith.constant 0 : index
    %158 = vector.load %arg6[%157, %c0_53] : memref<64x128xf32, #tpu.memory_space<vmem>>, vector<8x128xf32>
    tpu.vector_store %arg6[%157, %c0_53], %156 {strides = array<i32>} : memref<64x128xf32, #tpu.memory_space<vmem>>, vector<8x128xf32>,
    %c4_i32 = arith.constant 4 : i32
    %c8_i32_54 = arith.constant 8 : i32
    %159 = arith.muli %c4_i32, %c8_i32_54 : i32
    %160 = tpu.assume_multiple %159, 8 : i32
    %161 = arith.index_cast %160 : i32 to index
    %c0_55 = arith.constant 0 : index
    %162 = vector.load %arg9[%161, %c0_55] : memref<64x384xf32, #tpu.memory_space<vmem>>, vector<8x384xf32>
    %cst_56 = arith.constant dense<0.000000e+00> : vector<8x384xf32>
    %163 = tpu.matmul %156, %10, %cst_56 {dimension_numbers = #tpu.dot_dimension_numbers<[1], [0], [0], [1], [0, 0, 1, 1], [], []>} : vector<8x128xf32>, vector<128x384xf32>, vector<8x384xf32> -> vector<8x384xf32>
    %164 = vector.extract_strided_slice %162 {offsets = [0, 0], sizes = [8, 128], strides = [1, 1]} : vector<8x384xf32> to vector<8x128xf32>
    %165 = vector.extract_strided_slice %163 {offsets = [0, 0], sizes = [8, 128], strides = [1, 1]} : vector<8x384xf32> to vector<8x128xf32>
    %166 = arith.addf %164, %165 : vector<8x128xf32>
    %cst_57 = arith.constant 5.000000e-01 : f32
    %167 = vector.broadcast %cst_57 : f32 to vector<8x128xf32>
    %168 = arith.mulf %167, %166 : vector<8x128xf32>
    %169 = math.tanh %168 : vector<8x128xf32>
    %cst_58 = arith.constant 5.000000e-01 : f32
    %170 = vector.broadcast %cst_58 : f32 to vector<8x128xf32>
    %171 = arith.mulf %170, %169 : vector<8x128xf32>
    %cst_59 = arith.constant 5.000000e-01 : f32
    %172 = vector.broadcast %cst_59 : f32 to vector<8x128xf32>
    %173 = arith.addf %171, %172 : vector<8x128xf32>
    %174 = vector.extract_strided_slice %162 {offsets = [0, 128], sizes = [8, 128], strides = [1, 1]} : vector<8x384xf32> to vector<8x128xf32>
    %175 = vector.extract_strided_slice %163 {offsets = [0, 128], sizes = [8, 128], strides = [1, 1]} : vector<8x384xf32> to vector<8x128xf32>
    %176 = arith.addf %174, %175 : vector<8x128xf32>
    %cst_60 = arith.constant 5.000000e-01 : f32
    %177 = vector.broadcast %cst_60 : f32 to vector<8x128xf32>
    %178 = arith.mulf %177, %176 : vector<8x128xf32>
    %179 = math.tanh %178 : vector<8x128xf32>
    %cst_61 = arith.constant 5.000000e-01 : f32
    %180 = vector.broadcast %cst_61 : f32 to vector<8x128xf32>
    %181 = arith.mulf %180, %179 : vector<8x128xf32>
    %cst_62 = arith.constant 5.000000e-01 : f32
    %182 = vector.broadcast %cst_62 : f32 to vector<8x128xf32>
    %183 = arith.addf %181, %182 : vector<8x128xf32>
    %184 = vector.extract_strided_slice %162 {offsets = [0, 256], sizes = [8, 128], strides = [1, 1]} : vector<8x384xf32> to vector<8x128xf32>
    %185 = vector.extract_strided_slice %163 {offsets = [0, 256], sizes = [8, 128], strides = [1, 1]} : vector<8x384xf32> to vector<8x128xf32>
    %186 = arith.addf %185, %13 : vector<8x128xf32>
    %187 = arith.mulf %173, %186 : vector<8x128xf32>
    %188 = arith.addf %184, %187 : vector<8x128xf32>
    %189 = math.tanh %188 : vector<8x128xf32>
    %190 = arith.subf %156, %189 : vector<8x128xf32>
    %191 = arith.mulf %183, %190 : vector<8x128xf32>
    %192 = arith.addf %189, %191 : vector<8x128xf32>
    %193 = arith.index_cast %160 : i32 to index
    %c0_63 = arith.constant 0 : index
    %194 = vector.load %arg6[%193, %c0_63] : memref<64x128xf32, #tpu.memory_space<vmem>>, vector<8x128xf32>
    tpu.vector_store %arg6[%193, %c0_63], %192 {strides = array<i32>} : memref<64x128xf32, #tpu.memory_space<vmem>>, vector<8x128xf32>,
    %c5_i32 = arith.constant 5 : i32
    %c8_i32_64 = arith.constant 8 : i32
    %195 = arith.muli %c5_i32, %c8_i32_64 : i32
    %196 = tpu.assume_multiple %195, 8 : i32
    %197 = arith.index_cast %196 : i32 to index
    %c0_65 = arith.constant 0 : index
    %198 = vector.load %arg9[%197, %c0_65] : memref<64x384xf32, #tpu.memory_space<vmem>>, vector<8x384xf32>
    %cst_66 = arith.constant dense<0.000000e+00> : vector<8x384xf32>
    %199 = tpu.matmul %192, %10, %cst_66 {dimension_numbers = #tpu.dot_dimension_numbers<[1], [0], [0], [1], [0, 0, 1, 1], [], []>} : vector<8x128xf32>, vector<128x384xf32>, vector<8x384xf32> -> vector<8x384xf32>
    %200 = vector.extract_strided_slice %198 {offsets = [0, 0], sizes = [8, 128], strides = [1, 1]} : vector<8x384xf32> to vector<8x128xf32>
    %201 = vector.extract_strided_slice %199 {offsets = [0, 0], sizes = [8, 128], strides = [1, 1]} : vector<8x384xf32> to vector<8x128xf32>
    %202 = arith.addf %200, %201 : vector<8x128xf32>
    %cst_67 = arith.constant 5.000000e-01 : f32
    %203 = vector.broadcast %cst_67 : f32 to vector<8x128xf32>
    %204 = arith.mulf %203, %202 : vector<8x128xf32>
    %205 = math.tanh %204 : vector<8x128xf32>
    %cst_68 = arith.constant 5.000000e-01 : f32
    %206 = vector.broadcast %cst_68 : f32 to vector<8x128xf32>
    %207 = arith.mulf %206, %205 : vector<8x128xf32>
    %cst_69 = arith.constant 5.000000e-01 : f32
    %208 = vector.broadcast %cst_69 : f32 to vector<8x128xf32>
    %209 = arith.addf %207, %208 : vector<8x128xf32>
    %210 = vector.extract_strided_slice %198 {offsets = [0, 128], sizes = [8, 128], strides = [1, 1]} : vector<8x384xf32> to vector<8x128xf32>
    %211 = vector.extract_strided_slice %199 {offsets = [0, 128], sizes = [8, 128], strides = [1, 1]} : vector<8x384xf32> to vector<8x128xf32>
    %212 = arith.addf %210, %211 : vector<8x128xf32>
    %cst_70 = arith.constant 5.000000e-01 : f32
    %213 = vector.broadcast %cst_70 : f32 to vector<8x128xf32>
    %214 = arith.mulf %213, %212 : vector<8x128xf32>
    %215 = math.tanh %214 : vector<8x128xf32>
    %cst_71 = arith.constant 5.000000e-01 : f32
    %216 = vector.broadcast %cst_71 : f32 to vector<8x128xf32>
    %217 = arith.mulf %216, %215 : vector<8x128xf32>
    %cst_72 = arith.constant 5.000000e-01 : f32
    %218 = vector.broadcast %cst_72 : f32 to vector<8x128xf32>
    %219 = arith.addf %217, %218 : vector<8x128xf32>
    %220 = vector.extract_strided_slice %198 {offsets = [0, 256], sizes = [8, 128], strides = [1, 1]} : vector<8x384xf32> to vector<8x128xf32>
    %221 = vector.extract_strided_slice %199 {offsets = [0, 256], sizes = [8, 128], strides = [1, 1]} : vector<8x384xf32> to vector<8x128xf32>
    %222 = arith.addf %221, %13 : vector<8x128xf32>
    %223 = arith.mulf %209, %222 : vector<8x128xf32>
    %224 = arith.addf %220, %223 : vector<8x128xf32>
    %225 = math.tanh %224 : vector<8x128xf32>
    %226 = arith.subf %192, %225 : vector<8x128xf32>
    %227 = arith.mulf %219, %226 : vector<8x128xf32>
    %228 = arith.addf %225, %227 : vector<8x128xf32>
    %229 = arith.index_cast %196 : i32 to index
    %c0_73 = arith.constant 0 : index
    %230 = vector.load %arg6[%229, %c0_73] : memref<64x128xf32, #tpu.memory_space<vmem>>, vector<8x128xf32>
    tpu.vector_store %arg6[%229, %c0_73], %228 {strides = array<i32>} : memref<64x128xf32, #tpu.memory_space<vmem>>, vector<8x128xf32>,
    %c6_i32 = arith.constant 6 : i32
    %c8_i32_74 = arith.constant 8 : i32
    %231 = arith.muli %c6_i32, %c8_i32_74 : i32
    %232 = tpu.assume_multiple %231, 8 : i32
    %233 = arith.index_cast %232 : i32 to index
    %c0_75 = arith.constant 0 : index
    %234 = vector.load %arg9[%233, %c0_75] : memref<64x384xf32, #tpu.memory_space<vmem>>, vector<8x384xf32>
    %cst_76 = arith.constant dense<0.000000e+00> : vector<8x384xf32>
    %235 = tpu.matmul %228, %10, %cst_76 {dimension_numbers = #tpu.dot_dimension_numbers<[1], [0], [0], [1], [0, 0, 1, 1], [], []>} : vector<8x128xf32>, vector<128x384xf32>, vector<8x384xf32> -> vector<8x384xf32>
    %236 = vector.extract_strided_slice %234 {offsets = [0, 0], sizes = [8, 128], strides = [1, 1]} : vector<8x384xf32> to vector<8x128xf32>
    %237 = vector.extract_strided_slice %235 {offsets = [0, 0], sizes = [8, 128], strides = [1, 1]} : vector<8x384xf32> to vector<8x128xf32>
    %238 = arith.addf %236, %237 : vector<8x128xf32>
    %cst_77 = arith.constant 5.000000e-01 : f32
    %239 = vector.broadcast %cst_77 : f32 to vector<8x128xf32>
    %240 = arith.mulf %239, %238 : vector<8x128xf32>
    %241 = math.tanh %240 : vector<8x128xf32>
    %cst_78 = arith.constant 5.000000e-01 : f32
    %242 = vector.broadcast %cst_78 : f32 to vector<8x128xf32>
    %243 = arith.mulf %242, %241 : vector<8x128xf32>
    %cst_79 = arith.constant 5.000000e-01 : f32
    %244 = vector.broadcast %cst_79 : f32 to vector<8x128xf32>
    %245 = arith.addf %243, %244 : vector<8x128xf32>
    %246 = vector.extract_strided_slice %234 {offsets = [0, 128], sizes = [8, 128], strides = [1, 1]} : vector<8x384xf32> to vector<8x128xf32>
    %247 = vector.extract_strided_slice %235 {offsets = [0, 128], sizes = [8, 128], strides = [1, 1]} : vector<8x384xf32> to vector<8x128xf32>
    %248 = arith.addf %246, %247 : vector<8x128xf32>
    %cst_80 = arith.constant 5.000000e-01 : f32
    %249 = vector.broadcast %cst_80 : f32 to vector<8x128xf32>
    %250 = arith.mulf %249, %248 : vector<8x128xf32>
    %251 = math.tanh %250 : vector<8x128xf32>
    %cst_81 = arith.constant 5.000000e-01 : f32
    %252 = vector.broadcast %cst_81 : f32 to vector<8x128xf32>
    %253 = arith.mulf %252, %251 : vector<8x128xf32>
    %cst_82 = arith.constant 5.000000e-01 : f32
    %254 = vector.broadcast %cst_82 : f32 to vector<8x128xf32>
    %255 = arith.addf %253, %254 : vector<8x128xf32>
    %256 = vector.extract_strided_slice %234 {offsets = [0, 256], sizes = [8, 128], strides = [1, 1]} : vector<8x384xf32> to vector<8x128xf32>
    %257 = vector.extract_strided_slice %235 {offsets = [0, 256], sizes = [8, 128], strides = [1, 1]} : vector<8x384xf32> to vector<8x128xf32>
    %258 = arith.addf %257, %13 : vector<8x128xf32>
    %259 = arith.mulf %245, %258 : vector<8x128xf32>
    %260 = arith.addf %256, %259 : vector<8x128xf32>
    %261 = math.tanh %260 : vector<8x128xf32>
    %262 = arith.subf %228, %261 : vector<8x128xf32>
    %263 = arith.mulf %255, %262 : vector<8x128xf32>
    %264 = arith.addf %261, %263 : vector<8x128xf32>
    %265 = arith.index_cast %232 : i32 to index
    %c0_83 = arith.constant 0 : index
    %266 = vector.load %arg6[%265, %c0_83] : memref<64x128xf32, #tpu.memory_space<vmem>>, vector<8x128xf32>
    tpu.vector_store %arg6[%265, %c0_83], %264 {strides = array<i32>} : memref<64x128xf32, #tpu.memory_space<vmem>>, vector<8x128xf32>,
    %c7_i32 = arith.constant 7 : i32
    %c8_i32_84 = arith.constant 8 : i32
    %267 = arith.muli %c7_i32, %c8_i32_84 : i32
    %268 = tpu.assume_multiple %267, 8 : i32
    %269 = arith.index_cast %268 : i32 to index
    %c0_85 = arith.constant 0 : index
    %270 = vector.load %arg9[%269, %c0_85] : memref<64x384xf32, #tpu.memory_space<vmem>>, vector<8x384xf32>
    %cst_86 = arith.constant dense<0.000000e+00> : vector<8x384xf32>
    %271 = tpu.matmul %264, %10, %cst_86 {dimension_numbers = #tpu.dot_dimension_numbers<[1], [0], [0], [1], [0, 0, 1, 1], [], []>} : vector<8x128xf32>, vector<128x384xf32>, vector<8x384xf32> -> vector<8x384xf32>
    %272 = vector.extract_strided_slice %270 {offsets = [0, 0], sizes = [8, 128], strides = [1, 1]} : vector<8x384xf32> to vector<8x128xf32>
    %273 = vector.extract_strided_slice %271 {offsets = [0, 0], sizes = [8, 128], strides = [1, 1]} : vector<8x384xf32> to vector<8x128xf32>
    %274 = arith.addf %272, %273 : vector<8x128xf32>
    %cst_87 = arith.constant 5.000000e-01 : f32
    %275 = vector.broadcast %cst_87 : f32 to vector<8x128xf32>
    %276 = arith.mulf %275, %274 : vector<8x128xf32>
    %277 = math.tanh %276 : vector<8x128xf32>
    %cst_88 = arith.constant 5.000000e-01 : f32
    %278 = vector.broadcast %cst_88 : f32 to vector<8x128xf32>
    %279 = arith.mulf %278, %277 : vector<8x128xf32>
    %cst_89 = arith.constant 5.000000e-01 : f32
    %280 = vector.broadcast %cst_89 : f32 to vector<8x128xf32>
    %281 = arith.addf %279, %280 : vector<8x128xf32>
    %282 = vector.extract_strided_slice %270 {offsets = [0, 128], sizes = [8, 128], strides = [1, 1]} : vector<8x384xf32> to vector<8x128xf32>
    %283 = vector.extract_strided_slice %271 {offsets = [0, 128], sizes = [8, 128], strides = [1, 1]} : vector<8x384xf32> to vector<8x128xf32>
    %284 = arith.addf %282, %283 : vector<8x128xf32>
    %cst_90 = arith.constant 5.000000e-01 : f32
    %285 = vector.broadcast %cst_90 : f32 to vector<8x128xf32>
    %286 = arith.mulf %285, %284 : vector<8x128xf32>
    %287 = math.tanh %286 : vector<8x128xf32>
    %cst_91 = arith.constant 5.000000e-01 : f32
    %288 = vector.broadcast %cst_91 : f32 to vector<8x128xf32>
    %289 = arith.mulf %288, %287 : vector<8x128xf32>
    %cst_92 = arith.constant 5.000000e-01 : f32
    %290 = vector.broadcast %cst_92 : f32 to vector<8x128xf32>
    %291 = arith.addf %289, %290 : vector<8x128xf32>
    %292 = vector.extract_strided_slice %270 {offsets = [0, 256], sizes = [8, 128], strides = [1, 1]} : vector<8x384xf32> to vector<8x128xf32>
    %293 = vector.extract_strided_slice %271 {offsets = [0, 256], sizes = [8, 128], strides = [1, 1]} : vector<8x384xf32> to vector<8x128xf32>
    %294 = arith.addf %293, %13 : vector<8x128xf32>
    %295 = arith.mulf %281, %294 : vector<8x128xf32>
    %296 = arith.addf %292, %295 : vector<8x128xf32>
    %297 = math.tanh %296 : vector<8x128xf32>
    %298 = arith.subf %264, %297 : vector<8x128xf32>
    %299 = arith.mulf %291, %298 : vector<8x128xf32>
    %300 = arith.addf %297, %299 : vector<8x128xf32>
    %301 = arith.index_cast %268 : i32 to index
    %c0_93 = arith.constant 0 : index
    %302 = vector.load %arg6[%301, %c0_93] : memref<64x128xf32, #tpu.memory_space<vmem>>, vector<8x128xf32>
    tpu.vector_store %arg6[%301, %c0_93], %300 {strides = array<i32>} : memref<64x128xf32, #tpu.memory_space<vmem>>, vector<8x128xf32>,
    %c8_i32_94 = arith.constant 8 : i32
    %c0_95 = arith.constant 0 : index
    %c0_96 = arith.constant 0 : index
    %303 = vector.load %arg8[%c0_95, %c0_96] : memref<8x128xf32, #tpu.memory_space<vmem>>, vector<8x128xf32>
    tpu.vector_store %arg8[%c0_95, %c0_96], %300 {strides = array<i32>} : memref<8x128xf32, #tpu.memory_space<vmem>>, vector<8x128xf32>,
    %c0_i32_97 = arith.constant 0 : i32
    %304 = arith.cmpi eq, %arg0, %c0_i32_97 : i32
    %305 = arith.extui %304 : i1 to i32
    %c0_i32_98 = arith.constant 0 : i32
    %306 = arith.cmpi ne, %305, %c0_i32_98 : i32
    scf.if %306 {
      %c0_99 = arith.constant 0 : index
      %c0_100 = arith.constant 0 : index
      %307 = vector.load %arg7[%c0_99, %c0_100] : memref<8x128xf32, #tpu.memory_space<vmem>>, vector<8x128xf32>
      tpu.vector_store %arg7[%c0_99, %c0_100], %300 {strides = array<i32>} : memref<8x128xf32, #tpu.memory_space<vmem>>, vector<8x128xf32>,
    } else {
    }
    return
  }
  func.func @transform_0(%arg0: i32) -> (i32, i32) {
    %c0_i32 = arith.constant 0 : i32
    %c0_i32_0 = arith.constant 0 : i32
    return %arg0, %c0_i32 : i32, i32
  }
  func.func @transform_1(%arg0: i32) -> (i32, i32) {
    %c0_i32 = arith.constant 0 : i32
    %c0_i32_0 = arith.constant 0 : i32
    %c0_i32_1 = arith.constant 0 : i32
    return %c0_i32, %c0_i32_0 : i32, i32
  }
  func.func @transform_2(%arg0: i32) -> (i32, i32) {
    %c0_i32 = arith.constant 0 : i32
    %c0_i32_0 = arith.constant 0 : i32
    %c0_i32_1 = arith.constant 0 : i32
    return %c0_i32, %c0_i32_0 : i32, i32
  }
  func.func @transform_3(%arg0: i32) -> (i32, i32) {
    %c0_i32 = arith.constant 0 : i32
    %c0_i32_0 = arith.constant 0 : i32
    %c0_i32_1 = arith.constant 0 : i32
    return %c0_i32, %c0_i32_0 : i32, i32
  }
  func.func @transform_4(%arg0: i32) -> (i32, i32) {
    %c0_i32 = arith.constant 0 : i32
    %c0_i32_0 = arith.constant 0 : i32
    %c0_i32_1 = arith.constant 0 : i32
    return %c0_i32, %c0_i32_0 : i32, i32
  }
  func.func @transform_5(%arg0: i32) -> (i32, i32) {
    %c0_i32 = arith.constant 0 : i32
    %c0_i32_0 = arith.constant 0 : i32
    return %arg0, %c0_i32 : i32, i32
  }
  func.func @transform_6(%arg0: i32) -> (i32, i32) {
    %c0_i32 = arith.constant 0 : i32
    %c0_i32_0 = arith.constant 0 : i32
    %c0_i32_1 = arith.constant 0 : i32
    return %c0_i32, %c0_i32_0 : i32, i32
  }
}

module attributes {stable_mosaic.version = 11 : i64} {
  func.func @gru_fused_kernel(%arg0: i32, %arg1: memref<64x128xf32, #tpu.memory_space<vmem>>, %arg2: memref<128x384xf32, #tpu.memory_space<vmem>>, %arg3: memref<128x384xf32, #tpu.memory_space<vmem>>, %arg4: memref<1x384xf32, #tpu.memory_space<vmem>>, %arg5: memref<1x128xf32, #tpu.memory_space<vmem>>, %arg6: memref<64x128xf32, #tpu.memory_space<vmem>>, %arg7: memref<8x128xf32, #tpu.memory_space<vmem>>, %arg8: memref<8x128xf32, #tpu.memory_space<vmem>>, %arg9: memref<64x384xf32, #tpu.memory_space<vmem>>) attributes {dimension_semantics = [#tpu.dimension_semantics<arbitrary>], iteration_bounds = array<i64: 1>, scalar_prefetch = 0 : i64, scratch_operands = 2 : i64, tpu.core_type = #tpu.core_type<tc>, window_params = [{transform_indices = @transform_0, window_bounds = array<i64: 64, 128>}, {pipeline_mode = #tpu.pipeline_mode<synchronous>, transform_indices = @transform_1, window_bounds = array<i64: 128, 384>}, {pipeline_mode = #tpu.pipeline_mode<synchronous>, transform_indices = @transform_2, window_bounds = array<i64: 128, 384>}, {pipeline_mode = #tpu.pipeline_mode<synchronous>, transform_indices = @transform_3, window_bounds = array<i64: 1, 384>}, {pipeline_mode = #tpu.pipeline_mode<synchronous>, transform_indices = @transform_4, window_bounds = array<i64: 1, 128>}, {transform_indices = @transform_5, window_bounds = array<i64: 64, 128>}, {pipeline_mode = #tpu.pipeline_mode<synchronous>, transform_indices = @transform_6, window_bounds = array<i64: 8, 128>}]} {
    %c0_i32 = arith.constant 0 : i32
    %0 = arith.cmpi eq, %arg0, %c0_i32 : i32
    %1 = arith.extui %0 : i1 to i32
    %c0_i32_0 = arith.constant 0 : i32
    %2 = arith.cmpi ne, %1, %c0_i32_0 : i32
    scf.if %2 {
      %cst_99 = arith.constant 0.000000e+00 : f32
      %307 = vector.broadcast %cst_99 : f32 to vector<8x128xf32>
      %c0_100 = arith.constant 0 : index
      %c0_101 = arith.constant 0 : index
      %308 = vector.load %arg8[%c0_100, %c0_101] : memref<8x128xf32, #tpu.memory_space<vmem>>, vector<8x128xf32>
      tpu.vector_store %arg8[%c0_100, %c0_101], %307 {strides = array<i32>} : memref<8x128xf32, #tpu.memory_space<vmem>>, vector<8x128xf32>,
    } else {
    }
    %c0 = arith.constant 0 : index
    %c0_1 = arith.constant 0 : index
    %3 = vector.load %arg1[%c0, %c0_1] : memref<64x128xf32, #tpu.memory_space<vmem>>, vector<64x128xf32>
    %c0_2 = arith.constant 0 : index
    %c0_3 = arith.constant 0 : index
    %4 = vector.load %arg2[%c0_2, %c0_3] : memref<128x384xf32, #tpu.memory_space<vmem>>, vector<128x384xf32>
    %cst = arith.constant dense<0.000000e+00> : vector<64x384xf32>
    %5 = tpu.matmul %3, %4, %cst {dimension_numbers = #tpu.dot_dimension_numbers<[1], [0], [0], [1], [0, 0, 1, 1], [], []>} : vector<64x128xf32>, vector<128x384xf32>, vector<64x384xf32> -> vector<64x384xf32>
    %c0_4 = arith.constant 0 : index
    %c0_5 = arith.constant 0 : index
    %6 = vector.load %arg4[%c0_4, %c0_5] : memref<1x384xf32, #tpu.memory_space<vmem>>, vector<1x384xf32>
    %7 = vector.broadcast %6 : vector<1x384xf32> to vector<64x384xf32>
    %8 = arith.addf %5, %7 : vector<64x384xf32>
    %c0_6 = arith.constant 0 : index
    %c0_7 = arith.constant 0 : index
    %9 = vector.load %arg9[%c0_6, %c0_7] : memref<64x384xf32, #tpu.memory_space<vmem>>, vector<64x384xf32>
    tpu.vector_store %arg9[%c0_6, %c0_7], %8 {strides = array<i32>} : memref<64x384xf32, #tpu.memory_space<vmem>>, vector<64x384xf32>,
    %c0_8 = arith.constant 0 : index
    %c0_9 = arith.constant 0 : index
    %10 = vector.load %arg3[%c0_8, %c0_9] : memref<128x384xf32, #tpu.memory_space<vmem>>, vector<128x384xf32>
    %c0_10 = arith.constant 0 : index
    %c0_11 = arith.constant 0 : index
    %11 = vector.load %arg5[%c0_10, %c0_11] : memref<1x128xf32, #tpu.memory_space<vmem>>, vector<1x128xf32>
    %12 = vector.shape_cast %11 : vector<1x128xf32> to vector<1x128xf32>
    %13 = vector.broadcast %12 : vector<1x128xf32> to vector<8x128xf32>
    %c0_12 = arith.constant 0 : index
    %c0_13 = arith.constant 0 : index
    %14 = vector.load %arg8[%c0_12, %c0_13] : memref<8x128xf32, #tpu.memory_space<vmem>>, vector<8x128xf32>
    %c0_i32_14 = arith.constant 0 : i32
    %c8_i32 = arith.constant 8 : i32
    %15 = arith.muli %c0_i32_14, %c8_i32 : i32
    %16 = tpu.assume_multiple %15, 8 : i32
    %17 = arith.index_cast %16 : i32 to index
    %c0_15 = arith.constant 0 : index
    %18 = vector.load %arg9[%17, %c0_15] : memref<64x384xf32, #tpu.memory_space<vmem>>, vector<8x384xf32>
    %cst_16 = arith.constant dense<0.000000e+00> : vector<8x384xf32>
    %19 = tpu.matmul %14, %10, %cst_16 {dimension_numbers = #tpu.dot_dimension_numbers<[1], [0], [0], [1], [0, 0, 1, 1], [], []>} : vector<8x128xf32>, vector<128x384xf32>, vector<8x384xf32> -> vector<8x384xf32>
    %20 = vector.extract_strided_slice %18 {offsets = [0, 0], sizes = [8, 128], strides = [1, 1]} : vector<8x384xf32> to vector<8x128xf32>
    %21 = vector.extract_strided_slice %19 {offsets = [0, 0], sizes = [8, 128], strides = [1, 1]} : vector<8x384xf32> to vector<8x128xf32>
    %22 = arith.addf %20, %21 : vector<8x128xf32>
    %cst_17 = arith.constant 5.000000e-01 : f32
    %23 = vector.broadcast %cst_17 : f32 to vector<8x128xf32>
    %24 = arith.mulf %23, %22 : vector<8x128xf32>
    %25 = math.tanh %24 : vector<8x128xf32>
    %cst_18 = arith.constant 5.000000e-01 : f32
    %26 = vector.broadcast %cst_18 : f32 to vector<8x128xf32>
    %27 = arith.mulf %26, %25 : vector<8x128xf32>
    %cst_19 = arith.constant 5.000000e-01 : f32
    %28 = vector.broadcast %cst_19 : f32 to vector<8x128xf32>
    %29 = arith.addf %27, %28 : vector<8x128xf32>
    %30 = vector.extract_strided_slice %18 {offsets = [0, 128], sizes = [8, 128], strides = [1, 1]} : vector<8x384xf32> to vector<8x128xf32>
    %31 = vector.extract_strided_slice %19 {offsets = [0, 128], sizes = [8, 128], strides = [1, 1]} : vector<8x384xf32> to vector<8x128xf32>
    %32 = arith.addf %30, %31 : vector<8x128xf32>
    %cst_20 = arith.constant 5.000000e-01 : f32
    %33 = vector.broadcast %cst_20 : f32 to vector<8x128xf32>
    %34 = arith.mulf %33, %32 : vector<8x128xf32>
    %35 = math.tanh %34 : vector<8x128xf32>
    %cst_21 = arith.constant 5.000000e-01 : f32
    %36 = vector.broadcast %cst_21 : f32 to vector<8x128xf32>
    %37 = arith.mulf %36, %35 : vector<8x128xf32>
    %cst_22 = arith.constant 5.000000e-01 : f32
    %38 = vector.broadcast %cst_22 : f32 to vector<8x128xf32>
    %39 = arith.addf %37, %38 : vector<8x128xf32>
    %40 = vector.extract_strided_slice %18 {offsets = [0, 256], sizes = [8, 128], strides = [1, 1]} : vector<8x384xf32> to vector<8x128xf32>
    %41 = vector.extract_strided_slice %19 {offsets = [0, 256], sizes = [8, 128], strides = [1, 1]} : vector<8x384xf32> to vector<8x128xf32>
    %42 = arith.addf %41, %13 : vector<8x128xf32>
    %43 = arith.mulf %29, %42 : vector<8x128xf32>
    %44 = arith.addf %40, %43 : vector<8x128xf32>
    %45 = math.tanh %44 : vector<8x128xf32>
    %46 = arith.subf %14, %45 : vector<8x128xf32>
    %47 = arith.mulf %39, %46 : vector<8x128xf32>
    %48 = arith.addf %45, %47 : vector<8x128xf32>
    %49 = arith.index_cast %16 : i32 to index
    %c0_23 = arith.constant 0 : index
    %50 = vector.load %arg6[%49, %c0_23] : memref<64x128xf32, #tpu.memory_space<vmem>>, vector<8x128xf32>
    tpu.vector_store %arg6[%49, %c0_23], %48 {strides = array<i32>} : memref<64x128xf32, #tpu.memory_space<vmem>>, vector<8x128xf32>,
    %c1_i32 = arith.constant 1 : i32
    %c8_i32_24 = arith.constant 8 : i32
    %51 = arith.muli %c1_i32, %c8_i32_24 : i32
    %52 = tpu.assume_multiple %51, 8 : i32
    %53 = arith.index_cast %52 : i32 to index
    %c0_25 = arith.constant 0 : index
    %54 = vector.load %arg9[%53, %c0_25] : memref<64x384xf32, #tpu.memory_space<vmem>>, vector<8x384xf32>
    %cst_26 = arith.constant dense<0.000000e+00> : vector<8x384xf32>
    %55 = tpu.matmul %48, %10, %cst_26 {dimension_numbers = #tpu.dot_dimension_numbers<[1], [0], [0], [1], [0, 0, 1, 1], [], []>} : vector<8x128xf32>, vector<128x384xf32>, vector<8x384xf32> -> vector<8x384xf32>
    %56 = vector.extract_strided_slice %54 {offsets = [0, 0], sizes = [8, 128], strides = [1, 1]} : vector<8x384xf32> to vector<8x128xf32>
    %57 = vector.extract_strided_slice %55 {offsets = [0, 0], sizes = [8, 128], strides = [1, 1]} : vector<8x384xf32> to vector<8x128xf32>
    %58 = arith.addf %56, %57 : vector<8x128xf32>
    %cst_27 = arith.constant 5.000000e-01 : f32
    %59 = vector.broadcast %cst_27 : f32 to vector<8x128xf32>
    %60 = arith.mulf %59, %58 : vector<8x128xf32>
    %61 = math.tanh %60 : vector<8x128xf32>
    %cst_28 = arith.constant 5.000000e-01 : f32
    %62 = vector.broadcast %cst_28 : f32 to vector<8x128xf32>
    %63 = arith.mulf %62, %61 : vector<8x128xf32>
    %cst_29 = arith.constant 5.000000e-01 : f32
    %64 = vector.broadcast %cst_29 : f32 to vector<8x128xf32>
    %65 = arith.addf %63, %64 : vector<8x128xf32>
    %66 = vector.extract_strided_slice %54 {offsets = [0, 128], sizes = [8, 128], strides = [1, 1]} : vector<8x384xf32> to vector<8x128xf32>
    %67 = vector.extract_strided_slice %55 {offsets = [0, 128], sizes = [8, 128], strides = [1, 1]} : vector<8x384xf32> to vector<8x128xf32>
    %68 = arith.addf %66, %67 : vector<8x128xf32>
    %cst_30 = arith.constant 5.000000e-01 : f32
    %69 = vector.broadcast %cst_30 : f32 to vector<8x128xf32>
    %70 = arith.mulf %69, %68 : vector<8x128xf32>
    %71 = math.tanh %70 : vector<8x128xf32>
    %cst_31 = arith.constant 5.000000e-01 : f32
    %72 = vector.broadcast %cst_31 : f32 to vector<8x128xf32>
    %73 = arith.mulf %72, %71 : vector<8x128xf32>
    %cst_32 = arith.constant 5.000000e-01 : f32
    %74 = vector.broadcast %cst_32 : f32 to vector<8x128xf32>
    %75 = arith.addf %73, %74 : vector<8x128xf32>
    %76 = vector.extract_strided_slice %54 {offsets = [0, 256], sizes = [8, 128], strides = [1, 1]} : vector<8x384xf32> to vector<8x128xf32>
    %77 = vector.extract_strided_slice %55 {offsets = [0, 256], sizes = [8, 128], strides = [1, 1]} : vector<8x384xf32> to vector<8x128xf32>
    %78 = arith.addf %77, %13 : vector<8x128xf32>
    %79 = arith.mulf %65, %78 : vector<8x128xf32>
    %80 = arith.addf %76, %79 : vector<8x128xf32>
    %81 = math.tanh %80 : vector<8x128xf32>
    %82 = arith.subf %48, %81 : vector<8x128xf32>
    %83 = arith.mulf %75, %82 : vector<8x128xf32>
    %84 = arith.addf %81, %83 : vector<8x128xf32>
    %85 = arith.index_cast %52 : i32 to index
    %c0_33 = arith.constant 0 : index
    %86 = vector.load %arg6[%85, %c0_33] : memref<64x128xf32, #tpu.memory_space<vmem>>, vector<8x128xf32>
    tpu.vector_store %arg6[%85, %c0_33], %84 {strides = array<i32>} : memref<64x128xf32, #tpu.memory_space<vmem>>, vector<8x128xf32>,
    %c2_i32 = arith.constant 2 : i32
    %c8_i32_34 = arith.constant 8 : i32
    %87 = arith.muli %c2_i32, %c8_i32_34 : i32
    %88 = tpu.assume_multiple %87, 8 : i32
    %89 = arith.index_cast %88 : i32 to index
    %c0_35 = arith.constant 0 : index
    %90 = vector.load %arg9[%89, %c0_35] : memref<64x384xf32, #tpu.memory_space<vmem>>, vector<8x384xf32>
    %cst_36 = arith.constant dense<0.000000e+00> : vector<8x384xf32>
    %91 = tpu.matmul %84, %10, %cst_36 {dimension_numbers = #tpu.dot_dimension_numbers<[1], [0], [0], [1], [0, 0, 1, 1], [], []>} : vector<8x128xf32>, vector<128x384xf32>, vector<8x384xf32> -> vector<8x384xf32>
    %92 = vector.extract_strided_slice %90 {offsets = [0, 0], sizes = [8, 128], strides = [1, 1]} : vector<8x384xf32> to vector<8x128xf32>
    %93 = vector.extract_strided_slice %91 {offsets = [0, 0], sizes = [8, 128], strides = [1, 1]} : vector<8x384xf32> to vector<8x128xf32>
    %94 = arith.addf %92, %93 : vector<8x128xf32>
    %cst_37 = arith.constant 5.000000e-01 : f32
    %95 = vector.broadcast %cst_37 : f32 to vector<8x128xf32>
    %96 = arith.mulf %95, %94 : vector<8x128xf32>
    %97 = math.tanh %96 : vector<8x128xf32>
    %cst_38 = arith.constant 5.000000e-01 : f32
    %98 = vector.broadcast %cst_38 : f32 to vector<8x128xf32>
    %99 = arith.mulf %98, %97 : vector<8x128xf32>
    %cst_39 = arith.constant 5.000000e-01 : f32
    %100 = vector.broadcast %cst_39 : f32 to vector<8x128xf32>
    %101 = arith.addf %99, %100 : vector<8x128xf32>
    %102 = vector.extract_strided_slice %90 {offsets = [0, 128], sizes = [8, 128], strides = [1, 1]} : vector<8x384xf32> to vector<8x128xf32>
    %103 = vector.extract_strided_slice %91 {offsets = [0, 128], sizes = [8, 128], strides = [1, 1]} : vector<8x384xf32> to vector<8x128xf32>
    %104 = arith.addf %102, %103 : vector<8x128xf32>
    %cst_40 = arith.constant 5.000000e-01 : f32
    %105 = vector.broadcast %cst_40 : f32 to vector<8x128xf32>
    %106 = arith.mulf %105, %104 : vector<8x128xf32>
    %107 = math.tanh %106 : vector<8x128xf32>
    %cst_41 = arith.constant 5.000000e-01 : f32
    %108 = vector.broadcast %cst_41 : f32 to vector<8x128xf32>
    %109 = arith.mulf %108, %107 : vector<8x128xf32>
    %cst_42 = arith.constant 5.000000e-01 : f32
    %110 = vector.broadcast %cst_42 : f32 to vector<8x128xf32>
    %111 = arith.addf %109, %110 : vector<8x128xf32>
    %112 = vector.extract_strided_slice %90 {offsets = [0, 256], sizes = [8, 128], strides = [1, 1]} : vector<8x384xf32> to vector<8x128xf32>
    %113 = vector.extract_strided_slice %91 {offsets = [0, 256], sizes = [8, 128], strides = [1, 1]} : vector<8x384xf32> to vector<8x128xf32>
    %114 = arith.addf %113, %13 : vector<8x128xf32>
    %115 = arith.mulf %101, %114 : vector<8x128xf32>
    %116 = arith.addf %112, %115 : vector<8x128xf32>
    %117 = math.tanh %116 : vector<8x128xf32>
    %118 = arith.subf %84, %117 : vector<8x128xf32>
    %119 = arith.mulf %111, %118 : vector<8x128xf32>
    %120 = arith.addf %117, %119 : vector<8x128xf32>
    %121 = arith.index_cast %88 : i32 to index
    %c0_43 = arith.constant 0 : index
    %122 = vector.load %arg6[%121, %c0_43] : memref<64x128xf32, #tpu.memory_space<vmem>>, vector<8x128xf32>
    tpu.vector_store %arg6[%121, %c0_43], %120 {strides = array<i32>} : memref<64x128xf32, #tpu.memory_space<vmem>>, vector<8x128xf32>,
    %c3_i32 = arith.constant 3 : i32
    %c8_i32_44 = arith.constant 8 : i32
    %123 = arith.muli %c3_i32, %c8_i32_44 : i32
    %124 = tpu.assume_multiple %123, 8 : i32
    %125 = arith.index_cast %124 : i32 to index
    %c0_45 = arith.constant 0 : index
    %126 = vector.load %arg9[%125, %c0_45] : memref<64x384xf32, #tpu.memory_space<vmem>>, vector<8x384xf32>
    %cst_46 = arith.constant dense<0.000000e+00> : vector<8x384xf32>
    %127 = tpu.matmul %120, %10, %cst_46 {dimension_numbers = #tpu.dot_dimension_numbers<[1], [0], [0], [1], [0, 0, 1, 1], [], []>} : vector<8x128xf32>, vector<128x384xf32>, vector<8x384xf32> -> vector<8x384xf32>
    %128 = vector.extract_strided_slice %126 {offsets = [0, 0], sizes = [8, 128], strides = [1, 1]} : vector<8x384xf32> to vector<8x128xf32>
    %129 = vector.extract_strided_slice %127 {offsets = [0, 0], sizes = [8, 128], strides = [1, 1]} : vector<8x384xf32> to vector<8x128xf32>
    %130 = arith.addf %128, %129 : vector<8x128xf32>
    %cst_47 = arith.constant 5.000000e-01 : f32
    %131 = vector.broadcast %cst_47 : f32 to vector<8x128xf32>
    %132 = arith.mulf %131, %130 : vector<8x128xf32>
    %133 = math.tanh %132 : vector<8x128xf32>
    %cst_48 = arith.constant 5.000000e-01 : f32
    %134 = vector.broadcast %cst_48 : f32 to vector<8x128xf32>
    %135 = arith.mulf %134, %133 : vector<8x128xf32>
    %cst_49 = arith.constant 5.000000e-01 : f32
    %136 = vector.broadcast %cst_49 : f32 to vector<8x128xf32>
    %137 = arith.addf %135, %136 : vector<8x128xf32>
    %138 = vector.extract_strided_slice %126 {offsets = [0, 128], sizes = [8, 128], strides = [1, 1]} : vector<8x384xf32> to vector<8x128xf32>
    %139 = vector.extract_strided_slice %127 {offsets = [0, 128], sizes = [8, 128], strides = [1, 1]} : vector<8x384xf32> to vector<8x128xf32>
    %140 = arith.addf %138, %139 : vector<8x128xf32>
    %cst_50 = arith.constant 5.000000e-01 : f32
    %141 = vector.broadcast %cst_50 : f32 to vector<8x128xf32>
    %142 = arith.mulf %141, %140 : vector<8x128xf32>
    %143 = math.tanh %142 : vector<8x128xf32>
    %cst_51 = arith.constant 5.000000e-01 : f32
    %144 = vector.broadcast %cst_51 : f32 to vector<8x128xf32>
    %145 = arith.mulf %144, %143 : vector<8x128xf32>
    %cst_52 = arith.constant 5.000000e-01 : f32
    %146 = vector.broadcast %cst_52 : f32 to vector<8x128xf32>
    %147 = arith.addf %145, %146 : vector<8x128xf32>
    %148 = vector.extract_strided_slice %126 {offsets = [0, 256], sizes = [8, 128], strides = [1, 1]} : vector<8x384xf32> to vector<8x128xf32>
    %149 = vector.extract_strided_slice %127 {offsets = [0, 256], sizes = [8, 128], strides = [1, 1]} : vector<8x384xf32> to vector<8x128xf32>
    %150 = arith.addf %149, %13 : vector<8x128xf32>
    %151 = arith.mulf %137, %150 : vector<8x128xf32>
    %152 = arith.addf %148, %151 : vector<8x128xf32>
    %153 = math.tanh %152 : vector<8x128xf32>
    %154 = arith.subf %120, %153 : vector<8x128xf32>
    %155 = arith.mulf %147, %154 : vector<8x128xf32>
    %156 = arith.addf %153, %155 : vector<8x128xf32>
    %157 = arith.index_cast %124 : i32 to index
    %c0_53 = arith.constant 0 : index
    %158 = vector.load %arg6[%157, %c0_53] : memref<64x128xf32, #tpu.memory_space<vmem>>, vector<8x128xf32>
    tpu.vector_store %arg6[%157, %c0_53], %156 {strides = array<i32>} : memref<64x128xf32, #tpu.memory_space<vmem>>, vector<8x128xf32>,
    %c4_i32 = arith.constant 4 : i32
    %c8_i32_54 = arith.constant 8 : i32
    %159 = arith.muli %c4_i32, %c8_i32_54 : i32
    %160 = tpu.assume_multiple %159, 8 : i32
    %161 = arith.index_cast %160 : i32 to index
    %c0_55 = arith.constant 0 : index
    %162 = vector.load %arg9[%161, %c0_55] : memref<64x384xf32, #tpu.memory_space<vmem>>, vector<8x384xf32>
    %cst_56 = arith.constant dense<0.000000e+00> : vector<8x384xf32>
    %163 = tpu.matmul %156, %10, %cst_56 {dimension_numbers = #tpu.dot_dimension_numbers<[1], [0], [0], [1], [0, 0, 1, 1], [], []>} : vector<8x128xf32>, vector<128x384xf32>, vector<8x384xf32> -> vector<8x384xf32>
    %164 = vector.extract_strided_slice %162 {offsets = [0, 0], sizes = [8, 128], strides = [1, 1]} : vector<8x384xf32> to vector<8x128xf32>
    %165 = vector.extract_strided_slice %163 {offsets = [0, 0], sizes = [8, 128], strides = [1, 1]} : vector<8x384xf32> to vector<8x128xf32>
    %166 = arith.addf %164, %165 : vector<8x128xf32>
    %cst_57 = arith.constant 5.000000e-01 : f32
    %167 = vector.broadcast %cst_57 : f32 to vector<8x128xf32>
    %168 = arith.mulf %167, %166 : vector<8x128xf32>
    %169 = math.tanh %168 : vector<8x128xf32>
    %cst_58 = arith.constant 5.000000e-01 : f32
    %170 = vector.broadcast %cst_58 : f32 to vector<8x128xf32>
    %171 = arith.mulf %170, %169 : vector<8x128xf32>
    %cst_59 = arith.constant 5.000000e-01 : f32
    %172 = vector.broadcast %cst_59 : f32 to vector<8x128xf32>
    %173 = arith.addf %171, %172 : vector<8x128xf32>
    %174 = vector.extract_strided_slice %162 {offsets = [0, 128], sizes = [8, 128], strides = [1, 1]} : vector<8x384xf32> to vector<8x128xf32>
    %175 = vector.extract_strided_slice %163 {offsets = [0, 128], sizes = [8, 128], strides = [1, 1]} : vector<8x384xf32> to vector<8x128xf32>
    %176 = arith.addf %174, %175 : vector<8x128xf32>
    %cst_60 = arith.constant 5.000000e-01 : f32
    %177 = vector.broadcast %cst_60 : f32 to vector<8x128xf32>
    %178 = arith.mulf %177, %176 : vector<8x128xf32>
    %179 = math.tanh %178 : vector<8x128xf32>
    %cst_61 = arith.constant 5.000000e-01 : f32
    %180 = vector.broadcast %cst_61 : f32 to vector<8x128xf32>
    %181 = arith.mulf %180, %179 : vector<8x128xf32>
    %cst_62 = arith.constant 5.000000e-01 : f32
    %182 = vector.broadcast %cst_62 : f32 to vector<8x128xf32>
    %183 = arith.addf %181, %182 : vector<8x128xf32>
    %184 = vector.extract_strided_slice %162 {offsets = [0, 256], sizes = [8, 128], strides = [1, 1]} : vector<8x384xf32> to vector<8x128xf32>
    %185 = vector.extract_strided_slice %163 {offsets = [0, 256], sizes = [8, 128], strides = [1, 1]} : vector<8x384xf32> to vector<8x128xf32>
    %186 = arith.addf %185, %13 : vector<8x128xf32>
    %187 = arith.mulf %173, %186 : vector<8x128xf32>
    %188 = arith.addf %184, %187 : vector<8x128xf32>
    %189 = math.tanh %188 : vector<8x128xf32>
    %190 = arith.subf %156, %189 : vector<8x128xf32>
    %191 = arith.mulf %183, %190 : vector<8x128xf32>
    %192 = arith.addf %189, %191 : vector<8x128xf32>
    %193 = arith.index_cast %160 : i32 to index
    %c0_63 = arith.constant 0 : index
    %194 = vector.load %arg6[%193, %c0_63] : memref<64x128xf32, #tpu.memory_space<vmem>>, vector<8x128xf32>
    tpu.vector_store %arg6[%193, %c0_63], %192 {strides = array<i32>} : memref<64x128xf32, #tpu.memory_space<vmem>>, vector<8x128xf32>,
    %c5_i32 = arith.constant 5 : i32
    %c8_i32_64 = arith.constant 8 : i32
    %195 = arith.muli %c5_i32, %c8_i32_64 : i32
    %196 = tpu.assume_multiple %195, 8 : i32
    %197 = arith.index_cast %196 : i32 to index
    %c0_65 = arith.constant 0 : index
    %198 = vector.load %arg9[%197, %c0_65] : memref<64x384xf32, #tpu.memory_space<vmem>>, vector<8x384xf32>
    %cst_66 = arith.constant dense<0.000000e+00> : vector<8x384xf32>
    %199 = tpu.matmul %192, %10, %cst_66 {dimension_numbers = #tpu.dot_dimension_numbers<[1], [0], [0], [1], [0, 0, 1, 1], [], []>} : vector<8x128xf32>, vector<128x384xf32>, vector<8x384xf32> -> vector<8x384xf32>
    %200 = vector.extract_strided_slice %198 {offsets = [0, 0], sizes = [8, 128], strides = [1, 1]} : vector<8x384xf32> to vector<8x128xf32>
    %201 = vector.extract_strided_slice %199 {offsets = [0, 0], sizes = [8, 128], strides = [1, 1]} : vector<8x384xf32> to vector<8x128xf32>
    %202 = arith.addf %200, %201 : vector<8x128xf32>
    %cst_67 = arith.constant 5.000000e-01 : f32
    %203 = vector.broadcast %cst_67 : f32 to vector<8x128xf32>
    %204 = arith.mulf %203, %202 : vector<8x128xf32>
    %205 = math.tanh %204 : vector<8x128xf32>
    %cst_68 = arith.constant 5.000000e-01 : f32
    %206 = vector.broadcast %cst_68 : f32 to vector<8x128xf32>
    %207 = arith.mulf %206, %205 : vector<8x128xf32>
    %cst_69 = arith.constant 5.000000e-01 : f32
    %208 = vector.broadcast %cst_69 : f32 to vector<8x128xf32>
    %209 = arith.addf %207, %208 : vector<8x128xf32>
    %210 = vector.extract_strided_slice %198 {offsets = [0, 128], sizes = [8, 128], strides = [1, 1]} : vector<8x384xf32> to vector<8x128xf32>
    %211 = vector.extract_strided_slice %199 {offsets = [0, 128], sizes = [8, 128], strides = [1, 1]} : vector<8x384xf32> to vector<8x128xf32>
    %212 = arith.addf %210, %211 : vector<8x128xf32>
    %cst_70 = arith.constant 5.000000e-01 : f32
    %213 = vector.broadcast %cst_70 : f32 to vector<8x128xf32>
    %214 = arith.mulf %213, %212 : vector<8x128xf32>
    %215 = math.tanh %214 : vector<8x128xf32>
    %cst_71 = arith.constant 5.000000e-01 : f32
    %216 = vector.broadcast %cst_71 : f32 to vector<8x128xf32>
    %217 = arith.mulf %216, %215 : vector<8x128xf32>
    %cst_72 = arith.constant 5.000000e-01 : f32
    %218 = vector.broadcast %cst_72 : f32 to vector<8x128xf32>
    %219 = arith.addf %217, %218 : vector<8x128xf32>
    %220 = vector.extract_strided_slice %198 {offsets = [0, 256], sizes = [8, 128], strides = [1, 1]} : vector<8x384xf32> to vector<8x128xf32>
    %221 = vector.extract_strided_slice %199 {offsets = [0, 256], sizes = [8, 128], strides = [1, 1]} : vector<8x384xf32> to vector<8x128xf32>
    %222 = arith.addf %221, %13 : vector<8x128xf32>
    %223 = arith.mulf %209, %222 : vector<8x128xf32>
    %224 = arith.addf %220, %223 : vector<8x128xf32>
    %225 = math.tanh %224 : vector<8x128xf32>
    %226 = arith.subf %192, %225 : vector<8x128xf32>
    %227 = arith.mulf %219, %226 : vector<8x128xf32>
    %228 = arith.addf %225, %227 : vector<8x128xf32>
    %229 = arith.index_cast %196 : i32 to index
    %c0_73 = arith.constant 0 : index
    %230 = vector.load %arg6[%229, %c0_73] : memref<64x128xf32, #tpu.memory_space<vmem>>, vector<8x128xf32>
    tpu.vector_store %arg6[%229, %c0_73], %228 {strides = array<i32>} : memref<64x128xf32, #tpu.memory_space<vmem>>, vector<8x128xf32>,
    %c6_i32 = arith.constant 6 : i32
    %c8_i32_74 = arith.constant 8 : i32
    %231 = arith.muli %c6_i32, %c8_i32_74 : i32
    %232 = tpu.assume_multiple %231, 8 : i32
    %233 = arith.index_cast %232 : i32 to index
    %c0_75 = arith.constant 0 : index
    %234 = vector.load %arg9[%233, %c0_75] : memref<64x384xf32, #tpu.memory_space<vmem>>, vector<8x384xf32>
    %cst_76 = arith.constant dense<0.000000e+00> : vector<8x384xf32>
    %235 = tpu.matmul %228, %10, %cst_76 {dimension_numbers = #tpu.dot_dimension_numbers<[1], [0], [0], [1], [0, 0, 1, 1], [], []>} : vector<8x128xf32>, vector<128x384xf32>, vector<8x384xf32> -> vector<8x384xf32>
    %236 = vector.extract_strided_slice %234 {offsets = [0, 0], sizes = [8, 128], strides = [1, 1]} : vector<8x384xf32> to vector<8x128xf32>
    %237 = vector.extract_strided_slice %235 {offsets = [0, 0], sizes = [8, 128], strides = [1, 1]} : vector<8x384xf32> to vector<8x128xf32>
    %238 = arith.addf %236, %237 : vector<8x128xf32>
    %cst_77 = arith.constant 5.000000e-01 : f32
    %239 = vector.broadcast %cst_77 : f32 to vector<8x128xf32>
    %240 = arith.mulf %239, %238 : vector<8x128xf32>
    %241 = math.tanh %240 : vector<8x128xf32>
    %cst_78 = arith.constant 5.000000e-01 : f32
    %242 = vector.broadcast %cst_78 : f32 to vector<8x128xf32>
    %243 = arith.mulf %242, %241 : vector<8x128xf32>
    %cst_79 = arith.constant 5.000000e-01 : f32
    %244 = vector.broadcast %cst_79 : f32 to vector<8x128xf32>
    %245 = arith.addf %243, %244 : vector<8x128xf32>
    %246 = vector.extract_strided_slice %234 {offsets = [0, 128], sizes = [8, 128], strides = [1, 1]} : vector<8x384xf32> to vector<8x128xf32>
    %247 = vector.extract_strided_slice %235 {offsets = [0, 128], sizes = [8, 128], strides = [1, 1]} : vector<8x384xf32> to vector<8x128xf32>
    %248 = arith.addf %246, %247 : vector<8x128xf32>
    %cst_80 = arith.constant 5.000000e-01 : f32
    %249 = vector.broadcast %cst_80 : f32 to vector<8x128xf32>
    %250 = arith.mulf %249, %248 : vector<8x128xf32>
    %251 = math.tanh %250 : vector<8x128xf32>
    %cst_81 = arith.constant 5.000000e-01 : f32
    %252 = vector.broadcast %cst_81 : f32 to vector<8x128xf32>
    %253 = arith.mulf %252, %251 : vector<8x128xf32>
    %cst_82 = arith.constant 5.000000e-01 : f32
    %254 = vector.broadcast %cst_82 : f32 to vector<8x128xf32>
    %255 = arith.addf %253, %254 : vector<8x128xf32>
    %256 = vector.extract_strided_slice %234 {offsets = [0, 256], sizes = [8, 128], strides = [1, 1]} : vector<8x384xf32> to vector<8x128xf32>
    %257 = vector.extract_strided_slice %235 {offsets = [0, 256], sizes = [8, 128], strides = [1, 1]} : vector<8x384xf32> to vector<8x128xf32>
    %258 = arith.addf %257, %13 : vector<8x128xf32>
    %259 = arith.mulf %245, %258 : vector<8x128xf32>
    %260 = arith.addf %256, %259 : vector<8x128xf32>
    %261 = math.tanh %260 : vector<8x128xf32>
    %262 = arith.subf %228, %261 : vector<8x128xf32>
    %263 = arith.mulf %255, %262 : vector<8x128xf32>
    %264 = arith.addf %261, %263 : vector<8x128xf32>
    %265 = arith.index_cast %232 : i32 to index
    %c0_83 = arith.constant 0 : index
    %266 = vector.load %arg6[%265, %c0_83] : memref<64x128xf32, #tpu.memory_space<vmem>>, vector<8x128xf32>
    tpu.vector_store %arg6[%265, %c0_83], %264 {strides = array<i32>} : memref<64x128xf32, #tpu.memory_space<vmem>>, vector<8x128xf32>,
    %c7_i32 = arith.constant 7 : i32
    %c8_i32_84 = arith.constant 8 : i32
    %267 = arith.muli %c7_i32, %c8_i32_84 : i32
    %268 = tpu.assume_multiple %267, 8 : i32
    %269 = arith.index_cast %268 : i32 to index
    %c0_85 = arith.constant 0 : index
    %270 = vector.load %arg9[%269, %c0_85] : memref<64x384xf32, #tpu.memory_space<vmem>>, vector<8x384xf32>
    %cst_86 = arith.constant dense<0.000000e+00> : vector<8x384xf32>
    %271 = tpu.matmul %264, %10, %cst_86 {dimension_numbers = #tpu.dot_dimension_numbers<[1], [0], [0], [1], [0, 0, 1, 1], [], []>} : vector<8x128xf32>, vector<128x384xf32>, vector<8x384xf32> -> vector<8x384xf32>
    %272 = vector.extract_strided_slice %270 {offsets = [0, 0], sizes = [8, 128], strides = [1, 1]} : vector<8x384xf32> to vector<8x128xf32>
    %273 = vector.extract_strided_slice %271 {offsets = [0, 0], sizes = [8, 128], strides = [1, 1]} : vector<8x384xf32> to vector<8x128xf32>
    %274 = arith.addf %272, %273 : vector<8x128xf32>
    %cst_87 = arith.constant 5.000000e-01 : f32
    %275 = vector.broadcast %cst_87 : f32 to vector<8x128xf32>
    %276 = arith.mulf %275, %274 : vector<8x128xf32>
    %277 = math.tanh %276 : vector<8x128xf32>
    %cst_88 = arith.constant 5.000000e-01 : f32
    %278 = vector.broadcast %cst_88 : f32 to vector<8x128xf32>
    %279 = arith.mulf %278, %277 : vector<8x128xf32>
    %cst_89 = arith.constant 5.000000e-01 : f32
    %280 = vector.broadcast %cst_89 : f32 to vector<8x128xf32>
    %281 = arith.addf %279, %280 : vector<8x128xf32>
    %282 = vector.extract_strided_slice %270 {offsets = [0, 128], sizes = [8, 128], strides = [1, 1]} : vector<8x384xf32> to vector<8x128xf32>
    %283 = vector.extract_strided_slice %271 {offsets = [0, 128], sizes = [8, 128], strides = [1, 1]} : vector<8x384xf32> to vector<8x128xf32>
    %284 = arith.addf %282, %283 : vector<8x128xf32>
    %cst_90 = arith.constant 5.000000e-01 : f32
    %285 = vector.broadcast %cst_90 : f32 to vector<8x128xf32>
    %286 = arith.mulf %285, %284 : vector<8x128xf32>
    %287 = math.tanh %286 : vector<8x128xf32>
    %cst_91 = arith.constant 5.000000e-01 : f32
    %288 = vector.broadcast %cst_91 : f32 to vector<8x128xf32>
    %289 = arith.mulf %288, %287 : vector<8x128xf32>
    %cst_92 = arith.constant 5.000000e-01 : f32
    %290 = vector.broadcast %cst_92 : f32 to vector<8x128xf32>
    %291 = arith.addf %289, %290 : vector<8x128xf32>
    %292 = vector.extract_strided_slice %270 {offsets = [0, 256], sizes = [8, 128], strides = [1, 1]} : vector<8x384xf32> to vector<8x128xf32>
    %293 = vector.extract_strided_slice %271 {offsets = [0, 256], sizes = [8, 128], strides = [1, 1]} : vector<8x384xf32> to vector<8x128xf32>
    %294 = arith.addf %293, %13 : vector<8x128xf32>
    %295 = arith.mulf %281, %294 : vector<8x128xf32>
    %296 = arith.addf %292, %295 : vector<8x128xf32>
    %297 = math.tanh %296 : vector<8x128xf32>
    %298 = arith.subf %264, %297 : vector<8x128xf32>
    %299 = arith.mulf %291, %298 : vector<8x128xf32>
    %300 = arith.addf %297, %299 : vector<8x128xf32>
    %301 = arith.index_cast %268 : i32 to index
    %c0_93 = arith.constant 0 : index
    %302 = vector.load %arg6[%301, %c0_93] : memref<64x128xf32, #tpu.memory_space<vmem>>, vector<8x128xf32>
    tpu.vector_store %arg6[%301, %c0_93], %300 {strides = array<i32>} : memref<64x128xf32, #tpu.memory_space<vmem>>, vector<8x128xf32>,
    %c8_i32_94 = arith.constant 8 : i32
    %c0_95 = arith.constant 0 : index
    %c0_96 = arith.constant 0 : index
    %303 = vector.load %arg8[%c0_95, %c0_96] : memref<8x128xf32, #tpu.memory_space<vmem>>, vector<8x128xf32>
    tpu.vector_store %arg8[%c0_95, %c0_96], %300 {strides = array<i32>} : memref<8x128xf32, #tpu.memory_space<vmem>>, vector<8x128xf32>,
    %c0_i32_97 = arith.constant 0 : i32
    %304 = arith.cmpi eq, %arg0, %c0_i32_97 : i32
    %305 = arith.extui %304 : i1 to i32
    %c0_i32_98 = arith.constant 0 : i32
    %306 = arith.cmpi ne, %305, %c0_i32_98 : i32
    scf.if %306 {
      %c0_99 = arith.constant 0 : index
      %c0_100 = arith.constant 0 : index
      %307 = vector.load %arg7[%c0_99, %c0_100] : memref<8x128xf32, #tpu.memory_space<vmem>>, vector<8x128xf32>
      tpu.vector_store %arg7[%c0_99, %c0_100], %300 {strides = array<i32>} : memref<8x128xf32, #tpu.memory_space<vmem>>, vector<8x128xf32>,
    } else {
    }
    return
  }
  func.func @transform_0(%arg0: i32) -> (i32, i32) {
    %c0_i32 = arith.constant 0 : i32
    %c0_i32_0 = arith.constant 0 : i32
    return %arg0, %c0_i32 : i32, i32
  }
  func.func @transform_1(%arg0: i32) -> (i32, i32) {
    %c0_i32 = arith.constant 0 : i32
    %c0_i32_0 = arith.constant 0 : i32
    %c0_i32_1 = arith.constant 0 : i32
    return %c0_i32, %c0_i32_0 : i32, i32
  }
  func.func @transform_2(%arg0: i32) -> (i32, i32) {
    %c0_i32 = arith.constant 0 : i32
    %c0_i32_0 = arith.constant 0 : i32
    %c0_i32_1 = arith.constant 0 : i32
    return %c0_i32, %c0_i32_0 : i32, i32
  }
  func.func @transform_3(%arg0: i32) -> (i32, i32) {
    %c0_i32 = arith.constant 0 : i32
    %c0_i32_0 = arith.constant 0 : i32
    %c0_i32_1 = arith.constant 0 : i32
    return %c0_i32, %c0_i32_0 : i32, i32
  }
  func.func @transform_4(%arg0: i32) -> (i32, i32) {
    %c0_i32 = arith.constant 0 : i32
    %c0_i32_0 = arith.constant 0 : i32
    %c0_i32_1 = arith.constant 0 : i32
    return %c0_i32, %c0_i32_0 : i32, i32
  }
  func.func @transform_5(%arg0: i32) -> (i32, i32) {
    %c0_i32 = arith.constant 0 : i32
    %c0_i32_0 = arith.constant 0 : i32
    return %arg0, %c0_i32 : i32, i32
  }
  func.func @transform_6(%arg0: i32) -> (i32, i32) {
    %c0_i32 = arith.constant 0 : i32
    %c0_i32_0 = arith.constant 0 : i32
    %c0_i32_1 = arith.constant 0 : i32
    return %c0_i32, %c0_i32_0 : i32, i32
  }
}

</mosaic_0001>

<llo_original>
// kernel: seq2seq_encoder_forward.2
$region0: #{seq2seq_encoder_forward.2}
  #allocation0 [shape = 'u32[]', space=smem, size = 0x4, offset = 0x4, fixed_abs, tag = 'smem constant byte address 0x4 - core index']
  #allocation1 [shape = 'u32[144,128]{1,0:T(1,128)}', space=vmem, size = 0x12000, scoped, tag = 'internal scratch']
  #allocation2 [shape = 'f32[8,128]{1,0:T(8,128)}', space=vmem, size = 0x1000, scoped, tag = 'scratch operand']
  #allocation3 [shape = 'f32[64,384]{1,0:T(8,128)}', space=vmem, size = 0x18000, scoped, tag = 'scratch operand']
  %s0 = inlined_call_operand.vmem [shape: f32[64,16], index: 0, kind: input, shape index: {}]
  %s1 = inlined_call_operand.vmem [shape: f32[16,384], index: 1, kind: input, shape index: {}]
  %s2 = inlined_call_operand.vmem [shape: f32[128,384], index: 2, kind: input, shape index: {}]
  %s3 = inlined_call_operand.vmem [shape: f32[1,384], index: 3, kind: input, shape index: {}]
  %s4 = inlined_call_operand.vmem [shape: f32[1,128], index: 4, kind: input, shape index: {}]
  %s5 = inlined_call_operand.vmem [shape: f32[64,128], index: 5, kind: output, shape index: {0}]
  %s6 = inlined_call_operand.vmem [shape: f32[8,128], index: 6, kind: output, shape index: {1}]
  %7 = xla_tuple %s5, %s6
  %s8 = sld [smem:[#allocation0]]
  $region46: #{seq2seq_encoder_forward.2} parent=0
    _
  %s10 = ssub.s32 1, %s8
  %s11 = scalar_select 0, %s10, %s8
  // Predicated region
  $region2: #{seq2seq_encoder_forward.2} parent=0 // pred_check
    _
  $region3: #{seq2seq_encoder_forward.2} parent=0 // pred_check_branch
    %13 = sbr.rel (0) target = $region5
  $region4: #{seq2seq_encoder_forward.2} parent=0 // pred_region
    _
  $region5: #{seq2seq_encoder_forward.2} parent=0 // pred_fallthru
    _
  // Predicated region
  $region6: #{seq2seq_encoder_forward.2} parent=0 // pred_check
    _
  $region7: #{seq2seq_encoder_forward.2} parent=0 // pred_check_branch
    %15 = sbr.rel (0) target = $region9
  $region8: #{seq2seq_encoder_forward.2} parent=0 // pred_region
    _
  $region9: #{seq2seq_encoder_forward.2} parent=0 // pred_fallthru
    _
  // Predicated region
  $region10: #{seq2seq_encoder_forward.2} parent=0 // pred_check
    _
  $region11: #{seq2seq_encoder_forward.2} parent=0 // pred_check_branch
    %17 = sbr.rel (0) target = $region13
  $region12: #{seq2seq_encoder_forward.2} parent=0 // pred_region
    _
  $region13: #{seq2seq_encoder_forward.2} parent=0 // pred_fallthru
    _
  // Predicated region
  $region14: #{seq2seq_encoder_forward.2} parent=0 // pred_check
    _
  $region15: #{seq2seq_encoder_forward.2} parent=0 // pred_check_branch
    %19 = sbr.rel (0) target = $region17
  $region16: #{seq2seq_encoder_forward.2} parent=0 // pred_region
    _
  $region17: #{seq2seq_encoder_forward.2} parent=0 // pred_fallthru
    _
  // Predicated region
  $region18: #{seq2seq_encoder_forward.2} parent=0 // pred_check
    _
  $region19: #{seq2seq_encoder_forward.2} parent=0 // pred_check_branch
    %21 = sbr.rel (0) target = $region21
  $region20: #{seq2seq_encoder_forward.2} parent=0 // pred_region
    _
  $region21: #{seq2seq_encoder_forward.2} parent=0 // pred_fallthru
    _
  %p22 = scmp.eq.s32.totalorder 0, 0
  // Predicated region
  $region22: #{seq2seq_encoder_forward.2} parent=0 // pred_check
    %p23 = pneg %p22
  $region23: #{seq2seq_encoder_forward.2} parent=0 // pred_check_branch
    %25 = sbr.rel (%p23) target = $region25
  $region24: #{seq2seq_encoder_forward.2} parent=0 // pred_region
    %26 = vst [vmem:[#allocation2] sm:$0xff] 0.0
  $region25: #{seq2seq_encoder_forward.2} parent=0 // pred_fallthru
    _
  %v27 = vld [vmem:[%s0] sm:$0xff]
  %v28 = vld [vmem:[%s0 + $0x8] sm:$0xff]
  %v29 = vld [vmem:[%s0 + $0x10] sm:$0xff]
  %v30 = vld [vmem:[%s0 + $0x18] sm:$0xff]
  %v31 = vld [vmem:[%s0 + $0x20] sm:$0xff]
  %v32 = vld [vmem:[%s0 + $0x28] sm:$0xff]
  %v33 = vld [vmem:[%s0 + $0x30] sm:$0xff]
  %v34 = vld [vmem:[%s0 + $0x38] sm:$0xff]
  %v35 = vld [vmem:[%s1] sm:$0xff]
  %v36 = vld [vmem:[%s1 + $0x8] sm:$0xff]
  %v37 = vld [vmem:[%s1 + $0x10] sm:$0xff]
  %v38 = vld [vmem:[%s1 + $0x18] sm:$0xff]
  %v39 = vld [vmem:[%s1 + $0x20] sm:$0xff]
  %v40 = vld [vmem:[%s1 + $0x28] sm:$0xff]
  %v41 = vld [vmem:[%s3] sm:$0x7]
  %v43 = vlaneseq
  %v44 = vshrl.u32 %v43, 7
  %v45 = vsub.s32 0, %v44
  %v46 = vrot.slane %v41, %v45
  %v47 = vlaneseq
  %v48 = vshrl.u32 %v47, 7
  %v49 = vsub.s32 1, %v48
  %v50 = vrot.slane %v41, %v49
  %v51 = vlaneseq
  %v52 = vshrl.u32 %v51, 7
  %v53 = vsub.s32 2, %v52
  %v54 = vrot.slane %v41, %v53
  %vm58 = vcmask 130048
  %v60 = vsel %vm58, %v27, 0
  %v63 = vsel %vm58, %v28, 0
  %v66 = vsel %vm58, %v29, 0
  %v69 = vsel %vm58, %v30, 0
  %v72 = vsel %vm58, %v31, 0
  %v75 = vsel %vm58, %v32, 0
  %v78 = vsel %vm58, %v33, 0
  %v81 = vsel %vm58, %v34, 0
  %83 = vmatprep.subr.mxu0 %v36
  %84 = vmatpush1.msra.mxu0 %v35
  %85 = vmatprep.subr.mxu0 %v39
  %86 = vmatpush1.msra.mxu0 %v38
  %87 = vmatprep.subr.mxu0 0.0
  %88 = vmatpush1.msra.mxu0 0.0
  %89 = vmatprep.subr.mxu0 0.0
  %90 = vmatpush1.msra.mxu0 0.0
  %91 = vmatprep.subr.mxu0 0.0
  %92 = vmatpush1.msra.mxu0 0.0
  %93 = vmatprep.subr.mxu0 0.0
  %94 = vmatpush1.msra.mxu0 0.0
  %95 = vmatprep.subr.mxu0 0.0
  %96 = vmatpush1.msra.mxu0 0.0
  %97 = vmatprep.subr.mxu0 0.0
  %98 = vmatpush1.msra.mxu0 0.0
  %99 = vmatprep.subr.mxu0 0.0
  %100 = vmatpush1.msra.mxu0 0.0
  %101 = vmatprep.subr.mxu0 0.0
  %102 = vmatpush1.msra.mxu0 0.0
  %103 = vmatprep.subr.mxu0 0.0
  %104 = vmatpush1.msra.mxu0 0.0
  %105 = vmatprep.subr.mxu0 0.0
  %106 = vmatpush1.msra.mxu0 0.0
  %107 = vmatprep.subr.mxu0 0.0
  %108 = vmatpush1.msra.mxu0 0.0
  %109 = vmatprep.subr.mxu0 0.0
  %110 = vmatpush1.msra.mxu0 0.0
  %111 = vmatprep.subr.mxu0 0.0
  %112 = vmatpush1.msra.mxu0 0.0
  %113 = vmatprep.subr.mxu0 0.0
  %114 = vmatpush1.msra.mxu0 0.0
  %115 = vmatprep.subr.mxu0 0.0
  %116 = vmatpush1.msra.mxu0 0.0
  %117 = vmatprep.subr.mxu0 0.0
  %118 = vmatpush1.msra.mxu0 0.0
  %119 = vmatprep.subr.mxu0 0.0
  %120 = vmatpush1.msra.mxu0 0.0
  %121 = vmatprep.subr.mxu0 0.0
  %122 = vmatpush1.msra.mxu0 0.0
  %123 = vmatprep.subr.mxu0 0.0
  %124 = vmatpush1.msra.mxu0 0.0
  %125 = vmatprep.subr.mxu0 0.0
  %126 = vmatpush1.msra.mxu0 0.0
  %127 = vmatprep.subr.mxu0 0.0
  %128 = vmatpush1.msra.mxu0 0.0
  %129 = vmatprep.subr.mxu0 0.0
  %130 = vmatpush1.msra.mxu0 0.0
  %131 = vmatprep.subr.mxu0 0.0
  %132 = vmatpush1.msra.mxu0 0.0
  %133 = vmatprep.subr.mxu0 0.0
  %134 = vmatpush1.msra.mxu0 0.0
  %135 = vmatprep.subr.mxu0 0.0
  %136 = vmatpush1.msra.mxu0 0.0
  %137 = vmatprep.subr.mxu0 0.0
  %138 = vmatpush1.msra.mxu0 0.0
  %139 = vmatprep.subr.mxu0 0.0
  %140 = vmatpush1.msra.mxu0 0.0
  %141 = vmatprep.subr.mxu0 0.0
  %142 = vmatpush1.msra.mxu0 0.0
  %143 = vmatprep.subr.mxu0 0.0
  %144 = vmatpush1.msra.mxu0 0.0
  %145 = vmatprep.subr.mxu0 0.0
  %146 = vmatpush1.msra.mxu0 0.0
  %147 = vmatprep.mubr.f32.mxu0 0.0
  %148 = vmatmul.mubr.f32.gmra.mrb[0].mxu0 %v60
  %v149 = vpop.f32.mrb[0].mxu0
  %v150 = vadd.f32 %v46, %v149
  %v151 = vpop.f32.mrb[0].mxu0
  %v152 = vadd.f32 %v50, %v151
  %153 = vmatprep.mubr.f32.mxu0 0.0
  %154 = vmatmul.mubr.f32.gmra.mrb[0].mxu0 %v63
  %v155 = vpop.f32.mrb[0].mxu0
  %v156 = vadd.f32 %v46, %v155
  %v157 = vpop.f32.mrb[0].mxu0
  %v158 = vadd.f32 %v50, %v157
  %159 = vmatprep.mubr.f32.mxu0 0.0
  %160 = vmatmul.mubr.f32.gmra.mrb[0].mxu0 %v66
  %v161 = vpop.f32.mrb[0].mxu0
  %v162 = vadd.f32 %v46, %v161
  %v163 = vpop.f32.mrb[0].mxu0
  %v164 = vadd.f32 %v50, %v163
  %165 = vmatprep.mubr.f32.mxu0 0.0
  %166 = vmatmul.mubr.f32.gmra.mrb[0].mxu0 %v69
  %v167 = vpop.f32.mrb[0].mxu0
  %v168 = vadd.f32 %v46, %v167
  %v169 = vpop.f32.mrb[0].mxu0
  %v170 = vadd.f32 %v50, %v169
  %171 = vmatprep.mubr.f32.mxu0 0.0
  %172 = vmatmul.mubr.f32.gmra.mrb[0].mxu0 %v72
  %v173 = vpop.f32.mrb[0].mxu0
  %v174 = vadd.f32 %v46, %v173
  %v175 = vpop.f32.mrb[0].mxu0
  %v176 = vadd.f32 %v50, %v175
  %177 = vmatprep.mubr.f32.mxu0 0.0
  %178 = vmatmul.mubr.f32.gmra.mrb[0].mxu0 %v75
  %v179 = vpop.f32.mrb[0].mxu0
  %v180 = vadd.f32 %v46, %v179
  %v181 = vpop.f32.mrb[0].mxu0
  %v182 = vadd.f32 %v50, %v181
  %183 = vmatprep.mubr.f32.mxu0 0.0
  %184 = vmatmul.mubr.f32.gmra.mrb[0].mxu0 %v78
  %v185 = vpop.f32.mrb[0].mxu0
  %v186 = vadd.f32 %v46, %v185
  %v187 = vpop.f32.mrb[0].mxu0
  %v188 = vadd.f32 %v50, %v187
  %189 = vmatprep.mubr.f32.mxu0 0.0
  %190 = vmatmul.mubr.f32.gmra.mrb[0].mxu0 %v81
  %v191 = vpop.f32.mrb[0].mxu0
  %v192 = vadd.f32 %v46, %v191
  %v193 = vpop.f32.mrb[0].mxu0
  %v194 = vadd.f32 %v50, %v193
  %195 = vdwg.mxu0
  %196 = vmatprep.subr.mxu0 0.0
  %197 = vmatpush1.msra.mxu0 %v37
  %198 = vmatprep.subr.mxu0 0.0
  %199 = vmatpush1.msra.mxu0 %v40
  %200 = vmatprep.subr.mxu0 0.0
  %201 = vmatpush1.msra.mxu0 0.0
  %202 = vmatprep.subr.mxu0 0.0
  %203 = vmatpush1.msra.mxu0 0.0
  %204 = vmatprep.subr.mxu0 0.0
  %205 = vmatpush1.msra.mxu0 0.0
  %206 = vmatprep.subr.mxu0 0.0
  %207 = vmatpush1.msra.mxu0 0.0
  %208 = vmatprep.subr.mxu0 0.0
  %209 = vmatpush1.msra.mxu0 0.0
  %210 = vmatprep.subr.mxu0 0.0
  %211 = vmatpush1.msra.mxu0 0.0
  %212 = vmatprep.subr.mxu0 0.0
  %213 = vmatpush1.msra.mxu0 0.0
  %214 = vmatprep.subr.mxu0 0.0
  %215 = vmatpush1.msra.mxu0 0.0
  %216 = vmatprep.subr.mxu0 0.0
  %217 = vmatpush1.msra.mxu0 0.0
  %218 = vmatprep.subr.mxu0 0.0
  %219 = vmatpush1.msra.mxu0 0.0
  %220 = vmatprep.subr.mxu0 0.0
  %221 = vmatpush1.msra.mxu0 0.0
  %222 = vmatprep.subr.mxu0 0.0
  %223 = vmatpush1.msra.mxu0 0.0
  %224 = vmatprep.subr.mxu0 0.0
  %225 = vmatpush1.msra.mxu0 0.0
  %226 = vmatprep.subr.mxu0 0.0
  %227 = vmatpush1.msra.mxu0 0.0
  %228 = vmatprep.subr.mxu0 0.0
  %229 = vmatpush1.msra.mxu0 0.0
  %230 = vmatprep.subr.mxu0 0.0
  %231 = vmatpush1.msra.mxu0 0.0
  %232 = vmatprep.subr.mxu0 0.0
  %233 = vmatpush1.msra.mxu0 0.0
  %234 = vmatprep.subr.mxu0 0.0
  %235 = vmatpush1.msra.mxu0 0.0
  %236 = vmatprep.subr.mxu0 0.0
  %237 = vmatpush1.msra.mxu0 0.0
  %238 = vmatprep.subr.mxu0 0.0
  %239 = vmatpush1.msra.mxu0 0.0
  %240 = vmatprep.subr.mxu0 0.0
  %241 = vmatpush1.msra.mxu0 0.0
  %242 = vmatprep.subr.mxu0 0.0
  %243 = vmatpush1.msra.mxu0 0.0
  %244 = vmatprep.subr.mxu0 0.0
  %245 = vmatpush1.msra.mxu0 0.0
  %246 = vmatprep.subr.mxu0 0.0
  %247 = vmatpush1.msra.mxu0 0.0
  %248 = vmatprep.subr.mxu0 0.0
  %249 = vmatpush1.msra.mxu0 0.0
  %250 = vmatprep.subr.mxu0 0.0
  %251 = vmatpush1.msra.mxu0 0.0
  %252 = vmatprep.subr.mxu0 0.0
  %253 = vmatpush1.msra.mxu0 0.0
  %254 = vmatprep.subr.mxu0 0.0
  %255 = vmatpush1.msra.mxu0 0.0
  %256 = vmatprep.subr.mxu0 0.0
  %257 = vmatpush1.msra.mxu0 0.0
  %258 = vmatprep.subr.mxu0 0.0
  %259 = vmatpush1.msra.mxu0 0.0
  %260 = vmatprep.mubr.f32.mxu0 0.0
  %261 = vmatmul.mubr.f32.gmra.mrb[0].mxu0 %v60
  %v262 = vpop.f32.mrb[0].mxu0
  %v263 = vadd.f32 %v54, %v262
  %v264 = vpop.f32.mrb[0].mxu0
  %265 = vmatprep.mubr.f32.mxu0 0.0
  %266 = vmatmul.mubr.f32.gmra.mrb[0].mxu0 %v63
  %v267 = vpop.f32.mrb[0].mxu0
  %v268 = vadd.f32 %v54, %v267
  %v269 = vpop.f32.mrb[0].mxu0
  %270 = vmatprep.mubr.f32.mxu0 0.0
  %271 = vmatmul.mubr.f32.gmra.mrb[0].mxu0 %v66
  %v272 = vpop.f32.mrb[0].mxu0
  %v273 = vadd.f32 %v54, %v272
  %v274 = vpop.f32.mrb[0].mxu0
  %275 = vmatprep.mubr.f32.mxu0 0.0
  %276 = vmatmul.mubr.f32.gmra.mrb[0].mxu0 %v69
  %v277 = vpop.f32.mrb[0].mxu0
  %v278 = vadd.f32 %v54, %v277
  %v279 = vpop.f32.mrb[0].mxu0
  %280 = vmatprep.mubr.f32.mxu0 0.0
  %281 = vmatmul.mubr.f32.gmra.mrb[0].mxu0 %v72
  %v282 = vpop.f32.mrb[0].mxu0
  %v283 = vadd.f32 %v54, %v282
  %v284 = vpop.f32.mrb[0].mxu0
  %285 = vmatprep.mubr.f32.mxu0 0.0
  %286 = vmatmul.mubr.f32.gmra.mrb[0].mxu0 %v75
  %v287 = vpop.f32.mrb[0].mxu0
  %v288 = vadd.f32 %v54, %v287
  %v289 = vpop.f32.mrb[0].mxu0
  %290 = vmatprep.mubr.f32.mxu0 0.0
  %291 = vmatmul.mubr.f32.gmra.mrb[0].mxu0 %v78
  %v292 = vpop.f32.mrb[0].mxu0
  %v293 = vadd.f32 %v54, %v292
  %v294 = vpop.f32.mrb[0].mxu0
  %295 = vmatprep.mubr.f32.mxu0 0.0
  %296 = vmatmul.mubr.f32.gmra.mrb[0].mxu0 %v81
  %v297 = vpop.f32.mrb[0].mxu0
  %v298 = vadd.f32 %v54, %v297
  %v299 = vpop.f32.mrb[0].mxu0
  %300 = vdwg.mxu0
  %301 = vst [vmem:[#allocation3] sm:$0xff] %v150
  %302 = vst [vmem:[#allocation3 + $0x8] sm:$0xff] %v152
  %303 = vst [vmem:[#allocation3 + $0x10] sm:$0xff] %v263
  %304 = vst [vmem:[#allocation3 + $0x18] sm:$0xff] %v156
  %305 = vst [vmem:[#allocation3 + $0x20] sm:$0xff] %v158
  %306 = vst [vmem:[#allocation3 + $0x28] sm:$0xff] %v268
  %307 = vst [vmem:[#allocation3 + $0x30] sm:$0xff] %v162
  %308 = vst [vmem:[#allocation3 + $0x38] sm:$0xff] %v164
  %309 = vst [vmem:[#allocation3 + $0x40] sm:$0xff] %v273
  %310 = vst [vmem:[#allocation3 + $0x48] sm:$0xff] %v168
  %311 = vst [vmem:[#allocation3 + $0x50] sm:$0xff] %v170
  %312 = vst [vmem:[#allocation3 + $0x58] sm:$0xff] %v278
  %313 = vst [vmem:[#allocation3 + $0x60] sm:$0xff] %v174
  %314 = vst [vmem:[#allocation3 + $0x68] sm:$0xff] %v176
  %315 = vst [vmem:[#allocation3 + $0x70] sm:$0xff] %v283
  %316 = vst [vmem:[#allocation3 + $0x78] sm:$0xff] %v180
  %317 = vst [vmem:[#allocation3 + $0x80] sm:$0xff] %v182
  %318 = vst [vmem:[#allocation3 + $0x88] sm:$0xff] %v288
  %319 = vst [vmem:[#allocation3 + $0x90] sm:$0xff] %v186
  %320 = vst [vmem:[#allocation3 + $0x98] sm:$0xff] %v188
  %321 = vst [vmem:[#allocation3 + $0xa0] sm:$0xff] %v293
  %322 = vst [vmem:[#allocation3 + $0xa8] sm:$0xff] %v192
  %323 = vst [vmem:[#allocation3 + $0xb0] sm:$0xff] %v194
  %324 = vst [vmem:[#allocation3 + $0xb8] sm:$0xff] %v298
  %v325 = vld [vmem:[%s2] sm:$0xff]
  %v326 = vld [vmem:[%s2 + $0x8] sm:$0xff]
  %v327 = vld [vmem:[%s2 + $0x10] sm:$0xff]
  %v328 = vld [vmem:[%s2 + $0x18] sm:$0xff]
  %v329 = vld [vmem:[%s2 + $0x20] sm:$0xff]
  %v330 = vld [vmem:[%s2 + $0x28] sm:$0xff]
  %v331 = vld [vmem:[%s2 + $0x30] sm:$0xff]
  %v332 = vld [vmem:[%s2 + $0x38] sm:$0xff]
  %v333 = vld [vmem:[%s2 + $0x40] sm:$0xff]
  %v334 = vld [vmem:[%s2 + $0x48] sm:$0xff]
  %v335 = vld [vmem:[%s2 + $0x50] sm:$0xff]
  %v336 = vld [vmem:[%s2 + $0x58] sm:$0xff]
  %v337 = vld [vmem:[%s2 + $0x60] sm:$0xff]
  %v338 = vld [vmem:[%s2 + $0x68] sm:$0xff]
  %v339 = vld [vmem:[%s2 + $0x70] sm:$0xff]
  %v340 = vld [vmem:[%s2 + $0x78] sm:$0xff]
  %v341 = vld [vmem:[%s2 + $0x80] sm:$0xff]
  %v342 = vld [vmem:[%s2 + $0x88] sm:$0xff]
  %v343 = vld [vmem:[%s2 + $0x90] sm:$0xff]
  %v344 = vld [vmem:[%s2 + $0x98] sm:$0xff]
  %v345 = vld [vmem:[%s2 + $0xa0] sm:$0xff]
  %v346 = vld [vmem:[%s2 + $0xa8] sm:$0xff]
  %v347 = vld [vmem:[%s2 + $0xb0] sm:$0xff]
  %v348 = vld [vmem:[%s2 + $0xb8] sm:$0xff]
  %v349 = vld [vmem:[%s2 + $0xc0] sm:$0xff]
  %v350 = vld [vmem:[%s2 + $0xc8] sm:$0xff]
  %v351 = vld [vmem:[%s2 + $0xd0] sm:$0xff]
  %v352 = vld [vmem:[%s2 + $0xd8] sm:$0xff]
  %v353 = vld [vmem:[%s2 + $0xe0] sm:$0xff]
  %v354 = vld [vmem:[%s2 + $0xe8] sm:$0xff]
  %v355 = vld [vmem:[%s2 + $0xf0] sm:$0xff]
  %v356 = vld [vmem:[%s2 + $0xf8] sm:$0xff]
  %v357 = vld [vmem:[%s2 + $0x100] sm:$0xff]
  %v358 = vld [vmem:[%s2 + $0x108] sm:$0xff]
  %v359 = vld [vmem:[%s2 + $0x110] sm:$0xff]
  %v360 = vld [vmem:[%s2 + $0x118] sm:$0xff]
  %v361 = vld [vmem:[%s2 + $0x120] sm:$0xff]
  %v362 = vld [vmem:[%s2 + $0x128] sm:$0xff]
  %v363 = vld [vmem:[%s2 + $0x130] sm:$0xff]
  %v364 = vld [vmem:[%s2 + $0x138] sm:$0xff]
  %v365 = vld [vmem:[%s2 + $0x140] sm:$0xff]
  %v366 = vld [vmem:[%s2 + $0x148] sm:$0xff]
  %v367 = vld [vmem:[%s2 + $0x150] sm:$0xff]
  %v368 = vld [vmem:[%s2 + $0x158] sm:$0xff]
  %v369 = vld [vmem:[%s2 + $0x160] sm:$0xff]
  %v370 = vld [vmem:[%s2 + $0x168] sm:$0xff]
  %v371 = vld [vmem:[%s2 + $0x170] sm:$0xff]
  %v372 = vld [vmem:[%s2 + $0x178] sm:$0xff]
  %v373 = vld [vmem:[%s4] sm:$0x1]
  %v375 = vlaneseq
  %v376 = vshrl.u32 %v375, 7
  %v377 = vsub.s32 0, %v376
  %v378 = vrot.slane %v373, %v377
  %v380 = vld [vmem:[#allocation2] sm:$0xff]
  %s381 = smul.u32 0, 3
  %s382 = smul.addr %s381, 8
  %s383 = scalar_lea.vmem [#allocation3], %s382
  %v384 = vld [vmem:[%s383] sm:$0xff]
  %v385 = vld [vmem:[%s383 + $0x8] sm:$0xff]
  %v386 = vld [vmem:[%s383 + $0x10] sm:$0xff]
  %387 = vmatprep.subr.mxu0 %v326
  %388 = vmatpush1.msra.mxu0 %v325
  %389 = vmatprep.subr.mxu0 %v329
  %390 = vmatpush1.msra.mxu0 %v328
  %391 = vmatprep.subr.mxu0 %v332
  %392 = vmatpush1.msra.mxu0 %v331
  %393 = vmatprep.subr.mxu0 %v335
  %394 = vmatpush1.msra.mxu0 %v334
  %395 = vmatprep.subr.mxu0 %v338
  %396 = vmatpush1.msra.mxu0 %v337
  %397 = vmatprep.subr.mxu0 %v341
  %398 = vmatpush1.msra.mxu0 %v340
  %399 = vmatprep.subr.mxu0 %v344
  %400 = vmatpush1.msra.mxu0 %v343
  %401 = vmatprep.subr.mxu0 %v347
  %402 = vmatpush1.msra.mxu0 %v346
  %403 = vmatprep.subr.mxu0 %v350
  %404 = vmatpush1.msra.mxu0 %v349
  %405 = vmatprep.subr.mxu0 %v353
  %406 = vmatpush1.msra.mxu0 %v352
  %407 = vmatprep.subr.mxu0 %v356
  %408 = vmatpush1.msra.mxu0 %v355
  %409 = vmatprep.subr.mxu0 %v359
  %410 = vmatpush1.msra.mxu0 %v358
  %411 = vmatprep.subr.mxu0 %v362
  %412 = vmatpush1.msra.mxu0 %v361
  %413 = vmatprep.subr.mxu0 %v365
  %414 = vmatpush1.msra.mxu0 %v364
  %415 = vmatprep.subr.mxu0 %v368
  %416 = vmatpush1.msra.mxu0 %v367
  %417 = vmatprep.subr.mxu0 %v371
  %418 = vmatpush1.msra.mxu0 %v370
  %419 = vmatprep.subr.mxu0 0.0
  %420 = vmatpush1.msra.mxu0 0.0
  %421 = vmatprep.subr.mxu0 0.0
  %422 = vmatpush1.msra.mxu0 0.0
  %423 = vmatprep.subr.mxu0 0.0
  %424 = vmatpush1.msra.mxu0 0.0
  %425 = vmatprep.subr.mxu0 0.0
  %426 = vmatpush1.msra.mxu0 0.0
  %427 = vmatprep.subr.mxu0 0.0
  %428 = vmatpush1.msra.mxu0 0.0
  %429 = vmatprep.subr.mxu0 0.0
  %430 = vmatpush1.msra.mxu0 0.0
  %431 = vmatprep.subr.mxu0 0.0
  %432 = vmatpush1.msra.mxu0 0.0
  %433 = vmatprep.subr.mxu0 0.0
  %434 = vmatpush1.msra.mxu0 0.0
  %435 = vmatprep.subr.mxu0 0.0
  %436 = vmatpush1.msra.mxu0 0.0
  %437 = vmatprep.subr.mxu0 0.0
  %438 = vmatpush1.msra.mxu0 0.0
  %439 = vmatprep.subr.mxu0 0.0
  %440 = vmatpush1.msra.mxu0 0.0
  %441 = vmatprep.subr.mxu0 0.0
  %442 = vmatpush1.msra.mxu0 0.0
  %443 = vmatprep.subr.mxu0 0.0
  %444 = vmatpush1.msra.mxu0 0.0
  %445 = vmatprep.subr.mxu0 0.0
  %446 = vmatpush1.msra.mxu0 0.0
  %447 = vmatprep.subr.mxu0 0.0
  %448 = vmatpush1.msra.mxu0 0.0
  %449 = vmatprep.subr.mxu0 0.0
  %450 = vmatpush1.msra.mxu0 0.0
  %451 = vmatprep.mubr.f32.mxu0 0.0
  %452 = vmatmul.mubr.f32.gmra.mrb[0].mxu0 %v380
  %v453 = vpop.f32.mrb[0].mxu0
  %v454 = vadd.f32 0.0, %v453
  %v455 = vpop.f32.mrb[0].mxu0
  %v456 = vadd.f32 0.0, %v455
  %457 = vdwg.mxu0
  %458 = vmatprep.subr.mxu0 0.0
  %459 = vmatpush1.msra.mxu0 %v327
  %460 = vmatprep.subr.mxu0 0.0
  %461 = vmatpush1.msra.mxu0 %v330
  %462 = vmatprep.subr.mxu0 0.0
  %463 = vmatpush1.msra.mxu0 %v333
  %464 = vmatprep.subr.mxu0 0.0
  %465 = vmatpush1.msra.mxu0 %v336
  %466 = vmatprep.subr.mxu0 0.0
  %467 = vmatpush1.msra.mxu0 %v339
  %468 = vmatprep.subr.mxu0 0.0
  %469 = vmatpush1.msra.mxu0 %v342
  %470 = vmatprep.subr.mxu0 0.0
  %471 = vmatpush1.msra.mxu0 %v345
  %472 = vmatprep.subr.mxu0 0.0
  %473 = vmatpush1.msra.mxu0 %v348
  %474 = vmatprep.subr.mxu0 0.0
  %475 = vmatpush1.msra.mxu0 %v351
  %476 = vmatprep.subr.mxu0 0.0
  %477 = vmatpush1.msra.mxu0 %v354
  %478 = vmatprep.subr.mxu0 0.0
  %479 = vmatpush1.msra.mxu0 %v357
  %480 = vmatprep.subr.mxu0 0.0
  %481 = vmatpush1.msra.mxu0 %v360
  %482 = vmatprep.subr.mxu0 0.0
  %483 = vmatpush1.msra.mxu0 %v363
  %484 = vmatprep.subr.mxu0 0.0
  %485 = vmatpush1.msra.mxu0 %v366
  %486 = vmatprep.subr.mxu0 0.0
  %487 = vmatpush1.msra.mxu0 %v369
  %488 = vmatprep.subr.mxu0 0.0
  %489 = vmatpush1.msra.mxu0 %v372
  %490 = vmatprep.subr.mxu0 0.0
  %491 = vmatpush1.msra.mxu0 0.0
  %492 = vmatprep.subr.mxu0 0.0
  %493 = vmatpush1.msra.mxu0 0.0
  %494 = vmatprep.subr.mxu0 0.0
  %495 = vmatpush1.msra.mxu0 0.0
  %496 = vmatprep.subr.mxu0 0.0
  %497 = vmatpush1.msra.mxu0 0.0
  %498 = vmatprep.subr.mxu0 0.0
  %499 = vmatpush1.msra.mxu0 0.0
  %500 = vmatprep.subr.mxu0 0.0
  %501 = vmatpush1.msra.mxu0 0.0
  %502 = vmatprep.subr.mxu0 0.0
  %503 = vmatpush1.msra.mxu0 0.0
  %504 = vmatprep.subr.mxu0 0.0
  %505 = vmatpush1.msra.mxu0 0.0
  %506 = vmatprep.subr.mxu0 0.0
  %507 = vmatpush1.msra.mxu0 0.0
  %508 = vmatprep.subr.mxu0 0.0
  %509 = vmatpush1.msra.mxu0 0.0
  %510 = vmatprep.subr.mxu0 0.0
  %511 = vmatpush1.msra.mxu0 0.0
  %512 = vmatprep.subr.mxu0 0.0
  %513 = vmatpush1.msra.mxu0 0.0
  %514 = vmatprep.subr.mxu0 0.0
  %515 = vmatpush1.msra.mxu0 0.0
  %516 = vmatprep.subr.mxu0 0.0
  %517 = vmatpush1.msra.mxu0 0.0
  %518 = vmatprep.subr.mxu0 0.0
  %519 = vmatpush1.msra.mxu0 0.0
  %520 = vmatprep.subr.mxu0 0.0
  %521 = vmatpush1.msra.mxu0 0.0
  %522 = vmatprep.mubr.f32.mxu0 0.0
  %523 = vmatmul.mubr.f32.gmra.mrb[0].mxu0 %v380
  %v524 = vpop.f32.mrb[0].mxu0
  %v525 = vadd.f32 0.0, %v524
  %v526 = vpop.f32.mrb[0].mxu0
  %527 = vdwg.mxu0
  %v528 = vadd.f32 %v384, %v454
  %v529 = vmul.f32 %v528, 0.5
  %v530 = vtanh.pop %v529
  %v531 = vmul.f32 %v530, 0.5
  %v532 = vadd.f32 %v531, 0.5
  %v533 = vadd.f32 %v385, %v456
  %v534 = vmul.f32 %v533, 0.5
  %v535 = vtanh.pop %v534
  %v536 = vmul.f32 %v535, 0.5
  %v537 = vadd.f32 %v536, 0.5
  %v538 = vadd.f32 %v525, %v378
  %v539 = vmul.f32 %v532, %v538
  %v540 = vadd.f32 %v386, %v539
  %v541 = vtanh.pop %v540
  %v542 = vsub.f32 %v380, %v541
  %v543 = vmul.f32 %v537, %v542
  %v544 = vadd.f32 %v541, %v543
  %545 = vst [vmem:[%s5] sm:$0xff] %v544
  %s546 = smul.u32 1, 3
  %s547 = smul.addr %s546, 8
  %s548 = scalar_lea.vmem [#allocation3], %s547
  %v549 = vld [vmem:[%s548] sm:$0xff]
  %v550 = vld [vmem:[%s548 + $0x8] sm:$0xff]
  %v551 = vld [vmem:[%s548 + $0x10] sm:$0xff]
  %552 = vmatprep.subr.mxu0 %v326
  %553 = vmatpush1.msra.mxu0 %v325
  %554 = vmatprep.subr.mxu0 %v329
  %555 = vmatpush1.msra.mxu0 %v328
  %556 = vmatprep.subr.mxu0 %v332
  %557 = vmatpush1.msra.mxu0 %v331
  %558 = vmatprep.subr.mxu0 %v335
  %559 = vmatpush1.msra.mxu0 %v334
  %560 = vmatprep.subr.mxu0 %v338
  %561 = vmatpush1.msra.mxu0 %v337
  %562 = vmatprep.subr.mxu0 %v341
  %563 = vmatpush1.msra.mxu0 %v340
  %564 = vmatprep.subr.mxu0 %v344
  %565 = vmatpush1.msra.mxu0 %v343
  %566 = vmatprep.subr.mxu0 %v347
  %567 = vmatpush1.msra.mxu0 %v346
  %568 = vmatprep.subr.mxu0 %v350
  %569 = vmatpush1.msra.mxu0 %v349
  %570 = vmatprep.subr.mxu0 %v353
  %571 = vmatpush1.msra.mxu0 %v352
  %572 = vmatprep.subr.mxu0 %v356
  %573 = vmatpush1.msra.mxu0 %v355
  %574 = vmatprep.subr.mxu0 %v359
  %575 = vmatpush1.msra.mxu0 %v358
  %576 = vmatprep.subr.mxu0 %v362
  %577 = vmatpush1.msra.mxu0 %v361
  %578 = vmatprep.subr.mxu0 %v365
  %579 = vmatpush1.msra.mxu0 %v364
  %580 = vmatprep.subr.mxu0 %v368
  %581 = vmatpush1.msra.mxu0 %v367
  %582 = vmatprep.subr.mxu0 %v371
  %583 = vmatpush1.msra.mxu0 %v370
  %584 = vmatprep.subr.mxu0 0.0
  %585 = vmatpush1.msra.mxu0 0.0
  %586 = vmatprep.subr.mxu0 0.0
  %587 = vmatpush1.msra.mxu0 0.0
  %588 = vmatprep.subr.mxu0 0.0
  %589 = vmatpush1.msra.mxu0 0.0
  %590 = vmatprep.subr.mxu0 0.0
  %591 = vmatpush1.msra.mxu0 0.0
  %592 = vmatprep.subr.mxu0 0.0
  %593 = vmatpush1.msra.mxu0 0.0
  %594 = vmatprep.subr.mxu0 0.0
  %595 = vmatpush1.msra.mxu0 0.0
  %596 = vmatprep.subr.mxu0 0.0
  %597 = vmatpush1.msra.mxu0 0.0
  %598 = vmatprep.subr.mxu0 0.0
  %599 = vmatpush1.msra.mxu0 0.0
  %600 = vmatprep.subr.mxu0 0.0
  %601 = vmatpush1.msra.mxu0 0.0
  %602 = vmatprep.subr.mxu0 0.0
  %603 = vmatpush1.msra.mxu0 0.0
  %604 = vmatprep.subr.mxu0 0.0
  %605 = vmatpush1.msra.mxu0 0.0
  %606 = vmatprep.subr.mxu0 0.0
  %607 = vmatpush1.msra.mxu0 0.0
  %608 = vmatprep.subr.mxu0 0.0
  %609 = vmatpush1.msra.mxu0 0.0
  %610 = vmatprep.subr.mxu0 0.0
  %611 = vmatpush1.msra.mxu0 0.0
  %612 = vmatprep.subr.mxu0 0.0
  %613 = vmatpush1.msra.mxu0 0.0
  %614 = vmatprep.subr.mxu0 0.0
  %615 = vmatpush1.msra.mxu0 0.0
  %616 = vmatprep.mubr.f32.mxu0 0.0
  %617 = vmatmul.mubr.f32.gmra.mrb[0].mxu0 %v544
  %v618 = vpop.f32.mrb[0].mxu0
  %v619 = vadd.f32 0.0, %v618
  %v620 = vpop.f32.mrb[0].mxu0
  %v621 = vadd.f32 0.0, %v620
  %622 = vdwg.mxu0
  %623 = vmatprep.subr.mxu0 0.0
  %624 = vmatpush1.msra.mxu0 %v327
  %625 = vmatprep.subr.mxu0 0.0
  %626 = vmatpush1.msra.mxu0 %v330
  %627 = vmatprep.subr.mxu0 0.0
  %628 = vmatpush1.msra.mxu0 %v333
  %629 = vmatprep.subr.mxu0 0.0
  %630 = vmatpush1.msra.mxu0 %v336
  %631 = vmatprep.subr.mxu0 0.0
  %632 = vmatpush1.msra.mxu0 %v339
  %633 = vmatprep.subr.mxu0 0.0
  %634 = vmatpush1.msra.mxu0 %v342
  %635 = vmatprep.subr.mxu0 0.0
  %636 = vmatpush1.msra.mxu0 %v345
  %637 = vmatprep.subr.mxu0 0.0
  %638 = vmatpush1.msra.mxu0 %v348
  %639 = vmatprep.subr.mxu0 0.0
  %640 = vmatpush1.msra.mxu0 %v351
  %641 = vmatprep.subr.mxu0 0.0
  %642 = vmatpush1.msra.mxu0 %v354
  %643 = vmatprep.subr.mxu0 0.0
  %644 = vmatpush1.msra.mxu0 %v357
  %645 = vmatprep.subr.mxu0 0.0
  %646 = vmatpush1.msra.mxu0 %v360
  %647 = vmatprep.subr.mxu0 0.0
  %648 = vmatpush1.msra.mxu0 %v363
  %649 = vmatprep.subr.mxu0 0.0
  %650 = vmatpush1.msra.mxu0 %v366
  %651 = vmatprep.subr.mxu0 0.0
  %652 = vmatpush1.msra.mxu0 %v369
  %653 = vmatprep.subr.mxu0 0.0
  %654 = vmatpush1.msra.mxu0 %v372
  %655 = vmatprep.subr.mxu0 0.0
  %656 = vmatpush1.msra.mxu0 0.0
  %657 = vmatprep.subr.mxu0 0.0
  %658 = vmatpush1.msra.mxu0 0.0
  %659 = vmatprep.subr.mxu0 0.0
  %660 = vmatpush1.msra.mxu0 0.0
  %661 = vmatprep.subr.mxu0 0.0
  %662 = vmatpush1.msra.mxu0 0.0
  %663 = vmatprep.subr.mxu0 0.0
  %664 = vmatpush1.msra.mxu0 0.0
  %665 = vmatprep.subr.mxu0 0.0
  %666 = vmatpush1.msra.mxu0 0.0
  %667 = vmatprep.subr.mxu0 0.0
  %668 = vmatpush1.msra.mxu0 0.0
  %669 = vmatprep.subr.mxu0 0.0
  %670 = vmatpush1.msra.mxu0 0.0
  %671 = vmatprep.subr.mxu0 0.0
  %672 = vmatpush1.msra.mxu0 0.0
  %673 = vmatprep.subr.mxu0 0.0
  %674 = vmatpush1.msra.mxu0 0.0
  %675 = vmatprep.subr.mxu0 0.0
  %676 = vmatpush1.msra.mxu0 0.0
  %677 = vmatprep.subr.mxu0 0.0
  %678 = vmatpush1.msra.mxu0 0.0
  %679 = vmatprep.subr.mxu0 0.0
  %680 = vmatpush1.msra.mxu0 0.0
  %681 = vmatprep.subr.mxu0 0.0
  %682 = vmatpush1.msra.mxu0 0.0
  %683 = vmatprep.subr.mxu0 0.0
  %684 = vmatpush1.msra.mxu0 0.0
  %685 = vmatprep.subr.mxu0 0.0
  %686 = vmatpush1.msra.mxu0 0.0
  %687 = vmatprep.mubr.f32.mxu0 0.0
  %688 = vmatmul.mubr.f32.gmra.mrb[0].mxu0 %v544
  %v689 = vpop.f32.mrb[0].mxu0
  %v690 = vadd.f32 0.0, %v689
  %v691 = vpop.f32.mrb[0].mxu0
  %692 = vdwg.mxu0
  %v693 = vadd.f32 %v549, %v619
  %v694 = vmul.f32 %v693, 0.5
  %v695 = vtanh.pop %v694
  %v696 = vmul.f32 %v695, 0.5
  %v697 = vadd.f32 %v696, 0.5
  %v698 = vadd.f32 %v550, %v621
  %v699 = vmul.f32 %v698, 0.5
  %v700 = vtanh.pop %v699
  %v701 = vmul.f32 %v700, 0.5
  %v702 = vadd.f32 %v701, 0.5
  %v703 = vadd.f32 %v690, %v378
  %v704 = vmul.f32 %v697, %v703
  %v705 = vadd.f32 %v551, %v704
  %v706 = vtanh.pop %v705
  %v707 = vsub.f32 %v544, %v706
  %v708 = vmul.f32 %v702, %v707
  %v709 = vadd.f32 %v706, %v708
  %s710 = scalar_lea.vmem %s5, 8
  %711 = vst [vmem:[%s710] sm:$0xff] %v709
  %s712 = smul.u32 2, 3
  %s713 = smul.addr %s712, 8
  %s714 = scalar_lea.vmem [#allocation3], %s713
  %v715 = vld [vmem:[%s714] sm:$0xff]
  %v716 = vld [vmem:[%s714 + $0x8] sm:$0xff]
  %v717 = vld [vmem:[%s714 + $0x10] sm:$0xff]
  %718 = vmatprep.subr.mxu0 %v326
  %719 = vmatpush1.msra.mxu0 %v325
  %720 = vmatprep.subr.mxu0 %v329
  %721 = vmatpush1.msra.mxu0 %v328
  %722 = vmatprep.subr.mxu0 %v332
  %723 = vmatpush1.msra.mxu0 %v331
  %724 = vmatprep.subr.mxu0 %v335
  %725 = vmatpush1.msra.mxu0 %v334
  %726 = vmatprep.subr.mxu0 %v338
  %727 = vmatpush1.msra.mxu0 %v337
  %728 = vmatprep.subr.mxu0 %v341
  %729 = vmatpush1.msra.mxu0 %v340
  %730 = vmatprep.subr.mxu0 %v344
  %731 = vmatpush1.msra.mxu0 %v343
  %732 = vmatprep.subr.mxu0 %v347
  %733 = vmatpush1.msra.mxu0 %v346
  %734 = vmatprep.subr.mxu0 %v350
  %735 = vmatpush1.msra.mxu0 %v349
  %736 = vmatprep.subr.mxu0 %v353
  %737 = vmatpush1.msra.mxu0 %v352
  %738 = vmatprep.subr.mxu0 %v356
  %739 = vmatpush1.msra.mxu0 %v355
  %740 = vmatprep.subr.mxu0 %v359
  %741 = vmatpush1.msra.mxu0 %v358
  %742 = vmatprep.subr.mxu0 %v362
  %743 = vmatpush1.msra.mxu0 %v361
  %744 = vmatprep.subr.mxu0 %v365
  %745 = vmatpush1.msra.mxu0 %v364
  %746 = vmatprep.subr.mxu0 %v368
  %747 = vmatpush1.msra.mxu0 %v367
  %748 = vmatprep.subr.mxu0 %v371
  %749 = vmatpush1.msra.mxu0 %v370
  %750 = vmatprep.subr.mxu0 0.0
  %751 = vmatpush1.msra.mxu0 0.0
  %752 = vmatprep.subr.mxu0 0.0
  %753 = vmatpush1.msra.mxu0 0.0
  %754 = vmatprep.subr.mxu0 0.0
  %755 = vmatpush1.msra.mxu0 0.0
  %756 = vmatprep.subr.mxu0 0.0
  %757 = vmatpush1.msra.mxu0 0.0
  %758 = vmatprep.subr.mxu0 0.0
  %759 = vmatpush1.msra.mxu0 0.0
  %760 = vmatprep.subr.mxu0 0.0
  %761 = vmatpush1.msra.mxu0 0.0
  %762 = vmatprep.subr.mxu0 0.0
  %763 = vmatpush1.msra.mxu0 0.0
  %764 = vmatprep.subr.mxu0 0.0
  %765 = vmatpush1.msra.mxu0 0.0
  %766 = vmatprep.subr.mxu0 0.0
  %767 = vmatpush1.msra.mxu0 0.0
  %768 = vmatprep.subr.mxu0 0.0
  %769 = vmatpush1.msra.mxu0 0.0
  %770 = vmatprep.subr.mxu0 0.0
  %771 = vmatpush1.msra.mxu0 0.0
  %772 = vmatprep.subr.mxu0 0.0
  %773 = vmatpush1.msra.mxu0 0.0
  %774 = vmatprep.subr.mxu0 0.0
  %775 = vmatpush1.msra.mxu0 0.0
  %776 = vmatprep.subr.mxu0 0.0
  %777 = vmatpush1.msra.mxu0 0.0
  %778 = vmatprep.subr.mxu0 0.0
  %779 = vmatpush1.msra.mxu0 0.0
  %780 = vmatprep.subr.mxu0 0.0
  %781 = vmatpush1.msra.mxu0 0.0
  %782 = vmatprep.mubr.f32.mxu0 0.0
  %783 = vmatmul.mubr.f32.gmra.mrb[0].mxu0 %v709
  %v784 = vpop.f32.mrb[0].mxu0
  %v785 = vadd.f32 0.0, %v784
  %v786 = vpop.f32.mrb[0].mxu0
  %v787 = vadd.f32 0.0, %v786
  %788 = vdwg.mxu0
  %789 = vmatprep.subr.mxu0 0.0
  %790 = vmatpush1.msra.mxu0 %v327
  %791 = vmatprep.subr.mxu0 0.0
  %792 = vmatpush1.msra.mxu0 %v330
  %793 = vmatprep.subr.mxu0 0.0
  %794 = vmatpush1.msra.mxu0 %v333
  %795 = vmatprep.subr.mxu0 0.0
  %796 = vmatpush1.msra.mxu0 %v336
  %797 = vmatprep.subr.mxu0 0.0
  %798 = vmatpush1.msra.mxu0 %v339
  %799 = vmatprep.subr.mxu0 0.0
  %800 = vmatpush1.msra.mxu0 %v342
  %801 = vmatprep.subr.mxu0 0.0
  %802 = vmatpush1.msra.mxu0 %v345
  %803 = vmatprep.subr.mxu0 0.0
  %804 = vmatpush1.msra.mxu0 %v348
  %805 = vmatprep.subr.mxu0 0.0
  %806 = vmatpush1.msra.mxu0 %v351
  %807 = vmatprep.subr.mxu0 0.0
  %808 = vmatpush1.msra.mxu0 %v354
  %809 = vmatprep.subr.mxu0 0.0
  %810 = vmatpush1.msra.mxu0 %v357
  %811 = vmatprep.subr.mxu0 0.0
  %812 = vmatpush1.msra.mxu0 %v360
  %813 = vmatprep.subr.mxu0 0.0
  %814 = vmatpush1.msra.mxu0 %v363
  %815 = vmatprep.subr.mxu0 0.0
  %816 = vmatpush1.msra.mxu0 %v366
  %817 = vmatprep.subr.mxu0 0.0
  %818 = vmatpush1.msra.mxu0 %v369
  %819 = vmatprep.subr.mxu0 0.0
  %820 = vmatpush1.msra.mxu0 %v372
  %821 = vmatprep.subr.mxu0 0.0
  %822 = vmatpush1.msra.mxu0 0.0
  %823 = vmatprep.subr.mxu0 0.0
  %824 = vmatpush1.msra.mxu0 0.0
  %825 = vmatprep.subr.mxu0 0.0
  %826 = vmatpush1.msra.mxu0 0.0
  %827 = vmatprep.subr.mxu0 0.0
  %828 = vmatpush1.msra.mxu0 0.0
  %829 = vmatprep.subr.mxu0 0.0
  %830 = vmatpush1.msra.mxu0 0.0
  %831 = vmatprep.subr.mxu0 0.0
  %832 = vmatpush1.msra.mxu0 0.0
  %833 = vmatprep.subr.mxu0 0.0
  %834 = vmatpush1.msra.mxu0 0.0
  %835 = vmatprep.subr.mxu0 0.0
  %836 = vmatpush1.msra.mxu0 0.0
  %837 = vmatprep.subr.mxu0 0.0
  %838 = vmatpush1.msra.mxu0 0.0
  %839 = vmatprep.subr.mxu0 0.0
  %840 = vmatpush1.msra.mxu0 0.0
  %841 = vmatprep.subr.mxu0 0.0
  %842 = vmatpush1.msra.mxu0 0.0
  %843 = vmatprep.subr.mxu0 0.0
  %844 = vmatpush1.msra.mxu0 0.0
  %845 = vmatprep.subr.mxu0 0.0
  %846 = vmatpush1.msra.mxu0 0.0
  %847 = vmatprep.subr.mxu0 0.0
  %848 = vmatpush1.msra.mxu0 0.0
  %849 = vmatprep.subr.mxu0 0.0
  %850 = vmatpush1.msra.mxu0 0.0
  %851 = vmatprep.subr.mxu0 0.0
  %852 = vmatpush1.msra.mxu0 0.0
  %853 = vmatprep.mubr.f32.mxu0 0.0
  %854 = vmatmul.mubr.f32.gmra.mrb[0].mxu0 %v709
  %v855 = vpop.f32.mrb[0].mxu0
  %v856 = vadd.f32 0.0, %v855
  %v857 = vpop.f32.mrb[0].mxu0
  %858 = vdwg.mxu0
  %v859 = vadd.f32 %v715, %v785
  %v860 = vmul.f32 %v859, 0.5
  %v861 = vtanh.pop %v860
  %v862 = vmul.f32 %v861, 0.5
  %v863 = vadd.f32 %v862, 0.5
  %v864 = vadd.f32 %v716, %v787
  %v865 = vmul.f32 %v864, 0.5
  %v866 = vtanh.pop %v865
  %v867 = vmul.f32 %v866, 0.5
  %v868 = vadd.f32 %v867, 0.5
  %v869 = vadd.f32 %v856, %v378
  %v870 = vmul.f32 %v863, %v869
  %v871 = vadd.f32 %v717, %v870
  %v872 = vtanh.pop %v871
  %v873 = vsub.f32 %v709, %v872
  %v874 = vmul.f32 %v868, %v873
  %v875 = vadd.f32 %v872, %v874
  %s876 = scalar_lea.vmem %s5, 16
  %877 = vst [vmem:[%s876] sm:$0xff] %v875
  %s878 = smul.u32 3, 3
  %s879 = smul.addr %s878, 8
  %s880 = scalar_lea.vmem [#allocation3], %s879
  %v881 = vld [vmem:[%s880] sm:$0xff]
  %v882 = vld [vmem:[%s880 + $0x8] sm:$0xff]
  %v883 = vld [vmem:[%s880 + $0x10] sm:$0xff]
  %884 = vmatprep.subr.mxu0 %v326
  %885 = vmatpush1.msra.mxu0 %v325
  %886 = vmatprep.subr.mxu0 %v329
  %887 = vmatpush1.msra.mxu0 %v328
  %888 = vmatprep.subr.mxu0 %v332
  %889 = vmatpush1.msra.mxu0 %v331
  %890 = vmatprep.subr.mxu0 %v335
  %891 = vmatpush1.msra.mxu0 %v334
  %892 = vmatprep.subr.mxu0 %v338
  %893 = vmatpush1.msra.mxu0 %v337
  %894 = vmatprep.subr.mxu0 %v341
  %895 = vmatpush1.msra.mxu0 %v340
  %896 = vmatprep.subr.mxu0 %v344
  %897 = vmatpush1.msra.mxu0 %v343
  %898 = vmatprep.subr.mxu0 %v347
  %899 = vmatpush1.msra.mxu0 %v346
  %900 = vmatprep.subr.mxu0 %v350
  %901 = vmatpush1.msra.mxu0 %v349
  %902 = vmatprep.subr.mxu0 %v353
  %903 = vmatpush1.msra.mxu0 %v352
  %904 = vmatprep.subr.mxu0 %v356
  %905 = vmatpush1.msra.mxu0 %v355
  %906 = vmatprep.subr.mxu0 %v359
  %907 = vmatpush1.msra.mxu0 %v358
  %908 = vmatprep.subr.mxu0 %v362
  %909 = vmatpush1.msra.mxu0 %v361
  %910 = vmatprep.subr.mxu0 %v365
  %911 = vmatpush1.msra.mxu0 %v364
  %912 = vmatprep.subr.mxu0 %v368
  %913 = vmatpush1.msra.mxu0 %v367
  %914 = vmatprep.subr.mxu0 %v371
  %915 = vmatpush1.msra.mxu0 %v370
  %916 = vmatprep.subr.mxu0 0.0
  %917 = vmatpush1.msra.mxu0 0.0
  %918 = vmatprep.subr.mxu0 0.0
  %919 = vmatpush1.msra.mxu0 0.0
  %920 = vmatprep.subr.mxu0 0.0
  %921 = vmatpush1.msra.mxu0 0.0
  %922 = vmatprep.subr.mxu0 0.0
  %923 = vmatpush1.msra.mxu0 0.0
  %924 = vmatprep.subr.mxu0 0.0
  %925 = vmatpush1.msra.mxu0 0.0
  %926 = vmatprep.subr.mxu0 0.0
  %927 = vmatpush1.msra.mxu0 0.0
  %928 = vmatprep.subr.mxu0 0.0
  %929 = vmatpush1.msra.mxu0 0.0
  %930 = vmatprep.subr.mxu0 0.0
  %931 = vmatpush1.msra.mxu0 0.0
  %932 = vmatprep.subr.mxu0 0.0
  %933 = vmatpush1.msra.mxu0 0.0
  %934 = vmatprep.subr.mxu0 0.0
  %935 = vmatpush1.msra.mxu0 0.0
  %936 = vmatprep.subr.mxu0 0.0
  %937 = vmatpush1.msra.mxu0 0.0
  %938 = vmatprep.subr.mxu0 0.0
  %939 = vmatpush1.msra.mxu0 0.0
  %940 = vmatprep.subr.mxu0 0.0
  %941 = vmatpush1.msra.mxu0 0.0
  %942 = vmatprep.subr.mxu0 0.0
  %943 = vmatpush1.msra.mxu0 0.0
  %944 = vmatprep.subr.mxu0 0.0
  %945 = vmatpush1.msra.mxu0 0.0
  %946 = vmatprep.subr.mxu0 0.0
  %947 = vmatpush1.msra.mxu0 0.0
  %948 = vmatprep.mubr.f32.mxu0 0.0
  %949 = vmatmul.mubr.f32.gmra.mrb[0].mxu0 %v875
  %v950 = vpop.f32.mrb[0].mxu0
  %v951 = vadd.f32 0.0, %v950
  %v952 = vpop.f32.mrb[0].mxu0
  %v953 = vadd.f32 0.0, %v952
  %954 = vdwg.mxu0
  %955 = vmatprep.subr.mxu0 0.0
  %956 = vmatpush1.msra.mxu0 %v327
  %957 = vmatprep.subr.mxu0 0.0
  %958 = vmatpush1.msra.mxu0 %v330
  %959 = vmatprep.subr.mxu0 0.0
  %960 = vmatpush1.msra.mxu0 %v333
  %961 = vmatprep.subr.mxu0 0.0
  %962 = vmatpush1.msra.mxu0 %v336
  %963 = vmatprep.subr.mxu0 0.0
  %964 = vmatpush1.msra.mxu0 %v339
  %965 = vmatprep.subr.mxu0 0.0
  %966 = vmatpush1.msra.mxu0 %v342
  %967 = vmatprep.subr.mxu0 0.0
  %968 = vmatpush1.msra.mxu0 %v345
  %969 = vmatprep.subr.mxu0 0.0
  %970 = vmatpush1.msra.mxu0 %v348
  %971 = vmatprep.subr.mxu0 0.0
  %972 = vmatpush1.msra.mxu0 %v351
  %973 = vmatprep.subr.mxu0 0.0
  %974 = vmatpush1.msra.mxu0 %v354
  %975 = vmatprep.subr.mxu0 0.0
  %976 = vmatpush1.msra.mxu0 %v357
  %977 = vmatprep.subr.mxu0 0.0
  %978 = vmatpush1.msra.mxu0 %v360
  %979 = vmatprep.subr.mxu0 0.0
  %980 = vmatpush1.msra.mxu0 %v363
  %981 = vmatprep.subr.mxu0 0.0
  %982 = vmatpush1.msra.mxu0 %v366
  %983 = vmatprep.subr.mxu0 0.0
  %984 = vmatpush1.msra.mxu0 %v369
  %985 = vmatprep.subr.mxu0 0.0
  %986 = vmatpush1.msra.mxu0 %v372
  %987 = vmatprep.subr.mxu0 0.0
  %988 = vmatpush1.msra.mxu0 0.0
  %989 = vmatprep.subr.mxu0 0.0
  %990 = vmatpush1.msra.mxu0 0.0
  %991 = vmatprep.subr.mxu0 0.0
  %992 = vmatpush1.msra.mxu0 0.0
  %993 = vmatprep.subr.mxu0 0.0
  %994 = vmatpush1.msra.mxu0 0.0
  %995 = vmatprep.subr.mxu0 0.0
  %996 = vmatpush1.msra.mxu0 0.0
  %997 = vmatprep.subr.mxu0 0.0
  %998 = vmatpush1.msra.mxu0 0.0
  %999 = vmatprep.subr.mxu0 0.0
  %1000 = vmatpush1.msra.mxu0 0.0
  %1001 = vmatprep.subr.mxu0 0.0
  %1002 = vmatpush1.msra.mxu0 0.0
  %1003 = vmatprep.subr.mxu0 0.0
  %1004 = vmatpush1.msra.mxu0 0.0
  %1005 = vmatprep.subr.mxu0 0.0
  %1006 = vmatpush1.msra.mxu0 0.0
  %1007 = vmatprep.subr.mxu0 0.0
  %1008 = vmatpush1.msra.mxu0 0.0
  %1009 = vmatprep.subr.mxu0 0.0
  %1010 = vmatpush1.msra.mxu0 0.0
  %1011 = vmatprep.subr.mxu0 0.0
  %1012 = vmatpush1.msra.mxu0 0.0
  %1013 = vmatprep.subr.mxu0 0.0
  %1014 = vmatpush1.msra.mxu0 0.0
  %1015 = vmatprep.subr.mxu0 0.0
  %1016 = vmatpush1.msra.mxu0 0.0
  %1017 = vmatprep.subr.mxu0 0.0
  %1018 = vmatpush1.msra.mxu0 0.0
  %1019 = vmatprep.mubr.f32.mxu0 0.0
  %1020 = vmatmul.mubr.f32.gmra.mrb[0].mxu0 %v875
  %v1021 = vpop.f32.mrb[0].mxu0
  %v1022 = vadd.f32 0.0, %v1021
  %v1023 = vpop.f32.mrb[0].mxu0
  %1024 = vdwg.mxu0
  %v1025 = vadd.f32 %v881, %v951
  %v1026 = vmul.f32 %v1025, 0.5
  %v1027 = vtanh.pop %v1026
  %v1028 = vmul.f32 %v1027, 0.5
  %v1029 = vadd.f32 %v1028, 0.5
  %v1030 = vadd.f32 %v882, %v953
  %v1031 = vmul.f32 %v1030, 0.5
  %v1032 = vtanh.pop %v1031
  %v1033 = vmul.f32 %v1032, 0.5
  %v1034 = vadd.f32 %v1033, 0.5
  %v1035 = vadd.f32 %v1022, %v378
  %v1036 = vmul.f32 %v1029, %v1035
  %v1037 = vadd.f32 %v883, %v1036
  %v1038 = vtanh.pop %v1037
  %v1039 = vsub.f32 %v875, %v1038
  %v1040 = vmul.f32 %v1034, %v1039
  %v1041 = vadd.f32 %v1038, %v1040
  %s1042 = scalar_lea.vmem %s5, 24
  %1043 = vst [vmem:[%s1042] sm:$0xff] %v1041
  %s1044 = smul.u32 4, 3
  %s1045 = smul.addr %s1044, 8
  %s1046 = scalar_lea.vmem [#allocation3], %s1045
  %v1047 = vld [vmem:[%s1046] sm:$0xff]
  %v1048 = vld [vmem:[%s1046 + $0x8] sm:$0xff]
  %v1049 = vld [vmem:[%s1046 + $0x10] sm:$0xff]
  %1050 = vmatprep.subr.mxu0 %v326
  %1051 = vmatpush1.msra.mxu0 %v325
  %1052 = vmatprep.subr.mxu0 %v329
  %1053 = vmatpush1.msra.mxu0 %v328
  %1054 = vmatprep.subr.mxu0 %v332
  %1055 = vmatpush1.msra.mxu0 %v331
  %1056 = vmatprep.subr.mxu0 %v335
  %1057 = vmatpush1.msra.mxu0 %v334
  %1058 = vmatprep.subr.mxu0 %v338
  %1059 = vmatpush1.msra.mxu0 %v337
  %1060 = vmatprep.subr.mxu0 %v341
  %1061 = vmatpush1.msra.mxu0 %v340
  %1062 = vmatprep.subr.mxu0 %v344
  %1063 = vmatpush1.msra.mxu0 %v343
  %1064 = vmatprep.subr.mxu0 %v347
  %1065 = vmatpush1.msra.mxu0 %v346
  %1066 = vmatprep.subr.mxu0 %v350
  %1067 = vmatpush1.msra.mxu0 %v349
  %1068 = vmatprep.subr.mxu0 %v353
  %1069 = vmatpush1.msra.mxu0 %v352
  %1070 = vmatprep.subr.mxu0 %v356
  %1071 = vmatpush1.msra.mxu0 %v355
  %1072 = vmatprep.subr.mxu0 %v359
  %1073 = vmatpush1.msra.mxu0 %v358
  %1074 = vmatprep.subr.mxu0 %v362
  %1075 = vmatpush1.msra.mxu0 %v361
  %1076 = vmatprep.subr.mxu0 %v365
  %1077 = vmatpush1.msra.mxu0 %v364
  %1078 = vmatprep.subr.mxu0 %v368
  %1079 = vmatpush1.msra.mxu0 %v367
  %1080 = vmatprep.subr.mxu0 %v371
  %1081 = vmatpush1.msra.mxu0 %v370
  %1082 = vmatprep.subr.mxu0 0.0
  %1083 = vmatpush1.msra.mxu0 0.0
  %1084 = vmatprep.subr.mxu0 0.0
  %1085 = vmatpush1.msra.mxu0 0.0
  %1086 = vmatprep.subr.mxu0 0.0
  %1087 = vmatpush1.msra.mxu0 0.0
  %1088 = vmatprep.subr.mxu0 0.0
  %1089 = vmatpush1.msra.mxu0 0.0
  %1090 = vmatprep.subr.mxu0 0.0
  %1091 = vmatpush1.msra.mxu0 0.0
  %1092 = vmatprep.subr.mxu0 0.0
  %1093 = vmatpush1.msra.mxu0 0.0
  %1094 = vmatprep.subr.mxu0 0.0
  %1095 = vmatpush1.msra.mxu0 0.0
  %1096 = vmatprep.subr.mxu0 0.0
  %1097 = vmatpush1.msra.mxu0 0.0
  %1098 = vmatprep.subr.mxu0 0.0
  %1099 = vmatpush1.msra.mxu0 0.0
  %1100 = vmatprep.subr.mxu0 0.0
  %1101 = vmatpush1.msra.mxu0 0.0
  %1102 = vmatprep.subr.mxu0 0.0
  %1103 = vmatpush1.msra.mxu0 0.0
  %1104 = vmatprep.subr.mxu0 0.0
  %1105 = vmatpush1.msra.mxu0 0.0
  %1106 = vmatprep.subr.mxu0 0.0
  %1107 = vmatpush1.msra.mxu0 0.0
  %1108 = vmatprep.subr.mxu0 0.0
  %1109 = vmatpush1.msra.mxu0 0.0
  %1110 = vmatprep.subr.mxu0 0.0
  %1111 = vmatpush1.msra.mxu0 0.0
  %1112 = vmatprep.subr.mxu0 0.0
  %1113 = vmatpush1.msra.mxu0 0.0
  %1114 = vmatprep.mubr.f32.mxu0 0.0
  %1115 = vmatmul.mubr.f32.gmra.mrb[0].mxu0 %v1041
  %v1116 = vpop.f32.mrb[0].mxu0
  %v1117 = vadd.f32 0.0, %v1116
  %v1118 = vpop.f32.mrb[0].mxu0
  %v1119 = vadd.f32 0.0, %v1118
  %1120 = vdwg.mxu0
  %1121 = vmatprep.subr.mxu0 0.0
  %1122 = vmatpush1.msra.mxu0 %v327
  %1123 = vmatprep.subr.mxu0 0.0
  %1124 = vmatpush1.msra.mxu0 %v330
  %1125 = vmatprep.subr.mxu0 0.0
  %1126 = vmatpush1.msra.mxu0 %v333
  %1127 = vmatprep.subr.mxu0 0.0
  %1128 = vmatpush1.msra.mxu0 %v336
  %1129 = vmatprep.subr.mxu0 0.0
  %1130 = vmatpush1.msra.mxu0 %v339
  %1131 = vmatprep.subr.mxu0 0.0
  %1132 = vmatpush1.msra.mxu0 %v342
  %1133 = vmatprep.subr.mxu0 0.0
  %1134 = vmatpush1.msra.mxu0 %v345
  %1135 = vmatprep.subr.mxu0 0.0
  %1136 = vmatpush1.msra.mxu0 %v348
  %1137 = vmatprep.subr.mxu0 0.0
  %1138 = vmatpush1.msra.mxu0 %v351
  %1139 = vmatprep.subr.mxu0 0.0
  %1140 = vmatpush1.msra.mxu0 %v354
  %1141 = vmatprep.subr.mxu0 0.0
  %1142 = vmatpush1.msra.mxu0 %v357
  %1143 = vmatprep.subr.mxu0 0.0
  %1144 = vmatpush1.msra.mxu0 %v360
  %1145 = vmatprep.subr.mxu0 0.0
  %1146 = vmatpush1.msra.mxu0 %v363
  %1147 = vmatprep.subr.mxu0 0.0
  %1148 = vmatpush1.msra.mxu0 %v366
  %1149 = vmatprep.subr.mxu0 0.0
  %1150 = vmatpush1.msra.mxu0 %v369
  %1151 = vmatprep.subr.mxu0 0.0
  %1152 = vmatpush1.msra.mxu0 %v372
  %1153 = vmatprep.subr.mxu0 0.0
  %1154 = vmatpush1.msra.mxu0 0.0
  %1155 = vmatprep.subr.mxu0 0.0
  %1156 = vmatpush1.msra.mxu0 0.0
  %1157 = vmatprep.subr.mxu0 0.0
  %1158 = vmatpush1.msra.mxu0 0.0
  %1159 = vmatprep.subr.mxu0 0.0
  %1160 = vmatpush1.msra.mxu0 0.0
  %1161 = vmatprep.subr.mxu0 0.0
  %1162 = vmatpush1.msra.mxu0 0.0
  %1163 = vmatprep.subr.mxu0 0.0
  %1164 = vmatpush1.msra.mxu0 0.0
  %1165 = vmatprep.subr.mxu0 0.0
  %1166 = vmatpush1.msra.mxu0 0.0
  %1167 = vmatprep.subr.mxu0 0.0
  %1168 = vmatpush1.msra.mxu0 0.0
  %1169 = vmatprep.subr.mxu0 0.0
  %1170 = vmatpush1.msra.mxu0 0.0
  %1171 = vmatprep.subr.mxu0 0.0
  %1172 = vmatpush1.msra.mxu0 0.0
  %1173 = vmatprep.subr.mxu0 0.0
  %1174 = vmatpush1.msra.mxu0 0.0
  %1175 = vmatprep.subr.mxu0 0.0
  %1176 = vmatpush1.msra.mxu0 0.0
  %1177 = vmatprep.subr.mxu0 0.0
  %1178 = vmatpush1.msra.mxu0 0.0
  %1179 = vmatprep.subr.mxu0 0.0
  %1180 = vmatpush1.msra.mxu0 0.0
  %1181 = vmatprep.subr.mxu0 0.0
  %1182 = vmatpush1.msra.mxu0 0.0
  %1183 = vmatprep.subr.mxu0 0.0
  %1184 = vmatpush1.msra.mxu0 0.0
  %1185 = vmatprep.mubr.f32.mxu0 0.0
  %1186 = vmatmul.mubr.f32.gmra.mrb[0].mxu0 %v1041
  %v1187 = vpop.f32.mrb[0].mxu0
  %v1188 = vadd.f32 0.0, %v1187
  %v1189 = vpop.f32.mrb[0].mxu0
  %1190 = vdwg.mxu0
  %v1191 = vadd.f32 %v1047, %v1117
  %v1192 = vmul.f32 %v1191, 0.5
  %v1193 = vtanh.pop %v1192
  %v1194 = vmul.f32 %v1193, 0.5
  %v1195 = vadd.f32 %v1194, 0.5
  %v1196 = vadd.f32 %v1048, %v1119
  %v1197 = vmul.f32 %v1196, 0.5
  %v1198 = vtanh.pop %v1197
  %v1199 = vmul.f32 %v1198, 0.5
  %v1200 = vadd.f32 %v1199, 0.5
  %v1201 = vadd.f32 %v1188, %v378
  %v1202 = vmul.f32 %v1195, %v1201
  %v1203 = vadd.f32 %v1049, %v1202
  %v1204 = vtanh.pop %v1203
  %v1205 = vsub.f32 %v1041, %v1204
  %v1206 = vmul.f32 %v1200, %v1205
  %v1207 = vadd.f32 %v1204, %v1206
  %s1208 = scalar_lea.vmem %s5, 32
  %1209 = vst [vmem:[%s1208] sm:$0xff] %v1207
  %s1210 = smul.u32 5, 3
  %s1211 = smul.addr %s1210, 8
  %s1212 = scalar_lea.vmem [#allocation3], %s1211
  %v1213 = vld [vmem:[%s1212] sm:$0xff]
  %v1214 = vld [vmem:[%s1212 + $0x8] sm:$0xff]
  %v1215 = vld [vmem:[%s1212 + $0x10] sm:$0xff]
  %1216 = vmatprep.subr.mxu0 %v326
  %1217 = vmatpush1.msra.mxu0 %v325
  %1218 = vmatprep.subr.mxu0 %v329
  %1219 = vmatpush1.msra.mxu0 %v328
  %1220 = vmatprep.subr.mxu0 %v332
  %1221 = vmatpush1.msra.mxu0 %v331
  %1222 = vmatprep.subr.mxu0 %v335
  %1223 = vmatpush1.msra.mxu0 %v334
  %1224 = vmatprep.subr.mxu0 %v338
  %1225 = vmatpush1.msra.mxu0 %v337
  %1226 = vmatprep.subr.mxu0 %v341
  %1227 = vmatpush1.msra.mxu0 %v340
  %1228 = vmatprep.subr.mxu0 %v344
  %1229 = vmatpush1.msra.mxu0 %v343
  %1230 = vmatprep.subr.mxu0 %v347
  %1231 = vmatpush1.msra.mxu0 %v346
  %1232 = vmatprep.subr.mxu0 %v350
  %1233 = vmatpush1.msra.mxu0 %v349
  %1234 = vmatprep.subr.mxu0 %v353
  %1235 = vmatpush1.msra.mxu0 %v352
  %1236 = vmatprep.subr.mxu0 %v356
  %1237 = vmatpush1.msra.mxu0 %v355
  %1238 = vmatprep.subr.mxu0 %v359
  %1239 = vmatpush1.msra.mxu0 %v358
  %1240 = vmatprep.subr.mxu0 %v362
  %1241 = vmatpush1.msra.mxu0 %v361
  %1242 = vmatprep.subr.mxu0 %v365
  %1243 = vmatpush1.msra.mxu0 %v364
  %1244 = vmatprep.subr.mxu0 %v368
  %1245 = vmatpush1.msra.mxu0 %v367
  %1246 = vmatprep.subr.mxu0 %v371
  %1247 = vmatpush1.msra.mxu0 %v370
  %1248 = vmatprep.subr.mxu0 0.0
  %1249 = vmatpush1.msra.mxu0 0.0
  %1250 = vmatprep.subr.mxu0 0.0
  %1251 = vmatpush1.msra.mxu0 0.0
  %1252 = vmatprep.subr.mxu0 0.0
  %1253 = vmatpush1.msra.mxu0 0.0
  %1254 = vmatprep.subr.mxu0 0.0
  %1255 = vmatpush1.msra.mxu0 0.0
  %1256 = vmatprep.subr.mxu0 0.0
  %1257 = vmatpush1.msra.mxu0 0.0
  %1258 = vmatprep.subr.mxu0 0.0
  %1259 = vmatpush1.msra.mxu0 0.0
  %1260 = vmatprep.subr.mxu0 0.0
  %1261 = vmatpush1.msra.mxu0 0.0
  %1262 = vmatprep.subr.mxu0 0.0
  %1263 = vmatpush1.msra.mxu0 0.0
  %1264 = vmatprep.subr.mxu0 0.0
  %1265 = vmatpush1.msra.mxu0 0.0
  %1266 = vmatprep.subr.mxu0 0.0
  %1267 = vmatpush1.msra.mxu0 0.0
  %1268 = vmatprep.subr.mxu0 0.0
  %1269 = vmatpush1.msra.mxu0 0.0
  %1270 = vmatprep.subr.mxu0 0.0
  %1271 = vmatpush1.msra.mxu0 0.0
  %1272 = vmatprep.subr.mxu0 0.0
  %1273 = vmatpush1.msra.mxu0 0.0
  %1274 = vmatprep.subr.mxu0 0.0
  %1275 = vmatpush1.msra.mxu0 0.0
  %1276 = vmatprep.subr.mxu0 0.0
  %1277 = vmatpush1.msra.mxu0 0.0
  %1278 = vmatprep.subr.mxu0 0.0
  %1279 = vmatpush1.msra.mxu0 0.0
  %1280 = vmatprep.mubr.f32.mxu0 0.0
  %1281 = vmatmul.mubr.f32.gmra.mrb[0].mxu0 %v1207
  %v1282 = vpop.f32.mrb[0].mxu0
  %v1283 = vadd.f32 0.0, %v1282
  %v1284 = vpop.f32.mrb[0].mxu0
  %v1285 = vadd.f32 0.0, %v1284
  %1286 = vdwg.mxu0
  %1287 = vmatprep.subr.mxu0 0.0
  %1288 = vmatpush1.msra.mxu0 %v327
  %1289 = vmatprep.subr.mxu0 0.0
  %1290 = vmatpush1.msra.mxu0 %v330
  %1291 = vmatprep.subr.mxu0 0.0
  %1292 = vmatpush1.msra.mxu0 %v333
  %1293 = vmatprep.subr.mxu0 0.0
  %1294 = vmatpush1.msra.mxu0 %v336
  %1295 = vmatprep.subr.mxu0 0.0
  %1296 = vmatpush1.msra.mxu0 %v339
  %1297 = vmatprep.subr.mxu0 0.0
  %1298 = vmatpush1.msra.mxu0 %v342
  %1299 = vmatprep.subr.mxu0 0.0
  %1300 = vmatpush1.msra.mxu0 %v345
  %1301 = vmatprep.subr.mxu0 0.0
  %1302 = vmatpush1.msra.mxu0 %v348
  %1303 = vmatprep.subr.mxu0 0.0
  %1304 = vmatpush1.msra.mxu0 %v351
  %1305 = vmatprep.subr.mxu0 0.0
  %1306 = vmatpush1.msra.mxu0 %v354
  %1307 = vmatprep.subr.mxu0 0.0
  %1308 = vmatpush1.msra.mxu0 %v357
  %1309 = vmatprep.subr.mxu0 0.0
  %1310 = vmatpush1.msra.mxu0 %v360
  %1311 = vmatprep.subr.mxu0 0.0
  %1312 = vmatpush1.msra.mxu0 %v363
  %1313 = vmatprep.subr.mxu0 0.0
  %1314 = vmatpush1.msra.mxu0 %v366
  %1315 = vmatprep.subr.mxu0 0.0
  %1316 = vmatpush1.msra.mxu0 %v369
  %1317 = vmatprep.subr.mxu0 0.0
  %1318 = vmatpush1.msra.mxu0 %v372
  %1319 = vmatprep.subr.mxu0 0.0
  %1320 = vmatpush1.msra.mxu0 0.0
  %1321 = vmatprep.subr.mxu0 0.0
  %1322 = vmatpush1.msra.mxu0 0.0
  %1323 = vmatprep.subr.mxu0 0.0
  %1324 = vmatpush1.msra.mxu0 0.0
  %1325 = vmatprep.subr.mxu0 0.0
  %1326 = vmatpush1.msra.mxu0 0.0
  %1327 = vmatprep.subr.mxu0 0.0
  %1328 = vmatpush1.msra.mxu0 0.0
  %1329 = vmatprep.subr.mxu0 0.0
  %1330 = vmatpush1.msra.mxu0 0.0
  %1331 = vmatprep.subr.mxu0 0.0
  %1332 = vmatpush1.msra.mxu0 0.0
  %1333 = vmatprep.subr.mxu0 0.0
  %1334 = vmatpush1.msra.mxu0 0.0
  %1335 = vmatprep.subr.mxu0 0.0
  %1336 = vmatpush1.msra.mxu0 0.0
  %1337 = vmatprep.subr.mxu0 0.0
  %1338 = vmatpush1.msra.mxu0 0.0
  %1339 = vmatprep.subr.mxu0 0.0
  %1340 = vmatpush1.msra.mxu0 0.0
  %1341 = vmatprep.subr.mxu0 0.0
  %1342 = vmatpush1.msra.mxu0 0.0
  %1343 = vmatprep.subr.mxu0 0.0
  %1344 = vmatpush1.msra.mxu0 0.0
  %1345 = vmatprep.subr.mxu0 0.0
  %1346 = vmatpush1.msra.mxu0 0.0
  %1347 = vmatprep.subr.mxu0 0.0
  %1348 = vmatpush1.msra.mxu0 0.0
  %1349 = vmatprep.subr.mxu0 0.0
  %1350 = vmatpush1.msra.mxu0 0.0
  %1351 = vmatprep.mubr.f32.mxu0 0.0
  %1352 = vmatmul.mubr.f32.gmra.mrb[0].mxu0 %v1207
  %v1353 = vpop.f32.mrb[0].mxu0
  %v1354 = vadd.f32 0.0, %v1353
  %v1355 = vpop.f32.mrb[0].mxu0
  %1356 = vdwg.mxu0
  %v1357 = vadd.f32 %v1213, %v1283
  %v1358 = vmul.f32 %v1357, 0.5
  %v1359 = vtanh.pop %v1358
  %v1360 = vmul.f32 %v1359, 0.5
  %v1361 = vadd.f32 %v1360, 0.5
  %v1362 = vadd.f32 %v1214, %v1285
  %v1363 = vmul.f32 %v1362, 0.5
  %v1364 = vtanh.pop %v1363
  %v1365 = vmul.f32 %v1364, 0.5
  %v1366 = vadd.f32 %v1365, 0.5
  %v1367 = vadd.f32 %v1354, %v378
  %v1368 = vmul.f32 %v1361, %v1367
  %v1369 = vadd.f32 %v1215, %v1368
  %v1370 = vtanh.pop %v1369
  %v1371 = vsub.f32 %v1207, %v1370
  %v1372 = vmul.f32 %v1366, %v1371
  %v1373 = vadd.f32 %v1370, %v1372
  %s1374 = scalar_lea.vmem %s5, 40
  %1375 = vst [vmem:[%s1374] sm:$0xff] %v1373
  %s1376 = smul.u32 6, 3
  %s1377 = smul.addr %s1376, 8
  %s1378 = scalar_lea.vmem [#allocation3], %s1377
  %v1379 = vld [vmem:[%s1378] sm:$0xff]
  %v1380 = vld [vmem:[%s1378 + $0x8] sm:$0xff]
  %v1381 = vld [vmem:[%s1378 + $0x10] sm:$0xff]
  %1382 = vmatprep.subr.mxu0 %v326
  %1383 = vmatpush1.msra.mxu0 %v325
  %1384 = vmatprep.subr.mxu0 %v329
  %1385 = vmatpush1.msra.mxu0 %v328
  %1386 = vmatprep.subr.mxu0 %v332
  %1387 = vmatpush1.msra.mxu0 %v331
  %1388 = vmatprep.subr.mxu0 %v335
  %1389 = vmatpush1.msra.mxu0 %v334
  %1390 = vmatprep.subr.mxu0 %v338
  %1391 = vmatpush1.msra.mxu0 %v337
  %1392 = vmatprep.subr.mxu0 %v341
  %1393 = vmatpush1.msra.mxu0 %v340
  %1394 = vmatprep.subr.mxu0 %v344
  %1395 = vmatpush1.msra.mxu0 %v343
  %1396 = vmatprep.subr.mxu0 %v347
  %1397 = vmatpush1.msra.mxu0 %v346
  %1398 = vmatprep.subr.mxu0 %v350
  %1399 = vmatpush1.msra.mxu0 %v349
  %1400 = vmatprep.subr.mxu0 %v353
  %1401 = vmatpush1.msra.mxu0 %v352
  %1402 = vmatprep.subr.mxu0 %v356
  %1403 = vmatpush1.msra.mxu0 %v355
  %1404 = vmatprep.subr.mxu0 %v359
  %1405 = vmatpush1.msra.mxu0 %v358
  %1406 = vmatprep.subr.mxu0 %v362
  %1407 = vmatpush1.msra.mxu0 %v361
  %1408 = vmatprep.subr.mxu0 %v365
  %1409 = vmatpush1.msra.mxu0 %v364
  %1410 = vmatprep.subr.mxu0 %v368
  %1411 = vmatpush1.msra.mxu0 %v367
  %1412 = vmatprep.subr.mxu0 %v371
  %1413 = vmatpush1.msra.mxu0 %v370
  %1414 = vmatprep.subr.mxu0 0.0
  %1415 = vmatpush1.msra.mxu0 0.0
  %1416 = vmatprep.subr.mxu0 0.0
  %1417 = vmatpush1.msra.mxu0 0.0
  %1418 = vmatprep.subr.mxu0 0.0
  %1419 = vmatpush1.msra.mxu0 0.0
  %1420 = vmatprep.subr.mxu0 0.0
  %1421 = vmatpush1.msra.mxu0 0.0
  %1422 = vmatprep.subr.mxu0 0.0
  %1423 = vmatpush1.msra.mxu0 0.0
  %1424 = vmatprep.subr.mxu0 0.0
  %1425 = vmatpush1.msra.mxu0 0.0
  %1426 = vmatprep.subr.mxu0 0.0
  %1427 = vmatpush1.msra.mxu0 0.0
  %1428 = vmatprep.subr.mxu0 0.0
  %1429 = vmatpush1.msra.mxu0 0.0
  %1430 = vmatprep.subr.mxu0 0.0
  %1431 = vmatpush1.msra.mxu0 0.0
  %1432 = vmatprep.subr.mxu0 0.0
  %1433 = vmatpush1.msra.mxu0 0.0
  %1434 = vmatprep.subr.mxu0 0.0
  %1435 = vmatpush1.msra.mxu0 0.0
  %1436 = vmatprep.subr.mxu0 0.0
  %1437 = vmatpush1.msra.mxu0 0.0
  %1438 = vmatprep.subr.mxu0 0.0
  %1439 = vmatpush1.msra.mxu0 0.0
  %1440 = vmatprep.subr.mxu0 0.0
  %1441 = vmatpush1.msra.mxu0 0.0
  %1442 = vmatprep.subr.mxu0 0.0
  %1443 = vmatpush1.msra.mxu0 0.0
  %1444 = vmatprep.subr.mxu0 0.0
  %1445 = vmatpush1.msra.mxu0 0.0
  %1446 = vmatprep.mubr.f32.mxu0 0.0
  %1447 = vmatmul.mubr.f32.gmra.mrb[0].mxu0 %v1373
  %v1448 = vpop.f32.mrb[0].mxu0
  %v1449 = vadd.f32 0.0, %v1448
  %v1450 = vpop.f32.mrb[0].mxu0
  %v1451 = vadd.f32 0.0, %v1450
  %1452 = vdwg.mxu0
  %1453 = vmatprep.subr.mxu0 0.0
  %1454 = vmatpush1.msra.mxu0 %v327
  %1455 = vmatprep.subr.mxu0 0.0
  %1456 = vmatpush1.msra.mxu0 %v330
  %1457 = vmatprep.subr.mxu0 0.0
  %1458 = vmatpush1.msra.mxu0 %v333
  %1459 = vmatprep.subr.mxu0 0.0
  %1460 = vmatpush1.msra.mxu0 %v336
  %1461 = vmatprep.subr.mxu0 0.0
  %1462 = vmatpush1.msra.mxu0 %v339
  %1463 = vmatprep.subr.mxu0 0.0
  %1464 = vmatpush1.msra.mxu0 %v342
  %1465 = vmatprep.subr.mxu0 0.0
  %1466 = vmatpush1.msra.mxu0 %v345
  %1467 = vmatprep.subr.mxu0 0.0
  %1468 = vmatpush1.msra.mxu0 %v348
  %1469 = vmatprep.subr.mxu0 0.0
  %1470 = vmatpush1.msra.mxu0 %v351
  %1471 = vmatprep.subr.mxu0 0.0
  %1472 = vmatpush1.msra.mxu0 %v354
  %1473 = vmatprep.subr.mxu0 0.0
  %1474 = vmatpush1.msra.mxu0 %v357
  %1475 = vmatprep.subr.mxu0 0.0
  %1476 = vmatpush1.msra.mxu0 %v360
  %1477 = vmatprep.subr.mxu0 0.0
  %1478 = vmatpush1.msra.mxu0 %v363
  %1479 = vmatprep.subr.mxu0 0.0
  %1480 = vmatpush1.msra.mxu0 %v366
  %1481 = vmatprep.subr.mxu0 0.0
  %1482 = vmatpush1.msra.mxu0 %v369
  %1483 = vmatprep.subr.mxu0 0.0
  %1484 = vmatpush1.msra.mxu0 %v372
  %1485 = vmatprep.subr.mxu0 0.0
  %1486 = vmatpush1.msra.mxu0 0.0
  %1487 = vmatprep.subr.mxu0 0.0
  %1488 = vmatpush1.msra.mxu0 0.0
  %1489 = vmatprep.subr.mxu0 0.0
  %1490 = vmatpush1.msra.mxu0 0.0
  %1491 = vmatprep.subr.mxu0 0.0
  %1492 = vmatpush1.msra.mxu0 0.0
  %1493 = vmatprep.subr.mxu0 0.0
  %1494 = vmatpush1.msra.mxu0 0.0
  %1495 = vmatprep.subr.mxu0 0.0
  %1496 = vmatpush1.msra.mxu0 0.0
  %1497 = vmatprep.subr.mxu0 0.0
  %1498 = vmatpush1.msra.mxu0 0.0
  %1499 = vmatprep.subr.mxu0 0.0
  %1500 = vmatpush1.msra.mxu0 0.0
  %1501 = vmatprep.subr.mxu0 0.0
  %1502 = vmatpush1.msra.mxu0 0.0
  %1503 = vmatprep.subr.mxu0 0.0
  %1504 = vmatpush1.msra.mxu0 0.0
  %1505 = vmatprep.subr.mxu0 0.0
  %1506 = vmatpush1.msra.mxu0 0.0
  %1507 = vmatprep.subr.mxu0 0.0
  %1508 = vmatpush1.msra.mxu0 0.0
  %1509 = vmatprep.subr.mxu0 0.0
  %1510 = vmatpush1.msra.mxu0 0.0
  %1511 = vmatprep.subr.mxu0 0.0
  %1512 = vmatpush1.msra.mxu0 0.0
  %1513 = vmatprep.subr.mxu0 0.0
  %1514 = vmatpush1.msra.mxu0 0.0
  %1515 = vmatprep.subr.mxu0 0.0
  %1516 = vmatpush1.msra.mxu0 0.0
  %1517 = vmatprep.mubr.f32.mxu0 0.0
  %1518 = vmatmul.mubr.f32.gmra.mrb[0].mxu0 %v1373
  %v1519 = vpop.f32.mrb[0].mxu0
  %v1520 = vadd.f32 0.0, %v1519
  %v1521 = vpop.f32.mrb[0].mxu0
  %1522 = vdwg.mxu0
  %v1523 = vadd.f32 %v1379, %v1449
  %v1524 = vmul.f32 %v1523, 0.5
  %v1525 = vtanh.pop %v1524
  %v1526 = vmul.f32 %v1525, 0.5
  %v1527 = vadd.f32 %v1526, 0.5
  %v1528 = vadd.f32 %v1380, %v1451
  %v1529 = vmul.f32 %v1528, 0.5
  %v1530 = vtanh.pop %v1529
  %v1531 = vmul.f32 %v1530, 0.5
  %v1532 = vadd.f32 %v1531, 0.5
  %v1533 = vadd.f32 %v1520, %v378
  %v1534 = vmul.f32 %v1527, %v1533
  %v1535 = vadd.f32 %v1381, %v1534
  %v1536 = vtanh.pop %v1535
  %v1537 = vsub.f32 %v1373, %v1536
  %v1538 = vmul.f32 %v1532, %v1537
  %v1539 = vadd.f32 %v1536, %v1538
  %s1540 = scalar_lea.vmem %s5, 48
  %1541 = vst [vmem:[%s1540] sm:$0xff] %v1539
  %s1542 = smul.u32 7, 3
  %s1543 = smul.addr %s1542, 8
  %s1544 = scalar_lea.vmem [#allocation3], %s1543
  %v1545 = vld [vmem:[%s1544] sm:$0xff]
  %v1546 = vld [vmem:[%s1544 + $0x8] sm:$0xff]
  %v1547 = vld [vmem:[%s1544 + $0x10] sm:$0xff]
  %1548 = vmatprep.subr.mxu0 %v326
  %1549 = vmatpush1.msra.mxu0 %v325
  %1550 = vmatprep.subr.mxu0 %v329
  %1551 = vmatpush1.msra.mxu0 %v328
  %1552 = vmatprep.subr.mxu0 %v332
  %1553 = vmatpush1.msra.mxu0 %v331
  %1554 = vmatprep.subr.mxu0 %v335
  %1555 = vmatpush1.msra.mxu0 %v334
  %1556 = vmatprep.subr.mxu0 %v338
  %1557 = vmatpush1.msra.mxu0 %v337
  %1558 = vmatprep.subr.mxu0 %v341
  %1559 = vmatpush1.msra.mxu0 %v340
  %1560 = vmatprep.subr.mxu0 %v344
  %1561 = vmatpush1.msra.mxu0 %v343
  %1562 = vmatprep.subr.mxu0 %v347
  %1563 = vmatpush1.msra.mxu0 %v346
  %1564 = vmatprep.subr.mxu0 %v350
  %1565 = vmatpush1.msra.mxu0 %v349
  %1566 = vmatprep.subr.mxu0 %v353
  %1567 = vmatpush1.msra.mxu0 %v352
  %1568 = vmatprep.subr.mxu0 %v356
  %1569 = vmatpush1.msra.mxu0 %v355
  %1570 = vmatprep.subr.mxu0 %v359
  %1571 = vmatpush1.msra.mxu0 %v358
  %1572 = vmatprep.subr.mxu0 %v362
  %1573 = vmatpush1.msra.mxu0 %v361
  %1574 = vmatprep.subr.mxu0 %v365
  %1575 = vmatpush1.msra.mxu0 %v364
  %1576 = vmatprep.subr.mxu0 %v368
  %1577 = vmatpush1.msra.mxu0 %v367
  %1578 = vmatprep.subr.mxu0 %v371
  %1579 = vmatpush1.msra.mxu0 %v370
  %1580 = vmatprep.subr.mxu0 0.0
  %1581 = vmatpush1.msra.mxu0 0.0
  %1582 = vmatprep.subr.mxu0 0.0
  %1583 = vmatpush1.msra.mxu0 0.0
  %1584 = vmatprep.subr.mxu0 0.0
  %1585 = vmatpush1.msra.mxu0 0.0
  %1586 = vmatprep.subr.mxu0 0.0
  %1587 = vmatpush1.msra.mxu0 0.0
  %1588 = vmatprep.subr.mxu0 0.0
  %1589 = vmatpush1.msra.mxu0 0.0
  %1590 = vmatprep.subr.mxu0 0.0
  %1591 = vmatpush1.msra.mxu0 0.0
  %1592 = vmatprep.subr.mxu0 0.0
  %1593 = vmatpush1.msra.mxu0 0.0
  %1594 = vmatprep.subr.mxu0 0.0
  %1595 = vmatpush1.msra.mxu0 0.0
  %1596 = vmatprep.subr.mxu0 0.0
  %1597 = vmatpush1.msra.mxu0 0.0
  %1598 = vmatprep.subr.mxu0 0.0
  %1599 = vmatpush1.msra.mxu0 0.0
  %1600 = vmatprep.subr.mxu0 0.0
  %1601 = vmatpush1.msra.mxu0 0.0
  %1602 = vmatprep.subr.mxu0 0.0
  %1603 = vmatpush1.msra.mxu0 0.0
  %1604 = vmatprep.subr.mxu0 0.0
  %1605 = vmatpush1.msra.mxu0 0.0
  %1606 = vmatprep.subr.mxu0 0.0
  %1607 = vmatpush1.msra.mxu0 0.0
  %1608 = vmatprep.subr.mxu0 0.0
  %1609 = vmatpush1.msra.mxu0 0.0
  %1610 = vmatprep.subr.mxu0 0.0
  %1611 = vmatpush1.msra.mxu0 0.0
  %1612 = vmatprep.mubr.f32.mxu0 0.0
  %1613 = vmatmul.mubr.f32.gmra.mrb[0].mxu0 %v1539
  %v1614 = vpop.f32.mrb[0].mxu0
  %v1615 = vadd.f32 0.0, %v1614
  %v1616 = vpop.f32.mrb[0].mxu0
  %v1617 = vadd.f32 0.0, %v1616
  %1618 = vdwg.mxu0
  %1619 = vmatprep.subr.mxu0 0.0
  %1620 = vmatpush1.msra.mxu0 %v327
  %1621 = vmatprep.subr.mxu0 0.0
  %1622 = vmatpush1.msra.mxu0 %v330
  %1623 = vmatprep.subr.mxu0 0.0
  %1624 = vmatpush1.msra.mxu0 %v333
  %1625 = vmatprep.subr.mxu0 0.0
  %1626 = vmatpush1.msra.mxu0 %v336
  %1627 = vmatprep.subr.mxu0 0.0
  %1628 = vmatpush1.msra.mxu0 %v339
  %1629 = vmatprep.subr.mxu0 0.0
  %1630 = vmatpush1.msra.mxu0 %v342
  %1631 = vmatprep.subr.mxu0 0.0
  %1632 = vmatpush1.msra.mxu0 %v345
  %1633 = vmatprep.subr.mxu0 0.0
  %1634 = vmatpush1.msra.mxu0 %v348
  %1635 = vmatprep.subr.mxu0 0.0
  %1636 = vmatpush1.msra.mxu0 %v351
  %1637 = vmatprep.subr.mxu0 0.0
  %1638 = vmatpush1.msra.mxu0 %v354
  %1639 = vmatprep.subr.mxu0 0.0
  %1640 = vmatpush1.msra.mxu0 %v357
  %1641 = vmatprep.subr.mxu0 0.0
  %1642 = vmatpush1.msra.mxu0 %v360
  %1643 = vmatprep.subr.mxu0 0.0
  %1644 = vmatpush1.msra.mxu0 %v363
  %1645 = vmatprep.subr.mxu0 0.0
  %1646 = vmatpush1.msra.mxu0 %v366
  %1647 = vmatprep.subr.mxu0 0.0
  %1648 = vmatpush1.msra.mxu0 %v369
  %1649 = vmatprep.subr.mxu0 0.0
  %1650 = vmatpush1.msra.mxu0 %v372
  %1651 = vmatprep.subr.mxu0 0.0
  %1652 = vmatpush1.msra.mxu0 0.0
  %1653 = vmatprep.subr.mxu0 0.0
  %1654 = vmatpush1.msra.mxu0 0.0
  %1655 = vmatprep.subr.mxu0 0.0
  %1656 = vmatpush1.msra.mxu0 0.0
  %1657 = vmatprep.subr.mxu0 0.0
  %1658 = vmatpush1.msra.mxu0 0.0
  %1659 = vmatprep.subr.mxu0 0.0
  %1660 = vmatpush1.msra.mxu0 0.0
  %1661 = vmatprep.subr.mxu0 0.0
  %1662 = vmatpush1.msra.mxu0 0.0
  %1663 = vmatprep.subr.mxu0 0.0
  %1664 = vmatpush1.msra.mxu0 0.0
  %1665 = vmatprep.subr.mxu0 0.0
  %1666 = vmatpush1.msra.mxu0 0.0
  %1667 = vmatprep.subr.mxu0 0.0
  %1668 = vmatpush1.msra.mxu0 0.0
  %1669 = vmatprep.subr.mxu0 0.0
  %1670 = vmatpush1.msra.mxu0 0.0
  %1671 = vmatprep.subr.mxu0 0.0
  %1672 = vmatpush1.msra.mxu0 0.0
  %1673 = vmatprep.subr.mxu0 0.0
  %1674 = vmatpush1.msra.mxu0 0.0
  %1675 = vmatprep.subr.mxu0 0.0
  %1676 = vmatpush1.msra.mxu0 0.0
  %1677 = vmatprep.subr.mxu0 0.0
  %1678 = vmatpush1.msra.mxu0 0.0
  %1679 = vmatprep.subr.mxu0 0.0
  %1680 = vmatpush1.msra.mxu0 0.0
  %1681 = vmatprep.subr.mxu0 0.0
  %1682 = vmatpush1.msra.mxu0 0.0
  %1683 = vmatprep.mubr.f32.mxu0 0.0
  %1684 = vmatmul.mubr.f32.gmra.mrb[0].mxu0 %v1539
  %v1685 = vpop.f32.mrb[0].mxu0
  %v1686 = vadd.f32 0.0, %v1685
  %v1687 = vpop.f32.mrb[0].mxu0
  %1688 = vdwg.mxu0
  %v1689 = vadd.f32 %v1545, %v1615
  %v1690 = vmul.f32 %v1689, 0.5
  %v1691 = vtanh.pop %v1690
  %v1692 = vmul.f32 %v1691, 0.5
  %v1693 = vadd.f32 %v1692, 0.5
  %v1694 = vadd.f32 %v1546, %v1617
  %v1695 = vmul.f32 %v1694, 0.5
  %v1696 = vtanh.pop %v1695
  %v1697 = vmul.f32 %v1696, 0.5
  %v1698 = vadd.f32 %v1697, 0.5
  %v1699 = vadd.f32 %v1686, %v378
  %v1700 = vmul.f32 %v1693, %v1699
  %v1701 = vadd.f32 %v1547, %v1700
  %v1702 = vtanh.pop %v1701
  %v1703 = vsub.f32 %v1539, %v1702
  %v1704 = vmul.f32 %v1698, %v1703
  %v1705 = vadd.f32 %v1702, %v1704
  %s1706 = scalar_lea.vmem %s5, 56
  %1707 = vst [vmem:[%s1706] sm:$0xff] %v1705
  %1708 = vst [vmem:[#allocation2] sm:$0xff] %v1705
  // Predicated region
  $region26: #{seq2seq_encoder_forward.2} parent=0 // pred_check
    %p1709 = pneg %p22
  $region27: #{seq2seq_encoder_forward.2} parent=0 // pred_check_branch
    %1711 = sbr.rel (%p1709) target = $region29
  $region28: #{seq2seq_encoder_forward.2} parent=0 // pred_region
    %1712 = vst [vmem:[%s6] sm:$0xff] %v1705
  $region29: #{seq2seq_encoder_forward.2} parent=0 // pred_fallthru
    _
  // Predicated region
  $region30: #{seq2seq_encoder_forward.2} parent=0 // pred_check
    _
  $region31: #{seq2seq_encoder_forward.2} parent=0 // pred_check_branch
    %1714 = sbr.rel (0) target = $region33
  $region32: #{seq2seq_encoder_forward.2} parent=0 // pred_region
    _
  $region33: #{seq2seq_encoder_forward.2} parent=0 // pred_fallthru
    _
  // Predicated region
  $region34: #{seq2seq_encoder_forward.2} parent=0 // pred_check
    _
  $region35: #{seq2seq_encoder_forward.2} parent=0 // pred_check_branch
    %1716 = sbr.rel (0) target = $region37
  $region36: #{seq2seq_encoder_forward.2} parent=0 // pred_region
    _
  $region37: #{seq2seq_encoder_forward.2} parent=0 // pred_fallthru
    _
  // Predicated region
  $region38: #{seq2seq_encoder_forward.2} parent=0 // pred_check
    _
  $region39: #{seq2seq_encoder_forward.2} parent=0 // pred_check_branch
    %1718 = sbr.rel (0) target = $region41
  $region40: #{seq2seq_encoder_forward.2} parent=0 // pred_region
    _
  $region41: #{seq2seq_encoder_forward.2} parent=0 // pred_fallthru
    _
  // Predicated region
  $region42: #{seq2seq_encoder_forward.2} parent=0 // pred_check
    _
  $region43: #{seq2seq_encoder_forward.2} parent=0 // pred_check_branch
    %1720 = sbr.rel (0) target = $region45
  $region44: #{seq2seq_encoder_forward.2} parent=0 // pred_region
    _
  $region45: #{seq2seq_encoder_forward.2} parent=0 // pred_fallthru
    _

// kernel: seq2seq_encoder_forward.3
$region0: #{seq2seq_encoder_forward.3}
  #allocation0 [shape = 'u32[]', space=smem, size = 0x4, offset = 0x4, fixed_abs, tag = 'smem constant byte address 0x4 - core index']
  #allocation1 [shape = 'u32[144,128]{1,0:T(1,128)}', space=vmem, size = 0x12000, scoped, tag = 'internal scratch']
  #allocation2 [shape = 'f32[8,128]{1,0:T(8,128)}', space=vmem, size = 0x1000, scoped, tag = 'scratch operand']
  #allocation3 [shape = 'f32[64,384]{1,0:T(8,128)}', space=vmem, size = 0x18000, scoped, tag = 'scratch operand']
  %s0 = inlined_call_operand.vmem [shape: f32[64,128], index: 0, kind: input, shape index: {}]
  %s1 = inlined_call_operand.vmem [shape: f32[128,384], index: 1, kind: input, shape index: {}]
  %s2 = inlined_call_operand.vmem [shape: f32[128,384], index: 2, kind: input, shape index: {}]
  %s3 = inlined_call_operand.vmem [shape: f32[1,384], index: 3, kind: input, shape index: {}]
  %s4 = inlined_call_operand.vmem [shape: f32[1,128], index: 4, kind: input, shape index: {}]
  %s5 = inlined_call_operand.vmem [shape: f32[64,128], index: 5, kind: output, shape index: {0}]
  %s6 = inlined_call_operand.vmem [shape: f32[8,128], index: 6, kind: output, shape index: {1}]
  %7 = xla_tuple %s5, %s6
  %s8 = sld [smem:[#allocation0]]
  $region46: #{seq2seq_encoder_forward.3} parent=0
    _
  %s10 = ssub.s32 1, %s8
  %s11 = scalar_select 0, %s10, %s8
  // Predicated region
  $region2: #{seq2seq_encoder_forward.3} parent=0 // pred_check
    _
  $region3: #{seq2seq_encoder_forward.3} parent=0 // pred_check_branch
    %13 = sbr.rel (0) target = $region5
  $region4: #{seq2seq_encoder_forward.3} parent=0 // pred_region
    _
  $region5: #{seq2seq_encoder_forward.3} parent=0 // pred_fallthru
    _
  // Predicated region
  $region6: #{seq2seq_encoder_forward.3} parent=0 // pred_check
    _
  $region7: #{seq2seq_encoder_forward.3} parent=0 // pred_check_branch
    %15 = sbr.rel (0) target = $region9
  $region8: #{seq2seq_encoder_forward.3} parent=0 // pred_region
    _
  $region9: #{seq2seq_encoder_forward.3} parent=0 // pred_fallthru
    _
  // Predicated region
  $region10: #{seq2seq_encoder_forward.3} parent=0 // pred_check
    _
  $region11: #{seq2seq_encoder_forward.3} parent=0 // pred_check_branch
    %17 = sbr.rel (0) target = $region13
  $region12: #{seq2seq_encoder_forward.3} parent=0 // pred_region
    _
  $region13: #{seq2seq_encoder_forward.3} parent=0 // pred_fallthru
    _
  // Predicated region
  $region14: #{seq2seq_encoder_forward.3} parent=0 // pred_check
    _
  $region15: #{seq2seq_encoder_forward.3} parent=0 // pred_check_branch
    %19 = sbr.rel (0) target = $region17
  $region16: #{seq2seq_encoder_forward.3} parent=0 // pred_region
    _
  $region17: #{seq2seq_encoder_forward.3} parent=0 // pred_fallthru
    _
  // Predicated region
  $region18: #{seq2seq_encoder_forward.3} parent=0 // pred_check
    _
  $region19: #{seq2seq_encoder_forward.3} parent=0 // pred_check_branch
    %21 = sbr.rel (0) target = $region21
  $region20: #{seq2seq_encoder_forward.3} parent=0 // pred_region
    _
  $region21: #{seq2seq_encoder_forward.3} parent=0 // pred_fallthru
    _
  %p22 = scmp.eq.s32.totalorder 0, 0
  // Predicated region
  $region22: #{seq2seq_encoder_forward.3} parent=0 // pred_check
    %p23 = pneg %p22
  $region23: #{seq2seq_encoder_forward.3} parent=0 // pred_check_branch
    %25 = sbr.rel (%p23) target = $region25
  $region24: #{seq2seq_encoder_forward.3} parent=0 // pred_region
    %26 = vst [vmem:[#allocation2] sm:$0xff] 0.0
  $region25: #{seq2seq_encoder_forward.3} parent=0 // pred_fallthru
    _
  %v27 = vld [vmem:[%s0] sm:$0xff]
  %v28 = vld [vmem:[%s0 + $0x8] sm:$0xff]
  %v29 = vld [vmem:[%s0 + $0x10] sm:$0xff]
  %v30 = vld [vmem:[%s0 + $0x18] sm:$0xff]
  %v31 = vld [vmem:[%s0 + $0x20] sm:$0xff]
  %v32 = vld [vmem:[%s0 + $0x28] sm:$0xff]
  %v33 = vld [vmem:[%s0 + $0x30] sm:$0xff]
  %v34 = vld [vmem:[%s0 + $0x38] sm:$0xff]
  %v35 = vld [vmem:[%s1] sm:$0xff]
  %v36 = vld [vmem:[%s1 + $0x8] sm:$0xff]
  %v37 = vld [vmem:[%s1 + $0x10] sm:$0xff]
  %v38 = vld [vmem:[%s1 + $0x18] sm:$0xff]
  %v39 = vld [vmem:[%s1 + $0x20] sm:$0xff]
  %v40 = vld [vmem:[%s1 + $0x28] sm:$0xff]
  %v41 = vld [vmem:[%s1 + $0x30] sm:$0xff]
  %v42 = vld [vmem:[%s1 + $0x38] sm:$0xff]
  %v43 = vld [vmem:[%s1 + $0x40] sm:$0xff]
  %v44 = vld [vmem:[%s1 + $0x48] sm:$0xff]
  %v45 = vld [vmem:[%s1 + $0x50] sm:$0xff]
  %v46 = vld [vmem:[%s1 + $0x58] sm:$0xff]
  %v47 = vld [vmem:[%s1 + $0x60] sm:$0xff]
  %v48 = vld [vmem:[%s1 + $0x68] sm:$0xff]
  %v49 = vld [vmem:[%s1 + $0x70] sm:$0xff]
  %v50 = vld [vmem:[%s1 + $0x78] sm:$0xff]
  %v51 = vld [vmem:[%s1 + $0x80] sm:$0xff]
  %v52 = vld [vmem:[%s1 + $0x88] sm:$0xff]
  %v53 = vld [vmem:[%s1 + $0x90] sm:$0xff]
  %v54 = vld [vmem:[%s1 + $0x98] sm:$0xff]
  %v55 = vld [vmem:[%s1 + $0xa0] sm:$0xff]
  %v56 = vld [vmem:[%s1 + $0xa8] sm:$0xff]
  %v57 = vld [vmem:[%s1 + $0xb0] sm:$0xff]
  %v58 = vld [vmem:[%s1 + $0xb8] sm:$0xff]
  %v59 = vld [vmem:[%s1 + $0xc0] sm:$0xff]
  %v60 = vld [vmem:[%s1 + $0xc8] sm:$0xff]
  %v61 = vld [vmem:[%s1 + $0xd0] sm:$0xff]
  %v62 = vld [vmem:[%s1 + $0xd8] sm:$0xff]
  %v63 = vld [vmem:[%s1 + $0xe0] sm:$0xff]
  %v64 = vld [vmem:[%s1 + $0xe8] sm:$0xff]
  %v65 = vld [vmem:[%s1 + $0xf0] sm:$0xff]
  %v66 = vld [vmem:[%s1 + $0xf8] sm:$0xff]
  %v67 = vld [vmem:[%s1 + $0x100] sm:$0xff]
  %v68 = vld [vmem:[%s1 + $0x108] sm:$0xff]
  %v69 = vld [vmem:[%s1 + $0x110] sm:$0xff]
  %v70 = vld [vmem:[%s1 + $0x118] sm:$0xff]
  %v71 = vld [vmem:[%s1 + $0x120] sm:$0xff]
  %v72 = vld [vmem:[%s1 + $0x128] sm:$0xff]
  %v73 = vld [vmem:[%s1 + $0x130] sm:$0xff]
  %v74 = vld [vmem:[%s1 + $0x138] sm:$0xff]
  %v75 = vld [vmem:[%s1 + $0x140] sm:$0xff]
  %v76 = vld [vmem:[%s1 + $0x148] sm:$0xff]
  %v77 = vld [vmem:[%s1 + $0x150] sm:$0xff]
  %v78 = vld [vmem:[%s1 + $0x158] sm:$0xff]
  %v79 = vld [vmem:[%s1 + $0x160] sm:$0xff]
  %v80 = vld [vmem:[%s1 + $0x168] sm:$0xff]
  %v81 = vld [vmem:[%s1 + $0x170] sm:$0xff]
  %v82 = vld [vmem:[%s1 + $0x178] sm:$0xff]
  %v83 = vld [vmem:[%s3] sm:$0x7]
  %v85 = vlaneseq
  %v86 = vshrl.u32 %v85, 7
  %v87 = vsub.s32 0, %v86
  %v88 = vrot.slane %v83, %v87
  %v89 = vlaneseq
  %v90 = vshrl.u32 %v89, 7
  %v91 = vsub.s32 1, %v90
  %v92 = vrot.slane %v83, %v91
  %v93 = vlaneseq
  %v94 = vshrl.u32 %v93, 7
  %v95 = vsub.s32 2, %v94
  %v96 = vrot.slane %v83, %v95
  %100 = vmatprep.subr.mxu0 %v36
  %101 = vmatpush1.msra.mxu0 %v35
  %102 = vmatprep.subr.mxu0 %v39
  %103 = vmatpush1.msra.mxu0 %v38
  %104 = vmatprep.subr.mxu0 %v42
  %105 = vmatpush1.msra.mxu0 %v41
  %106 = vmatprep.subr.mxu0 %v45
  %107 = vmatpush1.msra.mxu0 %v44
  %108 = vmatprep.subr.mxu0 %v48
  %109 = vmatpush1.msra.mxu0 %v47
  %110 = vmatprep.subr.mxu0 %v51
  %111 = vmatpush1.msra.mxu0 %v50
  %112 = vmatprep.subr.mxu0 %v54
  %113 = vmatpush1.msra.mxu0 %v53
  %114 = vmatprep.subr.mxu0 %v57
  %115 = vmatpush1.msra.mxu0 %v56
  %116 = vmatprep.subr.mxu0 %v60
  %117 = vmatpush1.msra.mxu0 %v59
  %118 = vmatprep.subr.mxu0 %v63
  %119 = vmatpush1.msra.mxu0 %v62
  %120 = vmatprep.subr.mxu0 %v66
  %121 = vmatpush1.msra.mxu0 %v65
  %122 = vmatprep.subr.mxu0 %v69
  %123 = vmatpush1.msra.mxu0 %v68
  %124 = vmatprep.subr.mxu0 %v72
  %125 = vmatpush1.msra.mxu0 %v71
  %126 = vmatprep.subr.mxu0 %v75
  %127 = vmatpush1.msra.mxu0 %v74
  %128 = vmatprep.subr.mxu0 %v78
  %129 = vmatpush1.msra.mxu0 %v77
  %130 = vmatprep.subr.mxu0 %v81
  %131 = vmatpush1.msra.mxu0 %v80
  %132 = vmatprep.subr.mxu0 0.0
  %133 = vmatpush1.msra.mxu0 0.0
  %134 = vmatprep.subr.mxu0 0.0
  %135 = vmatpush1.msra.mxu0 0.0
  %136 = vmatprep.subr.mxu0 0.0
  %137 = vmatpush1.msra.mxu0 0.0
  %138 = vmatprep.subr.mxu0 0.0
  %139 = vmatpush1.msra.mxu0 0.0
  %140 = vmatprep.subr.mxu0 0.0
  %141 = vmatpush1.msra.mxu0 0.0
  %142 = vmatprep.subr.mxu0 0.0
  %143 = vmatpush1.msra.mxu0 0.0
  %144 = vmatprep.subr.mxu0 0.0
  %145 = vmatpush1.msra.mxu0 0.0
  %146 = vmatprep.subr.mxu0 0.0
  %147 = vmatpush1.msra.mxu0 0.0
  %148 = vmatprep.subr.mxu0 0.0
  %149 = vmatpush1.msra.mxu0 0.0
  %150 = vmatprep.subr.mxu0 0.0
  %151 = vmatpush1.msra.mxu0 0.0
  %152 = vmatprep.subr.mxu0 0.0
  %153 = vmatpush1.msra.mxu0 0.0
  %154 = vmatprep.subr.mxu0 0.0
  %155 = vmatpush1.msra.mxu0 0.0
  %156 = vmatprep.subr.mxu0 0.0
  %157 = vmatpush1.msra.mxu0 0.0
  %158 = vmatprep.subr.mxu0 0.0
  %159 = vmatpush1.msra.mxu0 0.0
  %160 = vmatprep.subr.mxu0 0.0
  %161 = vmatpush1.msra.mxu0 0.0
  %162 = vmatprep.subr.mxu0 0.0
  %163 = vmatpush1.msra.mxu0 0.0
  %164 = vmatprep.mubr.f32.mxu0 0.0
  %165 = vmatmul.mubr.f32.gmra.mrb[0].mxu0 %v27
  %v166 = vpop.f32.mrb[0].mxu0
  %v167 = vadd.f32 %v88, %v166
  %v168 = vpop.f32.mrb[0].mxu0
  %v169 = vadd.f32 %v92, %v168
  %170 = vmatprep.mubr.f32.mxu0 0.0
  %171 = vmatmul.mubr.f32.gmra.mrb[0].mxu0 %v28
  %v172 = vpop.f32.mrb[0].mxu0
  %v173 = vadd.f32 %v88, %v172
  %v174 = vpop.f32.mrb[0].mxu0
  %v175 = vadd.f32 %v92, %v174
  %176 = vmatprep.mubr.f32.mxu0 0.0
  %177 = vmatmul.mubr.f32.gmra.mrb[0].mxu0 %v29
  %v178 = vpop.f32.mrb[0].mxu0
  %v179 = vadd.f32 %v88, %v178
  %v180 = vpop.f32.mrb[0].mxu0
  %v181 = vadd.f32 %v92, %v180
  %182 = vmatprep.mubr.f32.mxu0 0.0
  %183 = vmatmul.mubr.f32.gmra.mrb[0].mxu0 %v30
  %v184 = vpop.f32.mrb[0].mxu0
  %v185 = vadd.f32 %v88, %v184
  %v186 = vpop.f32.mrb[0].mxu0
  %v187 = vadd.f32 %v92, %v186
  %188 = vmatprep.mubr.f32.mxu0 0.0
  %189 = vmatmul.mubr.f32.gmra.mrb[0].mxu0 %v31
  %v190 = vpop.f32.mrb[0].mxu0
  %v191 = vadd.f32 %v88, %v190
  %v192 = vpop.f32.mrb[0].mxu0
  %v193 = vadd.f32 %v92, %v192
  %194 = vmatprep.mubr.f32.mxu0 0.0
  %195 = vmatmul.mubr.f32.gmra.mrb[0].mxu0 %v32
  %v196 = vpop.f32.mrb[0].mxu0
  %v197 = vadd.f32 %v88, %v196
  %v198 = vpop.f32.mrb[0].mxu0
  %v199 = vadd.f32 %v92, %v198
  %200 = vmatprep.mubr.f32.mxu0 0.0
  %201 = vmatmul.mubr.f32.gmra.mrb[0].mxu0 %v33
  %v202 = vpop.f32.mrb[0].mxu0
  %v203 = vadd.f32 %v88, %v202
  %v204 = vpop.f32.mrb[0].mxu0
  %v205 = vadd.f32 %v92, %v204
  %206 = vmatprep.mubr.f32.mxu0 0.0
  %207 = vmatmul.mubr.f32.gmra.mrb[0].mxu0 %v34
  %v208 = vpop.f32.mrb[0].mxu0
  %v209 = vadd.f32 %v88, %v208
  %v210 = vpop.f32.mrb[0].mxu0
  %v211 = vadd.f32 %v92, %v210
  %212 = vdwg.mxu0
  %213 = vmatprep.subr.mxu0 0.0
  %214 = vmatpush1.msra.mxu0 %v37
  %215 = vmatprep.subr.mxu0 0.0
  %216 = vmatpush1.msra.mxu0 %v40
  %217 = vmatprep.subr.mxu0 0.0
  %218 = vmatpush1.msra.mxu0 %v43
  %219 = vmatprep.subr.mxu0 0.0
  %220 = vmatpush1.msra.mxu0 %v46
  %221 = vmatprep.subr.mxu0 0.0
  %222 = vmatpush1.msra.mxu0 %v49
  %223 = vmatprep.subr.mxu0 0.0
  %224 = vmatpush1.msra.mxu0 %v52
  %225 = vmatprep.subr.mxu0 0.0
  %226 = vmatpush1.msra.mxu0 %v55
  %227 = vmatprep.subr.mxu0 0.0
  %228 = vmatpush1.msra.mxu0 %v58
  %229 = vmatprep.subr.mxu0 0.0
  %230 = vmatpush1.msra.mxu0 %v61
  %231 = vmatprep.subr.mxu0 0.0
  %232 = vmatpush1.msra.mxu0 %v64
  %233 = vmatprep.subr.mxu0 0.0
  %234 = vmatpush1.msra.mxu0 %v67
  %235 = vmatprep.subr.mxu0 0.0
  %236 = vmatpush1.msra.mxu0 %v70
  %237 = vmatprep.subr.mxu0 0.0
  %238 = vmatpush1.msra.mxu0 %v73
  %239 = vmatprep.subr.mxu0 0.0
  %240 = vmatpush1.msra.mxu0 %v76
  %241 = vmatprep.subr.mxu0 0.0
  %242 = vmatpush1.msra.mxu0 %v79
  %243 = vmatprep.subr.mxu0 0.0
  %244 = vmatpush1.msra.mxu0 %v82
  %245 = vmatprep.subr.mxu0 0.0
  %246 = vmatpush1.msra.mxu0 0.0
  %247 = vmatprep.subr.mxu0 0.0
  %248 = vmatpush1.msra.mxu0 0.0
  %249 = vmatprep.subr.mxu0 0.0
  %250 = vmatpush1.msra.mxu0 0.0
  %251 = vmatprep.subr.mxu0 0.0
  %252 = vmatpush1.msra.mxu0 0.0
  %253 = vmatprep.subr.mxu0 0.0
  %254 = vmatpush1.msra.mxu0 0.0
  %255 = vmatprep.subr.mxu0 0.0
  %256 = vmatpush1.msra.mxu0 0.0
  %257 = vmatprep.subr.mxu0 0.0
  %258 = vmatpush1.msra.mxu0 0.0
  %259 = vmatprep.subr.mxu0 0.0
  %260 = vmatpush1.msra.mxu0 0.0
  %261 = vmatprep.subr.mxu0 0.0
  %262 = vmatpush1.msra.mxu0 0.0
  %263 = vmatprep.subr.mxu0 0.0
  %264 = vmatpush1.msra.mxu0 0.0
  %265 = vmatprep.subr.mxu0 0.0
  %266 = vmatpush1.msra.mxu0 0.0
  %267 = vmatprep.subr.mxu0 0.0
  %268 = vmatpush1.msra.mxu0 0.0
  %269 = vmatprep.subr.mxu0 0.0
  %270 = vmatpush1.msra.mxu0 0.0
  %271 = vmatprep.subr.mxu0 0.0
  %272 = vmatpush1.msra.mxu0 0.0
  %273 = vmatprep.subr.mxu0 0.0
  %274 = vmatpush1.msra.mxu0 0.0
  %275 = vmatprep.subr.mxu0 0.0
  %276 = vmatpush1.msra.mxu0 0.0
  %277 = vmatprep.mubr.f32.mxu0 0.0
  %278 = vmatmul.mubr.f32.gmra.mrb[0].mxu0 %v27
  %v279 = vpop.f32.mrb[0].mxu0
  %v280 = vadd.f32 %v96, %v279
  %v281 = vpop.f32.mrb[0].mxu0
  %282 = vmatprep.mubr.f32.mxu0 0.0
  %283 = vmatmul.mubr.f32.gmra.mrb[0].mxu0 %v28
  %v284 = vpop.f32.mrb[0].mxu0
  %v285 = vadd.f32 %v96, %v284
  %v286 = vpop.f32.mrb[0].mxu0
  %287 = vmatprep.mubr.f32.mxu0 0.0
  %288 = vmatmul.mubr.f32.gmra.mrb[0].mxu0 %v29
  %v289 = vpop.f32.mrb[0].mxu0
  %v290 = vadd.f32 %v96, %v289
  %v291 = vpop.f32.mrb[0].mxu0
  %292 = vmatprep.mubr.f32.mxu0 0.0
  %293 = vmatmul.mubr.f32.gmra.mrb[0].mxu0 %v30
  %v294 = vpop.f32.mrb[0].mxu0
  %v295 = vadd.f32 %v96, %v294
  %v296 = vpop.f32.mrb[0].mxu0
  %297 = vmatprep.mubr.f32.mxu0 0.0
  %298 = vmatmul.mubr.f32.gmra.mrb[0].mxu0 %v31
  %v299 = vpop.f32.mrb[0].mxu0
  %v300 = vadd.f32 %v96, %v299
  %v301 = vpop.f32.mrb[0].mxu0
  %302 = vmatprep.mubr.f32.mxu0 0.0
  %303 = vmatmul.mubr.f32.gmra.mrb[0].mxu0 %v32
  %v304 = vpop.f32.mrb[0].mxu0
  %v305 = vadd.f32 %v96, %v304
  %v306 = vpop.f32.mrb[0].mxu0
  %307 = vmatprep.mubr.f32.mxu0 0.0
  %308 = vmatmul.mubr.f32.gmra.mrb[0].mxu0 %v33
  %v309 = vpop.f32.mrb[0].mxu0
  %v310 = vadd.f32 %v96, %v309
  %v311 = vpop.f32.mrb[0].mxu0
  %312 = vmatprep.mubr.f32.mxu0 0.0
  %313 = vmatmul.mubr.f32.gmra.mrb[0].mxu0 %v34
  %v314 = vpop.f32.mrb[0].mxu0
  %v315 = vadd.f32 %v96, %v314
  %v316 = vpop.f32.mrb[0].mxu0
  %317 = vdwg.mxu0
  %318 = vst [vmem:[#allocation3] sm:$0xff] %v167
  %319 = vst [vmem:[#allocation3 + $0x8] sm:$0xff] %v169
  %320 = vst [vmem:[#allocation3 + $0x10] sm:$0xff] %v280
  %321 = vst [vmem:[#allocation3 + $0x18] sm:$0xff] %v173
  %322 = vst [vmem:[#allocation3 + $0x20] sm:$0xff] %v175
  %323 = vst [vmem:[#allocation3 + $0x28] sm:$0xff] %v285
  %324 = vst [vmem:[#allocation3 + $0x30] sm:$0xff] %v179
  %325 = vst [vmem:[#allocation3 + $0x38] sm:$0xff] %v181
  %326 = vst [vmem:[#allocation3 + $0x40] sm:$0xff] %v290
  %327 = vst [vmem:[#allocation3 + $0x48] sm:$0xff] %v185
  %328 = vst [vmem:[#allocation3 + $0x50] sm:$0xff] %v187
  %329 = vst [vmem:[#allocation3 + $0x58] sm:$0xff] %v295
  %330 = vst [vmem:[#allocation3 + $0x60] sm:$0xff] %v191
  %331 = vst [vmem:[#allocation3 + $0x68] sm:$0xff] %v193
  %332 = vst [vmem:[#allocation3 + $0x70] sm:$0xff] %v300
  %333 = vst [vmem:[#allocation3 + $0x78] sm:$0xff] %v197
  %334 = vst [vmem:[#allocation3 + $0x80] sm:$0xff] %v199
  %335 = vst [vmem:[#allocation3 + $0x88] sm:$0xff] %v305
  %336 = vst [vmem:[#allocation3 + $0x90] sm:$0xff] %v203
  %337 = vst [vmem:[#allocation3 + $0x98] sm:$0xff] %v205
  %338 = vst [vmem:[#allocation3 + $0xa0] sm:$0xff] %v310
  %339 = vst [vmem:[#allocation3 + $0xa8] sm:$0xff] %v209
  %340 = vst [vmem:[#allocation3 + $0xb0] sm:$0xff] %v211
  %341 = vst [vmem:[#allocation3 + $0xb8] sm:$0xff] %v315
  %v342 = vld [vmem:[%s2] sm:$0xff]
  %v343 = vld [vmem:[%s2 + $0x8] sm:$0xff]
  %v344 = vld [vmem:[%s2 + $0x10] sm:$0xff]
  %v345 = vld [vmem:[%s2 + $0x18] sm:$0xff]
  %v346 = vld [vmem:[%s2 + $0x20] sm:$0xff]
  %v347 = vld [vmem:[%s2 + $0x28] sm:$0xff]
  %v348 = vld [vmem:[%s2 + $0x30] sm:$0xff]
  %v349 = vld [vmem:[%s2 + $0x38] sm:$0xff]
  %v350 = vld [vmem:[%s2 + $0x40] sm:$0xff]
  %v351 = vld [vmem:[%s2 + $0x48] sm:$0xff]
  %v352 = vld [vmem:[%s2 + $0x50] sm:$0xff]
  %v353 = vld [vmem:[%s2 + $0x58] sm:$0xff]
  %v354 = vld [vmem:[%s2 + $0x60] sm:$0xff]
  %v355 = vld [vmem:[%s2 + $0x68] sm:$0xff]
  %v356 = vld [vmem:[%s2 + $0x70] sm:$0xff]
  %v357 = vld [vmem:[%s2 + $0x78] sm:$0xff]
  %v358 = vld [vmem:[%s2 + $0x80] sm:$0xff]
  %v359 = vld [vmem:[%s2 + $0x88] sm:$0xff]
  %v360 = vld [vmem:[%s2 + $0x90] sm:$0xff]
  %v361 = vld [vmem:[%s2 + $0x98] sm:$0xff]
  %v362 = vld [vmem:[%s2 + $0xa0] sm:$0xff]
  %v363 = vld [vmem:[%s2 + $0xa8] sm:$0xff]
  %v364 = vld [vmem:[%s2 + $0xb0] sm:$0xff]
  %v365 = vld [vmem:[%s2 + $0xb8] sm:$0xff]
  %v366 = vld [vmem:[%s2 + $0xc0] sm:$0xff]
  %v367 = vld [vmem:[%s2 + $0xc8] sm:$0xff]
  %v368 = vld [vmem:[%s2 + $0xd0] sm:$0xff]
  %v369 = vld [vmem:[%s2 + $0xd8] sm:$0xff]
  %v370 = vld [vmem:[%s2 + $0xe0] sm:$0xff]
  %v371 = vld [vmem:[%s2 + $0xe8] sm:$0xff]
  %v372 = vld [vmem:[%s2 + $0xf0] sm:$0xff]
  %v373 = vld [vmem:[%s2 + $0xf8] sm:$0xff]
  %v374 = vld [vmem:[%s2 + $0x100] sm:$0xff]
  %v375 = vld [vmem:[%s2 + $0x108] sm:$0xff]
  %v376 = vld [vmem:[%s2 + $0x110] sm:$0xff]
  %v377 = vld [vmem:[%s2 + $0x118] sm:$0xff]
  %v378 = vld [vmem:[%s2 + $0x120] sm:$0xff]
  %v379 = vld [vmem:[%s2 + $0x128] sm:$0xff]
  %v380 = vld [vmem:[%s2 + $0x130] sm:$0xff]
  %v381 = vld [vmem:[%s2 + $0x138] sm:$0xff]
  %v382 = vld [vmem:[%s2 + $0x140] sm:$0xff]
  %v383 = vld [vmem:[%s2 + $0x148] sm:$0xff]
  %v384 = vld [vmem:[%s2 + $0x150] sm:$0xff]
  %v385 = vld [vmem:[%s2 + $0x158] sm:$0xff]
  %v386 = vld [vmem:[%s2 + $0x160] sm:$0xff]
  %v387 = vld [vmem:[%s2 + $0x168] sm:$0xff]
  %v388 = vld [vmem:[%s2 + $0x170] sm:$0xff]
  %v389 = vld [vmem:[%s2 + $0x178] sm:$0xff]
  %v390 = vld [vmem:[%s4] sm:$0x1]
  %v392 = vlaneseq
  %v393 = vshrl.u32 %v392, 7
  %v394 = vsub.s32 0, %v393
  %v395 = vrot.slane %v390, %v394
  %v397 = vld [vmem:[#allocation2] sm:$0xff]
  %s398 = smul.u32 0, 3
  %s399 = smul.addr %s398, 8
  %s400 = scalar_lea.vmem [#allocation3], %s399
  %v401 = vld [vmem:[%s400] sm:$0xff]
  %v402 = vld [vmem:[%s400 + $0x8] sm:$0xff]
  %v403 = vld [vmem:[%s400 + $0x10] sm:$0xff]
  %404 = vmatprep.subr.mxu0 %v343
  %405 = vmatpush1.msra.mxu0 %v342
  %406 = vmatprep.subr.mxu0 %v346
  %407 = vmatpush1.msra.mxu0 %v345
  %408 = vmatprep.subr.mxu0 %v349
  %409 = vmatpush1.msra.mxu0 %v348
  %410 = vmatprep.subr.mxu0 %v352
  %411 = vmatpush1.msra.mxu0 %v351
  %412 = vmatprep.subr.mxu0 %v355
  %413 = vmatpush1.msra.mxu0 %v354
  %414 = vmatprep.subr.mxu0 %v358
  %415 = vmatpush1.msra.mxu0 %v357
  %416 = vmatprep.subr.mxu0 %v361
  %417 = vmatpush1.msra.mxu0 %v360
  %418 = vmatprep.subr.mxu0 %v364
  %419 = vmatpush1.msra.mxu0 %v363
  %420 = vmatprep.subr.mxu0 %v367
  %421 = vmatpush1.msra.mxu0 %v366
  %422 = vmatprep.subr.mxu0 %v370
  %423 = vmatpush1.msra.mxu0 %v369
  %424 = vmatprep.subr.mxu0 %v373
  %425 = vmatpush1.msra.mxu0 %v372
  %426 = vmatprep.subr.mxu0 %v376
  %427 = vmatpush1.msra.mxu0 %v375
  %428 = vmatprep.subr.mxu0 %v379
  %429 = vmatpush1.msra.mxu0 %v378
  %430 = vmatprep.subr.mxu0 %v382
  %431 = vmatpush1.msra.mxu0 %v381
  %432 = vmatprep.subr.mxu0 %v385
  %433 = vmatpush1.msra.mxu0 %v384
  %434 = vmatprep.subr.mxu0 %v388
  %435 = vmatpush1.msra.mxu0 %v387
  %436 = vmatprep.subr.mxu0 0.0
  %437 = vmatpush1.msra.mxu0 0.0
  %438 = vmatprep.subr.mxu0 0.0
  %439 = vmatpush1.msra.mxu0 0.0
  %440 = vmatprep.subr.mxu0 0.0
  %441 = vmatpush1.msra.mxu0 0.0
  %442 = vmatprep.subr.mxu0 0.0
  %443 = vmatpush1.msra.mxu0 0.0
  %444 = vmatprep.subr.mxu0 0.0
  %445 = vmatpush1.msra.mxu0 0.0
  %446 = vmatprep.subr.mxu0 0.0
  %447 = vmatpush1.msra.mxu0 0.0
  %448 = vmatprep.subr.mxu0 0.0
  %449 = vmatpush1.msra.mxu0 0.0
  %450 = vmatprep.subr.mxu0 0.0
  %451 = vmatpush1.msra.mxu0 0.0
  %452 = vmatprep.subr.mxu0 0.0
  %453 = vmatpush1.msra.mxu0 0.0
  %454 = vmatprep.subr.mxu0 0.0
  %455 = vmatpush1.msra.mxu0 0.0
  %456 = vmatprep.subr.mxu0 0.0
  %457 = vmatpush1.msra.mxu0 0.0
  %458 = vmatprep.subr.mxu0 0.0
  %459 = vmatpush1.msra.mxu0 0.0
  %460 = vmatprep.subr.mxu0 0.0
  %461 = vmatpush1.msra.mxu0 0.0
  %462 = vmatprep.subr.mxu0 0.0
  %463 = vmatpush1.msra.mxu0 0.0
  %464 = vmatprep.subr.mxu0 0.0
  %465 = vmatpush1.msra.mxu0 0.0
  %466 = vmatprep.subr.mxu0 0.0
  %467 = vmatpush1.msra.mxu0 0.0
  %468 = vmatprep.mubr.f32.mxu0 0.0
  %469 = vmatmul.mubr.f32.gmra.mrb[0].mxu0 %v397
  %v470 = vpop.f32.mrb[0].mxu0
  %v471 = vadd.f32 0.0, %v470
  %v472 = vpop.f32.mrb[0].mxu0
  %v473 = vadd.f32 0.0, %v472
  %474 = vdwg.mxu0
  %475 = vmatprep.subr.mxu0 0.0
  %476 = vmatpush1.msra.mxu0 %v344
  %477 = vmatprep.subr.mxu0 0.0
  %478 = vmatpush1.msra.mxu0 %v347
  %479 = vmatprep.subr.mxu0 0.0
  %480 = vmatpush1.msra.mxu0 %v350
  %481 = vmatprep.subr.mxu0 0.0
  %482 = vmatpush1.msra.mxu0 %v353
  %483 = vmatprep.subr.mxu0 0.0
  %484 = vmatpush1.msra.mxu0 %v356
  %485 = vmatprep.subr.mxu0 0.0
  %486 = vmatpush1.msra.mxu0 %v359
  %487 = vmatprep.subr.mxu0 0.0
  %488 = vmatpush1.msra.mxu0 %v362
  %489 = vmatprep.subr.mxu0 0.0
  %490 = vmatpush1.msra.mxu0 %v365
  %491 = vmatprep.subr.mxu0 0.0
  %492 = vmatpush1.msra.mxu0 %v368
  %493 = vmatprep.subr.mxu0 0.0
  %494 = vmatpush1.msra.mxu0 %v371
  %495 = vmatprep.subr.mxu0 0.0
  %496 = vmatpush1.msra.mxu0 %v374
  %497 = vmatprep.subr.mxu0 0.0
  %498 = vmatpush1.msra.mxu0 %v377
  %499 = vmatprep.subr.mxu0 0.0
  %500 = vmatpush1.msra.mxu0 %v380
  %501 = vmatprep.subr.mxu0 0.0
  %502 = vmatpush1.msra.mxu0 %v383
  %503 = vmatprep.subr.mxu0 0.0
  %504 = vmatpush1.msra.mxu0 %v386
  %505 = vmatprep.subr.mxu0 0.0
  %506 = vmatpush1.msra.mxu0 %v389
  %507 = vmatprep.subr.mxu0 0.0
  %508 = vmatpush1.msra.mxu0 0.0
  %509 = vmatprep.subr.mxu0 0.0
  %510 = vmatpush1.msra.mxu0 0.0
  %511 = vmatprep.subr.mxu0 0.0
  %512 = vmatpush1.msra.mxu0 0.0
  %513 = vmatprep.subr.mxu0 0.0
  %514 = vmatpush1.msra.mxu0 0.0
  %515 = vmatprep.subr.mxu0 0.0
  %516 = vmatpush1.msra.mxu0 0.0
  %517 = vmatprep.subr.mxu0 0.0
  %518 = vmatpush1.msra.mxu0 0.0
  %519 = vmatprep.subr.mxu0 0.0
  %520 = vmatpush1.msra.mxu0 0.0
  %521 = vmatprep.subr.mxu0 0.0
  %522 = vmatpush1.msra.mxu0 0.0
  %523 = vmatprep.subr.mxu0 0.0
  %524 = vmatpush1.msra.mxu0 0.0
  %525 = vmatprep.subr.mxu0 0.0
  %526 = vmatpush1.msra.mxu0 0.0
  %527 = vmatprep.subr.mxu0 0.0
  %528 = vmatpush1.msra.mxu0 0.0
  %529 = vmatprep.subr.mxu0 0.0
  %530 = vmatpush1.msra.mxu0 0.0
  %531 = vmatprep.subr.mxu0 0.0
  %532 = vmatpush1.msra.mxu0 0.0
  %533 = vmatprep.subr.mxu0 0.0
  %534 = vmatpush1.msra.mxu0 0.0
  %535 = vmatprep.subr.mxu0 0.0
  %536 = vmatpush1.msra.mxu0 0.0
  %537 = vmatprep.subr.mxu0 0.0
  %538 = vmatpush1.msra.mxu0 0.0
  %539 = vmatprep.mubr.f32.mxu0 0.0
  %540 = vmatmul.mubr.f32.gmra.mrb[0].mxu0 %v397
  %v541 = vpop.f32.mrb[0].mxu0
  %v542 = vadd.f32 0.0, %v541
  %v543 = vpop.f32.mrb[0].mxu0
  %544 = vdwg.mxu0
  %v545 = vadd.f32 %v401, %v471
  %v546 = vmul.f32 %v545, 0.5
  %v547 = vtanh.pop %v546
  %v548 = vmul.f32 %v547, 0.5
  %v549 = vadd.f32 %v548, 0.5
  %v550 = vadd.f32 %v402, %v473
  %v551 = vmul.f32 %v550, 0.5
  %v552 = vtanh.pop %v551
  %v553 = vmul.f32 %v552, 0.5
  %v554 = vadd.f32 %v553, 0.5
  %v555 = vadd.f32 %v542, %v395
  %v556 = vmul.f32 %v549, %v555
  %v557 = vadd.f32 %v403, %v556
  %v558 = vtanh.pop %v557
  %v559 = vsub.f32 %v397, %v558
  %v560 = vmul.f32 %v554, %v559
  %v561 = vadd.f32 %v558, %v560
  %562 = vst [vmem:[%s5] sm:$0xff] %v561
  %s563 = smul.u32 1, 3
  %s564 = smul.addr %s563, 8
  %s565 = scalar_lea.vmem [#allocation3], %s564
  %v566 = vld [vmem:[%s565] sm:$0xff]
  %v567 = vld [vmem:[%s565 + $0x8] sm:$0xff]
  %v568 = vld [vmem:[%s565 + $0x10] sm:$0xff]
  %569 = vmatprep.subr.mxu0 %v343
  %570 = vmatpush1.msra.mxu0 %v342
  %571 = vmatprep.subr.mxu0 %v346
  %572 = vmatpush1.msra.mxu0 %v345
  %573 = vmatprep.subr.mxu0 %v349
  %574 = vmatpush1.msra.mxu0 %v348
  %575 = vmatprep.subr.mxu0 %v352
  %576 = vmatpush1.msra.mxu0 %v351
  %577 = vmatprep.subr.mxu0 %v355
  %578 = vmatpush1.msra.mxu0 %v354
  %579 = vmatprep.subr.mxu0 %v358
  %580 = vmatpush1.msra.mxu0 %v357
  %581 = vmatprep.subr.mxu0 %v361
  %582 = vmatpush1.msra.mxu0 %v360
  %583 = vmatprep.subr.mxu0 %v364
  %584 = vmatpush1.msra.mxu0 %v363
  %585 = vmatprep.subr.mxu0 %v367
  %586 = vmatpush1.msra.mxu0 %v366
  %587 = vmatprep.subr.mxu0 %v370
  %588 = vmatpush1.msra.mxu0 %v369
  %589 = vmatprep.subr.mxu0 %v373
  %590 = vmatpush1.msra.mxu0 %v372
  %591 = vmatprep.subr.mxu0 %v376
  %592 = vmatpush1.msra.mxu0 %v375
  %593 = vmatprep.subr.mxu0 %v379
  %594 = vmatpush1.msra.mxu0 %v378
  %595 = vmatprep.subr.mxu0 %v382
  %596 = vmatpush1.msra.mxu0 %v381
  %597 = vmatprep.subr.mxu0 %v385
  %598 = vmatpush1.msra.mxu0 %v384
  %599 = vmatprep.subr.mxu0 %v388
  %600 = vmatpush1.msra.mxu0 %v387
  %601 = vmatprep.subr.mxu0 0.0
  %602 = vmatpush1.msra.mxu0 0.0
  %603 = vmatprep.subr.mxu0 0.0
  %604 = vmatpush1.msra.mxu0 0.0
  %605 = vmatprep.subr.mxu0 0.0
  %606 = vmatpush1.msra.mxu0 0.0
  %607 = vmatprep.subr.mxu0 0.0
  %608 = vmatpush1.msra.mxu0 0.0
  %609 = vmatprep.subr.mxu0 0.0
  %610 = vmatpush1.msra.mxu0 0.0
  %611 = vmatprep.subr.mxu0 0.0
  %612 = vmatpush1.msra.mxu0 0.0
  %613 = vmatprep.subr.mxu0 0.0
  %614 = vmatpush1.msra.mxu0 0.0
  %615 = vmatprep.subr.mxu0 0.0
  %616 = vmatpush1.msra.mxu0 0.0
  %617 = vmatprep.subr.mxu0 0.0
  %618 = vmatpush1.msra.mxu0 0.0
  %619 = vmatprep.subr.mxu0 0.0
  %620 = vmatpush1.msra.mxu0 0.0
  %621 = vmatprep.subr.mxu0 0.0
  %622 = vmatpush1.msra.mxu0 0.0
  %623 = vmatprep.subr.mxu0 0.0
  %624 = vmatpush1.msra.mxu0 0.0
  %625 = vmatprep.subr.mxu0 0.0
  %626 = vmatpush1.msra.mxu0 0.0
  %627 = vmatprep.subr.mxu0 0.0
  %628 = vmatpush1.msra.mxu0 0.0
  %629 = vmatprep.subr.mxu0 0.0
  %630 = vmatpush1.msra.mxu0 0.0
  %631 = vmatprep.subr.mxu0 0.0
  %632 = vmatpush1.msra.mxu0 0.0
  %633 = vmatprep.mubr.f32.mxu0 0.0
  %634 = vmatmul.mubr.f32.gmra.mrb[0].mxu0 %v561
  %v635 = vpop.f32.mrb[0].mxu0
  %v636 = vadd.f32 0.0, %v635
  %v637 = vpop.f32.mrb[0].mxu0
  %v638 = vadd.f32 0.0, %v637
  %639 = vdwg.mxu0
  %640 = vmatprep.subr.mxu0 0.0
  %641 = vmatpush1.msra.mxu0 %v344
  %642 = vmatprep.subr.mxu0 0.0
  %643 = vmatpush1.msra.mxu0 %v347
  %644 = vmatprep.subr.mxu0 0.0
  %645 = vmatpush1.msra.mxu0 %v350
  %646 = vmatprep.subr.mxu0 0.0
  %647 = vmatpush1.msra.mxu0 %v353
  %648 = vmatprep.subr.mxu0 0.0
  %649 = vmatpush1.msra.mxu0 %v356
  %650 = vmatprep.subr.mxu0 0.0
  %651 = vmatpush1.msra.mxu0 %v359
  %652 = vmatprep.subr.mxu0 0.0
  %653 = vmatpush1.msra.mxu0 %v362
  %654 = vmatprep.subr.mxu0 0.0
  %655 = vmatpush1.msra.mxu0 %v365
  %656 = vmatprep.subr.mxu0 0.0
  %657 = vmatpush1.msra.mxu0 %v368
  %658 = vmatprep.subr.mxu0 0.0
  %659 = vmatpush1.msra.mxu0 %v371
  %660 = vmatprep.subr.mxu0 0.0
  %661 = vmatpush1.msra.mxu0 %v374
  %662 = vmatprep.subr.mxu0 0.0
  %663 = vmatpush1.msra.mxu0 %v377
  %664 = vmatprep.subr.mxu0 0.0
  %665 = vmatpush1.msra.mxu0 %v380
  %666 = vmatprep.subr.mxu0 0.0
  %667 = vmatpush1.msra.mxu0 %v383
  %668 = vmatprep.subr.mxu0 0.0
  %669 = vmatpush1.msra.mxu0 %v386
  %670 = vmatprep.subr.mxu0 0.0
  %671 = vmatpush1.msra.mxu0 %v389
  %672 = vmatprep.subr.mxu0 0.0
  %673 = vmatpush1.msra.mxu0 0.0
  %674 = vmatprep.subr.mxu0 0.0
  %675 = vmatpush1.msra.mxu0 0.0
  %676 = vmatprep.subr.mxu0 0.0
  %677 = vmatpush1.msra.mxu0 0.0
  %678 = vmatprep.subr.mxu0 0.0
  %679 = vmatpush1.msra.mxu0 0.0
  %680 = vmatprep.subr.mxu0 0.0
  %681 = vmatpush1.msra.mxu0 0.0
  %682 = vmatprep.subr.mxu0 0.0
  %683 = vmatpush1.msra.mxu0 0.0
  %684 = vmatprep.subr.mxu0 0.0
  %685 = vmatpush1.msra.mxu0 0.0
  %686 = vmatprep.subr.mxu0 0.0
  %687 = vmatpush1.msra.mxu0 0.0
  %688 = vmatprep.subr.mxu0 0.0
  %689 = vmatpush1.msra.mxu0 0.0
  %690 = vmatprep.subr.mxu0 0.0
  %691 = vmatpush1.msra.mxu0 0.0
  %692 = vmatprep.subr.mxu0 0.0
  %693 = vmatpush1.msra.mxu0 0.0
  %694 = vmatprep.subr.mxu0 0.0
  %695 = vmatpush1.msra.mxu0 0.0
  %696 = vmatprep.subr.mxu0 0.0
  %697 = vmatpush1.msra.mxu0 0.0
  %698 = vmatprep.subr.mxu0 0.0
  %699 = vmatpush1.msra.mxu0 0.0
  %700 = vmatprep.subr.mxu0 0.0
  %701 = vmatpush1.msra.mxu0 0.0
  %702 = vmatprep.subr.mxu0 0.0
  %703 = vmatpush1.msra.mxu0 0.0
  %704 = vmatprep.mubr.f32.mxu0 0.0
  %705 = vmatmul.mubr.f32.gmra.mrb[0].mxu0 %v561
  %v706 = vpop.f32.mrb[0].mxu0
  %v707 = vadd.f32 0.0, %v706
  %v708 = vpop.f32.mrb[0].mxu0
  %709 = vdwg.mxu0
  %v710 = vadd.f32 %v566, %v636
  %v711 = vmul.f32 %v710, 0.5
  %v712 = vtanh.pop %v711
  %v713 = vmul.f32 %v712, 0.5
  %v714 = vadd.f32 %v713, 0.5
  %v715 = vadd.f32 %v567, %v638
  %v716 = vmul.f32 %v715, 0.5
  %v717 = vtanh.pop %v716
  %v718 = vmul.f32 %v717, 0.5
  %v719 = vadd.f32 %v718, 0.5
  %v720 = vadd.f32 %v707, %v395
  %v721 = vmul.f32 %v714, %v720
  %v722 = vadd.f32 %v568, %v721
  %v723 = vtanh.pop %v722
  %v724 = vsub.f32 %v561, %v723
  %v725 = vmul.f32 %v719, %v724
  %v726 = vadd.f32 %v723, %v725
  %s727 = scalar_lea.vmem %s5, 8
  %728 = vst [vmem:[%s727] sm:$0xff] %v726
  %s729 = smul.u32 2, 3
  %s730 = smul.addr %s729, 8
  %s731 = scalar_lea.vmem [#allocation3], %s730
  %v732 = vld [vmem:[%s731] sm:$0xff]
  %v733 = vld [vmem:[%s731 + $0x8] sm:$0xff]
  %v734 = vld [vmem:[%s731 + $0x10] sm:$0xff]
  %735 = vmatprep.subr.mxu0 %v343
  %736 = vmatpush1.msra.mxu0 %v342
  %737 = vmatprep.subr.mxu0 %v346
  %738 = vmatpush1.msra.mxu0 %v345
  %739 = vmatprep.subr.mxu0 %v349
  %740 = vmatpush1.msra.mxu0 %v348
  %741 = vmatprep.subr.mxu0 %v352
  %742 = vmatpush1.msra.mxu0 %v351
  %743 = vmatprep.subr.mxu0 %v355
  %744 = vmatpush1.msra.mxu0 %v354
  %745 = vmatprep.subr.mxu0 %v358
  %746 = vmatpush1.msra.mxu0 %v357
  %747 = vmatprep.subr.mxu0 %v361
  %748 = vmatpush1.msra.mxu0 %v360
  %749 = vmatprep.subr.mxu0 %v364
  %750 = vmatpush1.msra.mxu0 %v363
  %751 = vmatprep.subr.mxu0 %v367
  %752 = vmatpush1.msra.mxu0 %v366
  %753 = vmatprep.subr.mxu0 %v370
  %754 = vmatpush1.msra.mxu0 %v369
  %755 = vmatprep.subr.mxu0 %v373
  %756 = vmatpush1.msra.mxu0 %v372
  %757 = vmatprep.subr.mxu0 %v376
  %758 = vmatpush1.msra.mxu0 %v375
  %759 = vmatprep.subr.mxu0 %v379
  %760 = vmatpush1.msra.mxu0 %v378
  %761 = vmatprep.subr.mxu0 %v382
  %762 = vmatpush1.msra.mxu0 %v381
  %763 = vmatprep.subr.mxu0 %v385
  %764 = vmatpush1.msra.mxu0 %v384
  %765 = vmatprep.subr.mxu0 %v388
  %766 = vmatpush1.msra.mxu0 %v387
  %767 = vmatprep.subr.mxu0 0.0
  %768 = vmatpush1.msra.mxu0 0.0
  %769 = vmatprep.subr.mxu0 0.0
  %770 = vmatpush1.msra.mxu0 0.0
  %771 = vmatprep.subr.mxu0 0.0
  %772 = vmatpush1.msra.mxu0 0.0
  %773 = vmatprep.subr.mxu0 0.0
  %774 = vmatpush1.msra.mxu0 0.0
  %775 = vmatprep.subr.mxu0 0.0
  %776 = vmatpush1.msra.mxu0 0.0
  %777 = vmatprep.subr.mxu0 0.0
  %778 = vmatpush1.msra.mxu0 0.0
  %779 = vmatprep.subr.mxu0 0.0
  %780 = vmatpush1.msra.mxu0 0.0
  %781 = vmatprep.subr.mxu0 0.0
  %782 = vmatpush1.msra.mxu0 0.0
  %783 = vmatprep.subr.mxu0 0.0
  %784 = vmatpush1.msra.mxu0 0.0
  %785 = vmatprep.subr.mxu0 0.0
  %786 = vmatpush1.msra.mxu0 0.0
  %787 = vmatprep.subr.mxu0 0.0
  %788 = vmatpush1.msra.mxu0 0.0
  %789 = vmatprep.subr.mxu0 0.0
  %790 = vmatpush1.msra.mxu0 0.0
  %791 = vmatprep.subr.mxu0 0.0
  %792 = vmatpush1.msra.mxu0 0.0
  %793 = vmatprep.subr.mxu0 0.0
  %794 = vmatpush1.msra.mxu0 0.0
  %795 = vmatprep.subr.mxu0 0.0
  %796 = vmatpush1.msra.mxu0 0.0
  %797 = vmatprep.subr.mxu0 0.0
  %798 = vmatpush1.msra.mxu0 0.0
  %799 = vmatprep.mubr.f32.mxu0 0.0
  %800 = vmatmul.mubr.f32.gmra.mrb[0].mxu0 %v726
  %v801 = vpop.f32.mrb[0].mxu0
  %v802 = vadd.f32 0.0, %v801
  %v803 = vpop.f32.mrb[0].mxu0
  %v804 = vadd.f32 0.0, %v803
  %805 = vdwg.mxu0
  %806 = vmatprep.subr.mxu0 0.0
  %807 = vmatpush1.msra.mxu0 %v344
  %808 = vmatprep.subr.mxu0 0.0
  %809 = vmatpush1.msra.mxu0 %v347
  %810 = vmatprep.subr.mxu0 0.0
  %811 = vmatpush1.msra.mxu0 %v350
  %812 = vmatprep.subr.mxu0 0.0
  %813 = vmatpush1.msra.mxu0 %v353
  %814 = vmatprep.subr.mxu0 0.0
  %815 = vmatpush1.msra.mxu0 %v356
  %816 = vmatprep.subr.mxu0 0.0
  %817 = vmatpush1.msra.mxu0 %v359
  %818 = vmatprep.subr.mxu0 0.0
  %819 = vmatpush1.msra.mxu0 %v362
  %820 = vmatprep.subr.mxu0 0.0
  %821 = vmatpush1.msra.mxu0 %v365
  %822 = vmatprep.subr.mxu0 0.0
  %823 = vmatpush1.msra.mxu0 %v368
  %824 = vmatprep.subr.mxu0 0.0
  %825 = vmatpush1.msra.mxu0 %v371
  %826 = vmatprep.subr.mxu0 0.0
  %827 = vmatpush1.msra.mxu0 %v374
  %828 = vmatprep.subr.mxu0 0.0
  %829 = vmatpush1.msra.mxu0 %v377
  %830 = vmatprep.subr.mxu0 0.0
  %831 = vmatpush1.msra.mxu0 %v380
  %832 = vmatprep.subr.mxu0 0.0
  %833 = vmatpush1.msra.mxu0 %v383
  %834 = vmatprep.subr.mxu0 0.0
  %835 = vmatpush1.msra.mxu0 %v386
  %836 = vmatprep.subr.mxu0 0.0
  %837 = vmatpush1.msra.mxu0 %v389
  %838 = vmatprep.subr.mxu0 0.0
  %839 = vmatpush1.msra.mxu0 0.0
  %840 = vmatprep.subr.mxu0 0.0
  %841 = vmatpush1.msra.mxu0 0.0
  %842 = vmatprep.subr.mxu0 0.0
  %843 = vmatpush1.msra.mxu0 0.0
  %844 = vmatprep.subr.mxu0 0.0
  %845 = vmatpush1.msra.mxu0 0.0
  %846 = vmatprep.subr.mxu0 0.0
  %847 = vmatpush1.msra.mxu0 0.0
  %848 = vmatprep.subr.mxu0 0.0
  %849 = vmatpush1.msra.mxu0 0.0
  %850 = vmatprep.subr.mxu0 0.0
  %851 = vmatpush1.msra.mxu0 0.0
  %852 = vmatprep.subr.mxu0 0.0
  %853 = vmatpush1.msra.mxu0 0.0
  %854 = vmatprep.subr.mxu0 0.0
  %855 = vmatpush1.msra.mxu0 0.0
  %856 = vmatprep.subr.mxu0 0.0
  %857 = vmatpush1.msra.mxu0 0.0
  %858 = vmatprep.subr.mxu0 0.0
  %859 = vmatpush1.msra.mxu0 0.0
  %860 = vmatprep.subr.mxu0 0.0
  %861 = vmatpush1.msra.mxu0 0.0
  %862 = vmatprep.subr.mxu0 0.0
  %863 = vmatpush1.msra.mxu0 0.0
  %864 = vmatprep.subr.mxu0 0.0
  %865 = vmatpush1.msra.mxu0 0.0
  %866 = vmatprep.subr.mxu0 0.0
  %867 = vmatpush1.msra.mxu0 0.0
  %868 = vmatprep.subr.mxu0 0.0
  %869 = vmatpush1.msra.mxu0 0.0
  %870 = vmatprep.mubr.f32.mxu0 0.0
  %871 = vmatmul.mubr.f32.gmra.mrb[0].mxu0 %v726
  %v872 = vpop.f32.mrb[0].mxu0
  %v873 = vadd.f32 0.0, %v872
  %v874 = vpop.f32.mrb[0].mxu0
  %875 = vdwg.mxu0
  %v876 = vadd.f32 %v732, %v802
  %v877 = vmul.f32 %v876, 0.5
  %v878 = vtanh.pop %v877
  %v879 = vmul.f32 %v878, 0.5
  %v880 = vadd.f32 %v879, 0.5
  %v881 = vadd.f32 %v733, %v804
  %v882 = vmul.f32 %v881, 0.5
  %v883 = vtanh.pop %v882
  %v884 = vmul.f32 %v883, 0.5
  %v885 = vadd.f32 %v884, 0.5
  %v886 = vadd.f32 %v873, %v395
  %v887 = vmul.f32 %v880, %v886
  %v888 = vadd.f32 %v734, %v887
  %v889 = vtanh.pop %v888
  %v890 = vsub.f32 %v726, %v889
  %v891 = vmul.f32 %v885, %v890
  %v892 = vadd.f32 %v889, %v891
  %s893 = scalar_lea.vmem %s5, 16
  %894 = vst [vmem:[%s893] sm:$0xff] %v892
  %s895 = smul.u32 3, 3
  %s896 = smul.addr %s895, 8
  %s897 = scalar_lea.vmem [#allocation3], %s896
  %v898 = vld [vmem:[%s897] sm:$0xff]
  %v899 = vld [vmem:[%s897 + $0x8] sm:$0xff]
  %v900 = vld [vmem:[%s897 + $0x10] sm:$0xff]
  %901 = vmatprep.subr.mxu0 %v343
  %902 = vmatpush1.msra.mxu0 %v342
  %903 = vmatprep.subr.mxu0 %v346
  %904 = vmatpush1.msra.mxu0 %v345
  %905 = vmatprep.subr.mxu0 %v349
  %906 = vmatpush1.msra.mxu0 %v348
  %907 = vmatprep.subr.mxu0 %v352
  %908 = vmatpush1.msra.mxu0 %v351
  %909 = vmatprep.subr.mxu0 %v355
  %910 = vmatpush1.msra.mxu0 %v354
  %911 = vmatprep.subr.mxu0 %v358
  %912 = vmatpush1.msra.mxu0 %v357
  %913 = vmatprep.subr.mxu0 %v361
  %914 = vmatpush1.msra.mxu0 %v360
  %915 = vmatprep.subr.mxu0 %v364
  %916 = vmatpush1.msra.mxu0 %v363
  %917 = vmatprep.subr.mxu0 %v367
  %918 = vmatpush1.msra.mxu0 %v366
  %919 = vmatprep.subr.mxu0 %v370
  %920 = vmatpush1.msra.mxu0 %v369
  %921 = vmatprep.subr.mxu0 %v373
  %922 = vmatpush1.msra.mxu0 %v372
  %923 = vmatprep.subr.mxu0 %v376
  %924 = vmatpush1.msra.mxu0 %v375
  %925 = vmatprep.subr.mxu0 %v379
  %926 = vmatpush1.msra.mxu0 %v378
  %927 = vmatprep.subr.mxu0 %v382
  %928 = vmatpush1.msra.mxu0 %v381
  %929 = vmatprep.subr.mxu0 %v385
  %930 = vmatpush1.msra.mxu0 %v384
  %931 = vmatprep.subr.mxu0 %v388
  %932 = vmatpush1.msra.mxu0 %v387
  %933 = vmatprep.subr.mxu0 0.0
  %934 = vmatpush1.msra.mxu0 0.0
  %935 = vmatprep.subr.mxu0 0.0
  %936 = vmatpush1.msra.mxu0 0.0
  %937 = vmatprep.subr.mxu0 0.0
  %938 = vmatpush1.msra.mxu0 0.0
  %939 = vmatprep.subr.mxu0 0.0
  %940 = vmatpush1.msra.mxu0 0.0
  %941 = vmatprep.subr.mxu0 0.0
  %942 = vmatpush1.msra.mxu0 0.0
  %943 = vmatprep.subr.mxu0 0.0
  %944 = vmatpush1.msra.mxu0 0.0
  %945 = vmatprep.subr.mxu0 0.0
  %946 = vmatpush1.msra.mxu0 0.0
  %947 = vmatprep.subr.mxu0 0.0
  %948 = vmatpush1.msra.mxu0 0.0
  %949 = vmatprep.subr.mxu0 0.0
  %950 = vmatpush1.msra.mxu0 0.0
  %951 = vmatprep.subr.mxu0 0.0
  %952 = vmatpush1.msra.mxu0 0.0
  %953 = vmatprep.subr.mxu0 0.0
  %954 = vmatpush1.msra.mxu0 0.0
  %955 = vmatprep.subr.mxu0 0.0
  %956 = vmatpush1.msra.mxu0 0.0
  %957 = vmatprep.subr.mxu0 0.0
  %958 = vmatpush1.msra.mxu0 0.0
  %959 = vmatprep.subr.mxu0 0.0
  %960 = vmatpush1.msra.mxu0 0.0
  %961 = vmatprep.subr.mxu0 0.0
  %962 = vmatpush1.msra.mxu0 0.0
  %963 = vmatprep.subr.mxu0 0.0
  %964 = vmatpush1.msra.mxu0 0.0
  %965 = vmatprep.mubr.f32.mxu0 0.0
  %966 = vmatmul.mubr.f32.gmra.mrb[0].mxu0 %v892
  %v967 = vpop.f32.mrb[0].mxu0
  %v968 = vadd.f32 0.0, %v967
  %v969 = vpop.f32.mrb[0].mxu0
  %v970 = vadd.f32 0.0, %v969
  %971 = vdwg.mxu0
  %972 = vmatprep.subr.mxu0 0.0
  %973 = vmatpush1.msra.mxu0 %v344
  %974 = vmatprep.subr.mxu0 0.0
  %975 = vmatpush1.msra.mxu0 %v347
  %976 = vmatprep.subr.mxu0 0.0
  %977 = vmatpush1.msra.mxu0 %v350
  %978 = vmatprep.subr.mxu0 0.0
  %979 = vmatpush1.msra.mxu0 %v353
  %980 = vmatprep.subr.mxu0 0.0
  %981 = vmatpush1.msra.mxu0 %v356
  %982 = vmatprep.subr.mxu0 0.0
  %983 = vmatpush1.msra.mxu0 %v359
  %984 = vmatprep.subr.mxu0 0.0
  %985 = vmatpush1.msra.mxu0 %v362
  %986 = vmatprep.subr.mxu0 0.0
  %987 = vmatpush1.msra.mxu0 %v365
  %988 = vmatprep.subr.mxu0 0.0
  %989 = vmatpush1.msra.mxu0 %v368
  %990 = vmatprep.subr.mxu0 0.0
  %991 = vmatpush1.msra.mxu0 %v371
  %992 = vmatprep.subr.mxu0 0.0
  %993 = vmatpush1.msra.mxu0 %v374
  %994 = vmatprep.subr.mxu0 0.0
  %995 = vmatpush1.msra.mxu0 %v377
  %996 = vmatprep.subr.mxu0 0.0
  %997 = vmatpush1.msra.mxu0 %v380
  %998 = vmatprep.subr.mxu0 0.0
  %999 = vmatpush1.msra.mxu0 %v383
  %1000 = vmatprep.subr.mxu0 0.0
  %1001 = vmatpush1.msra.mxu0 %v386
  %1002 = vmatprep.subr.mxu0 0.0
  %1003 = vmatpush1.msra.mxu0 %v389
  %1004 = vmatprep.subr.mxu0 0.0
  %1005 = vmatpush1.msra.mxu0 0.0
  %1006 = vmatprep.subr.mxu0 0.0
  %1007 = vmatpush1.msra.mxu0 0.0
  %1008 = vmatprep.subr.mxu0 0.0
  %1009 = vmatpush1.msra.mxu0 0.0
  %1010 = vmatprep.subr.mxu0 0.0
  %1011 = vmatpush1.msra.mxu0 0.0
  %1012 = vmatprep.subr.mxu0 0.0
  %1013 = vmatpush1.msra.mxu0 0.0
  %1014 = vmatprep.subr.mxu0 0.0
  %1015 = vmatpush1.msra.mxu0 0.0
  %1016 = vmatprep.subr.mxu0 0.0
  %1017 = vmatpush1.msra.mxu0 0.0
  %1018 = vmatprep.subr.mxu0 0.0
  %1019 = vmatpush1.msra.mxu0 0.0
  %1020 = vmatprep.subr.mxu0 0.0
  %1021 = vmatpush1.msra.mxu0 0.0
  %1022 = vmatprep.subr.mxu0 0.0
  %1023 = vmatpush1.msra.mxu0 0.0
  %1024 = vmatprep.subr.mxu0 0.0
  %1025 = vmatpush1.msra.mxu0 0.0
  %1026 = vmatprep.subr.mxu0 0.0
  %1027 = vmatpush1.msra.mxu0 0.0
  %1028 = vmatprep.subr.mxu0 0.0
  %1029 = vmatpush1.msra.mxu0 0.0
  %1030 = vmatprep.subr.mxu0 0.0
  %1031 = vmatpush1.msra.mxu0 0.0
  %1032 = vmatprep.subr.mxu0 0.0
  %1033 = vmatpush1.msra.mxu0 0.0
  %1034 = vmatprep.subr.mxu0 0.0
  %1035 = vmatpush1.msra.mxu0 0.0
  %1036 = vmatprep.mubr.f32.mxu0 0.0
  %1037 = vmatmul.mubr.f32.gmra.mrb[0].mxu0 %v892
  %v1038 = vpop.f32.mrb[0].mxu0
  %v1039 = vadd.f32 0.0, %v1038
  %v1040 = vpop.f32.mrb[0].mxu0
  %1041 = vdwg.mxu0
  %v1042 = vadd.f32 %v898, %v968
  %v1043 = vmul.f32 %v1042, 0.5
  %v1044 = vtanh.pop %v1043
  %v1045 = vmul.f32 %v1044, 0.5
  %v1046 = vadd.f32 %v1045, 0.5
  %v1047 = vadd.f32 %v899, %v970
  %v1048 = vmul.f32 %v1047, 0.5
  %v1049 = vtanh.pop %v1048
  %v1050 = vmul.f32 %v1049, 0.5
  %v1051 = vadd.f32 %v1050, 0.5
  %v1052 = vadd.f32 %v1039, %v395
  %v1053 = vmul.f32 %v1046, %v1052
  %v1054 = vadd.f32 %v900, %v1053
  %v1055 = vtanh.pop %v1054
  %v1056 = vsub.f32 %v892, %v1055
  %v1057 = vmul.f32 %v1051, %v1056
  %v1058 = vadd.f32 %v1055, %v1057
  %s1059 = scalar_lea.vmem %s5, 24
  %1060 = vst [vmem:[%s1059] sm:$0xff] %v1058
  %s1061 = smul.u32 4, 3
  %s1062 = smul.addr %s1061, 8
  %s1063 = scalar_lea.vmem [#allocation3], %s1062
  %v1064 = vld [vmem:[%s1063] sm:$0xff]
  %v1065 = vld [vmem:[%s1063 + $0x8] sm:$0xff]
  %v1066 = vld [vmem:[%s1063 + $0x10] sm:$0xff]
  %1067 = vmatprep.subr.mxu0 %v343
  %1068 = vmatpush1.msra.mxu0 %v342
  %1069 = vmatprep.subr.mxu0 %v346
  %1070 = vmatpush1.msra.mxu0 %v345
  %1071 = vmatprep.subr.mxu0 %v349
  %1072 = vmatpush1.msra.mxu0 %v348
  %1073 = vmatprep.subr.mxu0 %v352
  %1074 = vmatpush1.msra.mxu0 %v351
  %1075 = vmatprep.subr.mxu0 %v355
  %1076 = vmatpush1.msra.mxu0 %v354
  %1077 = vmatprep.subr.mxu0 %v358
  %1078 = vmatpush1.msra.mxu0 %v357
  %1079 = vmatprep.subr.mxu0 %v361
  %1080 = vmatpush1.msra.mxu0 %v360
  %1081 = vmatprep.subr.mxu0 %v364
  %1082 = vmatpush1.msra.mxu0 %v363
  %1083 = vmatprep.subr.mxu0 %v367
  %1084 = vmatpush1.msra.mxu0 %v366
  %1085 = vmatprep.subr.mxu0 %v370
  %1086 = vmatpush1.msra.mxu0 %v369
  %1087 = vmatprep.subr.mxu0 %v373
  %1088 = vmatpush1.msra.mxu0 %v372
  %1089 = vmatprep.subr.mxu0 %v376
  %1090 = vmatpush1.msra.mxu0 %v375
  %1091 = vmatprep.subr.mxu0 %v379
  %1092 = vmatpush1.msra.mxu0 %v378
  %1093 = vmatprep.subr.mxu0 %v382
  %1094 = vmatpush1.msra.mxu0 %v381
  %1095 = vmatprep.subr.mxu0 %v385
  %1096 = vmatpush1.msra.mxu0 %v384
  %1097 = vmatprep.subr.mxu0 %v388
  %1098 = vmatpush1.msra.mxu0 %v387
  %1099 = vmatprep.subr.mxu0 0.0
  %1100 = vmatpush1.msra.mxu0 0.0
  %1101 = vmatprep.subr.mxu0 0.0
  %1102 = vmatpush1.msra.mxu0 0.0
  %1103 = vmatprep.subr.mxu0 0.0
  %1104 = vmatpush1.msra.mxu0 0.0
  %1105 = vmatprep.subr.mxu0 0.0
  %1106 = vmatpush1.msra.mxu0 0.0
  %1107 = vmatprep.subr.mxu0 0.0
  %1108 = vmatpush1.msra.mxu0 0.0
  %1109 = vmatprep.subr.mxu0 0.0
  %1110 = vmatpush1.msra.mxu0 0.0
  %1111 = vmatprep.subr.mxu0 0.0
  %1112 = vmatpush1.msra.mxu0 0.0
  %1113 = vmatprep.subr.mxu0 0.0
  %1114 = vmatpush1.msra.mxu0 0.0
  %1115 = vmatprep.subr.mxu0 0.0
  %1116 = vmatpush1.msra.mxu0 0.0
  %1117 = vmatprep.subr.mxu0 0.0
  %1118 = vmatpush1.msra.mxu0 0.0
  %1119 = vmatprep.subr.mxu0 0.0
  %1120 = vmatpush1.msra.mxu0 0.0
  %1121 = vmatprep.subr.mxu0 0.0
  %1122 = vmatpush1.msra.mxu0 0.0
  %1123 = vmatprep.subr.mxu0 0.0
  %1124 = vmatpush1.msra.mxu0 0.0
  %1125 = vmatprep.subr.mxu0 0.0
  %1126 = vmatpush1.msra.mxu0 0.0
  %1127 = vmatprep.subr.mxu0 0.0
  %1128 = vmatpush1.msra.mxu0 0.0
  %1129 = vmatprep.subr.mxu0 0.0
  %1130 = vmatpush1.msra.mxu0 0.0
  %1131 = vmatprep.mubr.f32.mxu0 0.0
  %1132 = vmatmul.mubr.f32.gmra.mrb[0].mxu0 %v1058
  %v1133 = vpop.f32.mrb[0].mxu0
  %v1134 = vadd.f32 0.0, %v1133
  %v1135 = vpop.f32.mrb[0].mxu0
  %v1136 = vadd.f32 0.0, %v1135
  %1137 = vdwg.mxu0
  %1138 = vmatprep.subr.mxu0 0.0
  %1139 = vmatpush1.msra.mxu0 %v344
  %1140 = vmatprep.subr.mxu0 0.0
  %1141 = vmatpush1.msra.mxu0 %v347
  %1142 = vmatprep.subr.mxu0 0.0
  %1143 = vmatpush1.msra.mxu0 %v350
  %1144 = vmatprep.subr.mxu0 0.0
  %1145 = vmatpush1.msra.mxu0 %v353
  %1146 = vmatprep.subr.mxu0 0.0
  %1147 = vmatpush1.msra.mxu0 %v356
  %1148 = vmatprep.subr.mxu0 0.0
  %1149 = vmatpush1.msra.mxu0 %v359
  %1150 = vmatprep.subr.mxu0 0.0
  %1151 = vmatpush1.msra.mxu0 %v362
  %1152 = vmatprep.subr.mxu0 0.0
  %1153 = vmatpush1.msra.mxu0 %v365
  %1154 = vmatprep.subr.mxu0 0.0
  %1155 = vmatpush1.msra.mxu0 %v368
  %1156 = vmatprep.subr.mxu0 0.0
  %1157 = vmatpush1.msra.mxu0 %v371
  %1158 = vmatprep.subr.mxu0 0.0
  %1159 = vmatpush1.msra.mxu0 %v374
  %1160 = vmatprep.subr.mxu0 0.0
  %1161 = vmatpush1.msra.mxu0 %v377
  %1162 = vmatprep.subr.mxu0 0.0
  %1163 = vmatpush1.msra.mxu0 %v380
  %1164 = vmatprep.subr.mxu0 0.0
  %1165 = vmatpush1.msra.mxu0 %v383
  %1166 = vmatprep.subr.mxu0 0.0
  %1167 = vmatpush1.msra.mxu0 %v386
  %1168 = vmatprep.subr.mxu0 0.0
  %1169 = vmatpush1.msra.mxu0 %v389
  %1170 = vmatprep.subr.mxu0 0.0
  %1171 = vmatpush1.msra.mxu0 0.0
  %1172 = vmatprep.subr.mxu0 0.0
  %1173 = vmatpush1.msra.mxu0 0.0
  %1174 = vmatprep.subr.mxu0 0.0
  %1175 = vmatpush1.msra.mxu0 0.0
  %1176 = vmatprep.subr.mxu0 0.0
  %1177 = vmatpush1.msra.mxu0 0.0
  %1178 = vmatprep.subr.mxu0 0.0
  %1179 = vmatpush1.msra.mxu0 0.0
  %1180 = vmatprep.subr.mxu0 0.0
  %1181 = vmatpush1.msra.mxu0 0.0
  %1182 = vmatprep.subr.mxu0 0.0
  %1183 = vmatpush1.msra.mxu0 0.0
  %1184 = vmatprep.subr.mxu0 0.0
  %1185 = vmatpush1.msra.mxu0 0.0
  %1186 = vmatprep.subr.mxu0 0.0
  %1187 = vmatpush1.msra.mxu0 0.0
  %1188 = vmatprep.subr.mxu0 0.0
  %1189 = vmatpush1.msra.mxu0 0.0
  %1190 = vmatprep.subr.mxu0 0.0
  %1191 = vmatpush1.msra.mxu0 0.0
  %1192 = vmatprep.subr.mxu0 0.0
  %1193 = vmatpush1.msra.mxu0 0.0
  %1194 = vmatprep.subr.mxu0 0.0
  %1195 = vmatpush1.msra.mxu0 0.0
  %1196 = vmatprep.subr.mxu0 0.0
  %1197 = vmatpush1.msra.mxu0 0.0
  %1198 = vmatprep.subr.mxu0 0.0
  %1199 = vmatpush1.msra.mxu0 0.0
  %1200 = vmatprep.subr.mxu0 0.0
  %1201 = vmatpush1.msra.mxu0 0.0
  %1202 = vmatprep.mubr.f32.mxu0 0.0
  %1203 = vmatmul.mubr.f32.gmra.mrb[0].mxu0 %v1058
  %v1204 = vpop.f32.mrb[0].mxu0
  %v1205 = vadd.f32 0.0, %v1204
  %v1206 = vpop.f32.mrb[0].mxu0
  %1207 = vdwg.mxu0
  %v1208 = vadd.f32 %v1064, %v1134
  %v1209 = vmul.f32 %v1208, 0.5
  %v1210 = vtanh.pop %v1209
  %v1211 = vmul.f32 %v1210, 0.5
  %v1212 = vadd.f32 %v1211, 0.5
  %v1213 = vadd.f32 %v1065, %v1136
  %v1214 = vmul.f32 %v1213, 0.5
  %v1215 = vtanh.pop %v1214
  %v1216 = vmul.f32 %v1215, 0.5
  %v1217 = vadd.f32 %v1216, 0.5
  %v1218 = vadd.f32 %v1205, %v395
  %v1219 = vmul.f32 %v1212, %v1218
  %v1220 = vadd.f32 %v1066, %v1219
  %v1221 = vtanh.pop %v1220
  %v1222 = vsub.f32 %v1058, %v1221
  %v1223 = vmul.f32 %v1217, %v1222
  %v1224 = vadd.f32 %v1221, %v1223
  %s1225 = scalar_lea.vmem %s5, 32
  %1226 = vst [vmem:[%s1225] sm:$0xff] %v1224
  %s1227 = smul.u32 5, 3
  %s1228 = smul.addr %s1227, 8
  %s1229 = scalar_lea.vmem [#allocation3], %s1228
  %v1230 = vld [vmem:[%s1229] sm:$0xff]
  %v1231 = vld [vmem:[%s1229 + $0x8] sm:$0xff]
  %v1232 = vld [vmem:[%s1229 + $0x10] sm:$0xff]
  %1233 = vmatprep.subr.mxu0 %v343
  %1234 = vmatpush1.msra.mxu0 %v342
  %1235 = vmatprep.subr.mxu0 %v346
  %1236 = vmatpush1.msra.mxu0 %v345
  %1237 = vmatprep.subr.mxu0 %v349
  %1238 = vmatpush1.msra.mxu0 %v348
  %1239 = vmatprep.subr.mxu0 %v352
  %1240 = vmatpush1.msra.mxu0 %v351
  %1241 = vmatprep.subr.mxu0 %v355
  %1242 = vmatpush1.msra.mxu0 %v354
  %1243 = vmatprep.subr.mxu0 %v358
  %1244 = vmatpush1.msra.mxu0 %v357
  %1245 = vmatprep.subr.mxu0 %v361
  %1246 = vmatpush1.msra.mxu0 %v360
  %1247 = vmatprep.subr.mxu0 %v364
  %1248 = vmatpush1.msra.mxu0 %v363
  %1249 = vmatprep.subr.mxu0 %v367
  %1250 = vmatpush1.msra.mxu0 %v366
  %1251 = vmatprep.subr.mxu0 %v370
  %1252 = vmatpush1.msra.mxu0 %v369
  %1253 = vmatprep.subr.mxu0 %v373
  %1254 = vmatpush1.msra.mxu0 %v372
  %1255 = vmatprep.subr.mxu0 %v376
  %1256 = vmatpush1.msra.mxu0 %v375
  %1257 = vmatprep.subr.mxu0 %v379
  %1258 = vmatpush1.msra.mxu0 %v378
  %1259 = vmatprep.subr.mxu0 %v382
  %1260 = vmatpush1.msra.mxu0 %v381
  %1261 = vmatprep.subr.mxu0 %v385
  %1262 = vmatpush1.msra.mxu0 %v384
  %1263 = vmatprep.subr.mxu0 %v388
  %1264 = vmatpush1.msra.mxu0 %v387
  %1265 = vmatprep.subr.mxu0 0.0
  %1266 = vmatpush1.msra.mxu0 0.0
  %1267 = vmatprep.subr.mxu0 0.0
  %1268 = vmatpush1.msra.mxu0 0.0
  %1269 = vmatprep.subr.mxu0 0.0
  %1270 = vmatpush1.msra.mxu0 0.0
  %1271 = vmatprep.subr.mxu0 0.0
  %1272 = vmatpush1.msra.mxu0 0.0
  %1273 = vmatprep.subr.mxu0 0.0
  %1274 = vmatpush1.msra.mxu0 0.0
  %1275 = vmatprep.subr.mxu0 0.0
  %1276 = vmatpush1.msra.mxu0 0.0
  %1277 = vmatprep.subr.mxu0 0.0
  %1278 = vmatpush1.msra.mxu0 0.0
  %1279 = vmatprep.subr.mxu0 0.0
  %1280 = vmatpush1.msra.mxu0 0.0
  %1281 = vmatprep.subr.mxu0 0.0
  %1282 = vmatpush1.msra.mxu0 0.0
  %1283 = vmatprep.subr.mxu0 0.0
  %1284 = vmatpush1.msra.mxu0 0.0
  %1285 = vmatprep.subr.mxu0 0.0
  %1286 = vmatpush1.msra.mxu0 0.0
  %1287 = vmatprep.subr.mxu0 0.0
  %1288 = vmatpush1.msra.mxu0 0.0
  %1289 = vmatprep.subr.mxu0 0.0
  %1290 = vmatpush1.msra.mxu0 0.0
  %1291 = vmatprep.subr.mxu0 0.0
  %1292 = vmatpush1.msra.mxu0 0.0
  %1293 = vmatprep.subr.mxu0 0.0
  %1294 = vmatpush1.msra.mxu0 0.0
  %1295 = vmatprep.subr.mxu0 0.0
  %1296 = vmatpush1.msra.mxu0 0.0
  %1297 = vmatprep.mubr.f32.mxu0 0.0
  %1298 = vmatmul.mubr.f32.gmra.mrb[0].mxu0 %v1224
  %v1299 = vpop.f32.mrb[0].mxu0
  %v1300 = vadd.f32 0.0, %v1299
  %v1301 = vpop.f32.mrb[0].mxu0
  %v1302 = vadd.f32 0.0, %v1301
  %1303 = vdwg.mxu0
  %1304 = vmatprep.subr.mxu0 0.0
  %1305 = vmatpush1.msra.mxu0 %v344
  %1306 = vmatprep.subr.mxu0 0.0
  %1307 = vmatpush1.msra.mxu0 %v347
  %1308 = vmatprep.subr.mxu0 0.0
  %1309 = vmatpush1.msra.mxu0 %v350
  %1310 = vmatprep.subr.mxu0 0.0
  %1311 = vmatpush1.msra.mxu0 %v353
  %1312 = vmatprep.subr.mxu0 0.0
  %1313 = vmatpush1.msra.mxu0 %v356
  %1314 = vmatprep.subr.mxu0 0.0
  %1315 = vmatpush1.msra.mxu0 %v359
  %1316 = vmatprep.subr.mxu0 0.0
  %1317 = vmatpush1.msra.mxu0 %v362
  %1318 = vmatprep.subr.mxu0 0.0
  %1319 = vmatpush1.msra.mxu0 %v365
  %1320 = vmatprep.subr.mxu0 0.0
  %1321 = vmatpush1.msra.mxu0 %v368
  %1322 = vmatprep.subr.mxu0 0.0
  %1323 = vmatpush1.msra.mxu0 %v371
  %1324 = vmatprep.subr.mxu0 0.0
  %1325 = vmatpush1.msra.mxu0 %v374
  %1326 = vmatprep.subr.mxu0 0.0
  %1327 = vmatpush1.msra.mxu0 %v377
  %1328 = vmatprep.subr.mxu0 0.0
  %1329 = vmatpush1.msra.mxu0 %v380
  %1330 = vmatprep.subr.mxu0 0.0
  %1331 = vmatpush1.msra.mxu0 %v383
  %1332 = vmatprep.subr.mxu0 0.0
  %1333 = vmatpush1.msra.mxu0 %v386
  %1334 = vmatprep.subr.mxu0 0.0
  %1335 = vmatpush1.msra.mxu0 %v389
  %1336 = vmatprep.subr.mxu0 0.0
  %1337 = vmatpush1.msra.mxu0 0.0
  %1338 = vmatprep.subr.mxu0 0.0
  %1339 = vmatpush1.msra.mxu0 0.0
  %1340 = vmatprep.subr.mxu0 0.0
  %1341 = vmatpush1.msra.mxu0 0.0
  %1342 = vmatprep.subr.mxu0 0.0
  %1343 = vmatpush1.msra.mxu0 0.0
  %1344 = vmatprep.subr.mxu0 0.0
  %1345 = vmatpush1.msra.mxu0 0.0
  %1346 = vmatprep.subr.mxu0 0.0
  %1347 = vmatpush1.msra.mxu0 0.0
  %1348 = vmatprep.subr.mxu0 0.0
  %1349 = vmatpush1.msra.mxu0 0.0
  %1350 = vmatprep.subr.mxu0 0.0
  %1351 = vmatpush1.msra.mxu0 0.0
  %1352 = vmatprep.subr.mxu0 0.0
  %1353 = vmatpush1.msra.mxu0 0.0
  %1354 = vmatprep.subr.mxu0 0.0
  %1355 = vmatpush1.msra.mxu0 0.0
  %1356 = vmatprep.subr.mxu0 0.0
  %1357 = vmatpush1.msra.mxu0 0.0
  %1358 = vmatprep.subr.mxu0 0.0
  %1359 = vmatpush1.msra.mxu0 0.0
  %1360 = vmatprep.subr.mxu0 0.0
  %1361 = vmatpush1.msra.mxu0 0.0
  %1362 = vmatprep.subr.mxu0 0.0
  %1363 = vmatpush1.msra.mxu0 0.0
  %1364 = vmatprep.subr.mxu0 0.0
  %1365 = vmatpush1.msra.mxu0 0.0
  %1366 = vmatprep.subr.mxu0 0.0
  %1367 = vmatpush1.msra.mxu0 0.0
  %1368 = vmatprep.mubr.f32.mxu0 0.0
  %1369 = vmatmul.mubr.f32.gmra.mrb[0].mxu0 %v1224
  %v1370 = vpop.f32.mrb[0].mxu0
  %v1371 = vadd.f32 0.0, %v1370
  %v1372 = vpop.f32.mrb[0].mxu0
  %1373 = vdwg.mxu0
  %v1374 = vadd.f32 %v1230, %v1300
  %v1375 = vmul.f32 %v1374, 0.5
  %v1376 = vtanh.pop %v1375
  %v1377 = vmul.f32 %v1376, 0.5
  %v1378 = vadd.f32 %v1377, 0.5
  %v1379 = vadd.f32 %v1231, %v1302
  %v1380 = vmul.f32 %v1379, 0.5
  %v1381 = vtanh.pop %v1380
  %v1382 = vmul.f32 %v1381, 0.5
  %v1383 = vadd.f32 %v1382, 0.5
  %v1384 = vadd.f32 %v1371, %v395
  %v1385 = vmul.f32 %v1378, %v1384
  %v1386 = vadd.f32 %v1232, %v1385
  %v1387 = vtanh.pop %v1386
  %v1388 = vsub.f32 %v1224, %v1387
  %v1389 = vmul.f32 %v1383, %v1388
  %v1390 = vadd.f32 %v1387, %v1389
  %s1391 = scalar_lea.vmem %s5, 40
  %1392 = vst [vmem:[%s1391] sm:$0xff] %v1390
  %s1393 = smul.u32 6, 3
  %s1394 = smul.addr %s1393, 8
  %s1395 = scalar_lea.vmem [#allocation3], %s1394
  %v1396 = vld [vmem:[%s1395] sm:$0xff]
  %v1397 = vld [vmem:[%s1395 + $0x8] sm:$0xff]
  %v1398 = vld [vmem:[%s1395 + $0x10] sm:$0xff]
  %1399 = vmatprep.subr.mxu0 %v343
  %1400 = vmatpush1.msra.mxu0 %v342
  %1401 = vmatprep.subr.mxu0 %v346
  %1402 = vmatpush1.msra.mxu0 %v345
  %1403 = vmatprep.subr.mxu0 %v349
  %1404 = vmatpush1.msra.mxu0 %v348
  %1405 = vmatprep.subr.mxu0 %v352
  %1406 = vmatpush1.msra.mxu0 %v351
  %1407 = vmatprep.subr.mxu0 %v355
  %1408 = vmatpush1.msra.mxu0 %v354
  %1409 = vmatprep.subr.mxu0 %v358
  %1410 = vmatpush1.msra.mxu0 %v357
  %1411 = vmatprep.subr.mxu0 %v361
  %1412 = vmatpush1.msra.mxu0 %v360
  %1413 = vmatprep.subr.mxu0 %v364
  %1414 = vmatpush1.msra.mxu0 %v363
  %1415 = vmatprep.subr.mxu0 %v367
  %1416 = vmatpush1.msra.mxu0 %v366
  %1417 = vmatprep.subr.mxu0 %v370
  %1418 = vmatpush1.msra.mxu0 %v369
  %1419 = vmatprep.subr.mxu0 %v373
  %1420 = vmatpush1.msra.mxu0 %v372
  %1421 = vmatprep.subr.mxu0 %v376
  %1422 = vmatpush1.msra.mxu0 %v375
  %1423 = vmatprep.subr.mxu0 %v379
  %1424 = vmatpush1.msra.mxu0 %v378
  %1425 = vmatprep.subr.mxu0 %v382
  %1426 = vmatpush1.msra.mxu0 %v381
  %1427 = vmatprep.subr.mxu0 %v385
  %1428 = vmatpush1.msra.mxu0 %v384
  %1429 = vmatprep.subr.mxu0 %v388
  %1430 = vmatpush1.msra.mxu0 %v387
  %1431 = vmatprep.subr.mxu0 0.0
  %1432 = vmatpush1.msra.mxu0 0.0
  %1433 = vmatprep.subr.mxu0 0.0
  %1434 = vmatpush1.msra.mxu0 0.0
  %1435 = vmatprep.subr.mxu0 0.0
  %1436 = vmatpush1.msra.mxu0 0.0
  %1437 = vmatprep.subr.mxu0 0.0
  %1438 = vmatpush1.msra.mxu0 0.0
  %1439 = vmatprep.subr.mxu0 0.0
  %1440 = vmatpush1.msra.mxu0 0.0
  %1441 = vmatprep.subr.mxu0 0.0
  %1442 = vmatpush1.msra.mxu0 0.0
  %1443 = vmatprep.subr.mxu0 0.0
  %1444 = vmatpush1.msra.mxu0 0.0
  %1445 = vmatprep.subr.mxu0 0.0
  %1446 = vmatpush1.msra.mxu0 0.0
  %1447 = vmatprep.subr.mxu0 0.0
  %1448 = vmatpush1.msra.mxu0 0.0
  %1449 = vmatprep.subr.mxu0 0.0
  %1450 = vmatpush1.msra.mxu0 0.0
  %1451 = vmatprep.subr.mxu0 0.0
  %1452 = vmatpush1.msra.mxu0 0.0
  %1453 = vmatprep.subr.mxu0 0.0
  %1454 = vmatpush1.msra.mxu0 0.0
  %1455 = vmatprep.subr.mxu0 0.0
  %1456 = vmatpush1.msra.mxu0 0.0
  %1457 = vmatprep.subr.mxu0 0.0
  %1458 = vmatpush1.msra.mxu0 0.0
  %1459 = vmatprep.subr.mxu0 0.0
  %1460 = vmatpush1.msra.mxu0 0.0
  %1461 = vmatprep.subr.mxu0 0.0
  %1462 = vmatpush1.msra.mxu0 0.0
  %1463 = vmatprep.mubr.f32.mxu0 0.0
  %1464 = vmatmul.mubr.f32.gmra.mrb[0].mxu0 %v1390
  %v1465 = vpop.f32.mrb[0].mxu0
  %v1466 = vadd.f32 0.0, %v1465
  %v1467 = vpop.f32.mrb[0].mxu0
  %v1468 = vadd.f32 0.0, %v1467
  %1469 = vdwg.mxu0
  %1470 = vmatprep.subr.mxu0 0.0
  %1471 = vmatpush1.msra.mxu0 %v344
  %1472 = vmatprep.subr.mxu0 0.0
  %1473 = vmatpush1.msra.mxu0 %v347
  %1474 = vmatprep.subr.mxu0 0.0
  %1475 = vmatpush1.msra.mxu0 %v350
  %1476 = vmatprep.subr.mxu0 0.0
  %1477 = vmatpush1.msra.mxu0 %v353
  %1478 = vmatprep.subr.mxu0 0.0
  %1479 = vmatpush1.msra.mxu0 %v356
  %1480 = vmatprep.subr.mxu0 0.0
  %1481 = vmatpush1.msra.mxu0 %v359
  %1482 = vmatprep.subr.mxu0 0.0
  %1483 = vmatpush1.msra.mxu0 %v362
  %1484 = vmatprep.subr.mxu0 0.0
  %1485 = vmatpush1.msra.mxu0 %v365
  %1486 = vmatprep.subr.mxu0 0.0
  %1487 = vmatpush1.msra.mxu0 %v368
  %1488 = vmatprep.subr.mxu0 0.0
  %1489 = vmatpush1.msra.mxu0 %v371
  %1490 = vmatprep.subr.mxu0 0.0
  %1491 = vmatpush1.msra.mxu0 %v374
  %1492 = vmatprep.subr.mxu0 0.0
  %1493 = vmatpush1.msra.mxu0 %v377
  %1494 = vmatprep.subr.mxu0 0.0
  %1495 = vmatpush1.msra.mxu0 %v380
  %1496 = vmatprep.subr.mxu0 0.0
  %1497 = vmatpush1.msra.mxu0 %v383
  %1498 = vmatprep.subr.mxu0 0.0
  %1499 = vmatpush1.msra.mxu0 %v386
  %1500 = vmatprep.subr.mxu0 0.0
  %1501 = vmatpush1.msra.mxu0 %v389
  %1502 = vmatprep.subr.mxu0 0.0
  %1503 = vmatpush1.msra.mxu0 0.0
  %1504 = vmatprep.subr.mxu0 0.0
  %1505 = vmatpush1.msra.mxu0 0.0
  %1506 = vmatprep.subr.mxu0 0.0
  %1507 = vmatpush1.msra.mxu0 0.0
  %1508 = vmatprep.subr.mxu0 0.0
  %1509 = vmatpush1.msra.mxu0 0.0
  %1510 = vmatprep.subr.mxu0 0.0
  %1511 = vmatpush1.msra.mxu0 0.0
  %1512 = vmatprep.subr.mxu0 0.0
  %1513 = vmatpush1.msra.mxu0 0.0
  %1514 = vmatprep.subr.mxu0 0.0
  %1515 = vmatpush1.msra.mxu0 0.0
  %1516 = vmatprep.subr.mxu0 0.0
  %1517 = vmatpush1.msra.mxu0 0.0
  %1518 = vmatprep.subr.mxu0 0.0
  %1519 = vmatpush1.msra.mxu0 0.0
  %1520 = vmatprep.subr.mxu0 0.0
  %1521 = vmatpush1.msra.mxu0 0.0
  %1522 = vmatprep.subr.mxu0 0.0
  %1523 = vmatpush1.msra.mxu0 0.0
  %1524 = vmatprep.subr.mxu0 0.0
  %1525 = vmatpush1.msra.mxu0 0.0
  %1526 = vmatprep.subr.mxu0 0.0
  %1527 = vmatpush1.msra.mxu0 0.0
  %1528 = vmatprep.subr.mxu0 0.0
  %1529 = vmatpush1.msra.mxu0 0.0
  %1530 = vmatprep.subr.mxu0 0.0
  %1531 = vmatpush1.msra.mxu0 0.0
  %1532 = vmatprep.subr.mxu0 0.0
  %1533 = vmatpush1.msra.mxu0 0.0
  %1534 = vmatprep.mubr.f32.mxu0 0.0
  %1535 = vmatmul.mubr.f32.gmra.mrb[0].mxu0 %v1390
  %v1536 = vpop.f32.mrb[0].mxu0
  %v1537 = vadd.f32 0.0, %v1536
  %v1538 = vpop.f32.mrb[0].mxu0
  %1539 = vdwg.mxu0
  %v1540 = vadd.f32 %v1396, %v1466
  %v1541 = vmul.f32 %v1540, 0.5
  %v1542 = vtanh.pop %v1541
  %v1543 = vmul.f32 %v1542, 0.5
  %v1544 = vadd.f32 %v1543, 0.5
  %v1545 = vadd.f32 %v1397, %v1468
  %v1546 = vmul.f32 %v1545, 0.5
  %v1547 = vtanh.pop %v1546
  %v1548 = vmul.f32 %v1547, 0.5
  %v1549 = vadd.f32 %v1548, 0.5
  %v1550 = vadd.f32 %v1537, %v395
  %v1551 = vmul.f32 %v1544, %v1550
  %v1552 = vadd.f32 %v1398, %v1551
  %v1553 = vtanh.pop %v1552
  %v1554 = vsub.f32 %v1390, %v1553
  %v1555 = vmul.f32 %v1549, %v1554
  %v1556 = vadd.f32 %v1553, %v1555
  %s1557 = scalar_lea.vmem %s5, 48
  %1558 = vst [vmem:[%s1557] sm:$0xff] %v1556
  %s1559 = smul.u32 7, 3
  %s1560 = smul.addr %s1559, 8
  %s1561 = scalar_lea.vmem [#allocation3], %s1560
  %v1562 = vld [vmem:[%s1561] sm:$0xff]
  %v1563 = vld [vmem:[%s1561 + $0x8] sm:$0xff]
  %v1564 = vld [vmem:[%s1561 + $0x10] sm:$0xff]
  %1565 = vmatprep.subr.mxu0 %v343
  %1566 = vmatpush1.msra.mxu0 %v342
  %1567 = vmatprep.subr.mxu0 %v346
  %1568 = vmatpush1.msra.mxu0 %v345
  %1569 = vmatprep.subr.mxu0 %v349
  %1570 = vmatpush1.msra.mxu0 %v348
  %1571 = vmatprep.subr.mxu0 %v352
  %1572 = vmatpush1.msra.mxu0 %v351
  %1573 = vmatprep.subr.mxu0 %v355
  %1574 = vmatpush1.msra.mxu0 %v354
  %1575 = vmatprep.subr.mxu0 %v358
  %1576 = vmatpush1.msra.mxu0 %v357
  %1577 = vmatprep.subr.mxu0 %v361
  %1578 = vmatpush1.msra.mxu0 %v360
  %1579 = vmatprep.subr.mxu0 %v364
  %1580 = vmatpush1.msra.mxu0 %v363
  %1581 = vmatprep.subr.mxu0 %v367
  %1582 = vmatpush1.msra.mxu0 %v366
  %1583 = vmatprep.subr.mxu0 %v370
  %1584 = vmatpush1.msra.mxu0 %v369
  %1585 = vmatprep.subr.mxu0 %v373
  %1586 = vmatpush1.msra.mxu0 %v372
  %1587 = vmatprep.subr.mxu0 %v376
  %1588 = vmatpush1.msra.mxu0 %v375
  %1589 = vmatprep.subr.mxu0 %v379
  %1590 = vmatpush1.msra.mxu0 %v378
  %1591 = vmatprep.subr.mxu0 %v382
  %1592 = vmatpush1.msra.mxu0 %v381
  %1593 = vmatprep.subr.mxu0 %v385
  %1594 = vmatpush1.msra.mxu0 %v384
  %1595 = vmatprep.subr.mxu0 %v388
  %1596 = vmatpush1.msra.mxu0 %v387
  %1597 = vmatprep.subr.mxu0 0.0
  %1598 = vmatpush1.msra.mxu0 0.0
  %1599 = vmatprep.subr.mxu0 0.0
  %1600 = vmatpush1.msra.mxu0 0.0
  %1601 = vmatprep.subr.mxu0 0.0
  %1602 = vmatpush1.msra.mxu0 0.0
  %1603 = vmatprep.subr.mxu0 0.0
  %1604 = vmatpush1.msra.mxu0 0.0
  %1605 = vmatprep.subr.mxu0 0.0
  %1606 = vmatpush1.msra.mxu0 0.0
  %1607 = vmatprep.subr.mxu0 0.0
  %1608 = vmatpush1.msra.mxu0 0.0
  %1609 = vmatprep.subr.mxu0 0.0
  %1610 = vmatpush1.msra.mxu0 0.0
  %1611 = vmatprep.subr.mxu0 0.0
  %1612 = vmatpush1.msra.mxu0 0.0
  %1613 = vmatprep.subr.mxu0 0.0
  %1614 = vmatpush1.msra.mxu0 0.0
  %1615 = vmatprep.subr.mxu0 0.0
  %1616 = vmatpush1.msra.mxu0 0.0
  %1617 = vmatprep.subr.mxu0 0.0
  %1618 = vmatpush1.msra.mxu0 0.0
  %1619 = vmatprep.subr.mxu0 0.0
  %1620 = vmatpush1.msra.mxu0 0.0
  %1621 = vmatprep.subr.mxu0 0.0
  %1622 = vmatpush1.msra.mxu0 0.0
  %1623 = vmatprep.subr.mxu0 0.0
  %1624 = vmatpush1.msra.mxu0 0.0
  %1625 = vmatprep.subr.mxu0 0.0
  %1626 = vmatpush1.msra.mxu0 0.0
  %1627 = vmatprep.subr.mxu0 0.0
  %1628 = vmatpush1.msra.mxu0 0.0
  %1629 = vmatprep.mubr.f32.mxu0 0.0
  %1630 = vmatmul.mubr.f32.gmra.mrb[0].mxu0 %v1556
  %v1631 = vpop.f32.mrb[0].mxu0
  %v1632 = vadd.f32 0.0, %v1631
  %v1633 = vpop.f32.mrb[0].mxu0
  %v1634 = vadd.f32 0.0, %v1633
  %1635 = vdwg.mxu0
  %1636 = vmatprep.subr.mxu0 0.0
  %1637 = vmatpush1.msra.mxu0 %v344
  %1638 = vmatprep.subr.mxu0 0.0
  %1639 = vmatpush1.msra.mxu0 %v347
  %1640 = vmatprep.subr.mxu0 0.0
  %1641 = vmatpush1.msra.mxu0 %v350
  %1642 = vmatprep.subr.mxu0 0.0
  %1643 = vmatpush1.msra.mxu0 %v353
  %1644 = vmatprep.subr.mxu0 0.0
  %1645 = vmatpush1.msra.mxu0 %v356
  %1646 = vmatprep.subr.mxu0 0.0
  %1647 = vmatpush1.msra.mxu0 %v359
  %1648 = vmatprep.subr.mxu0 0.0
  %1649 = vmatpush1.msra.mxu0 %v362
  %1650 = vmatprep.subr.mxu0 0.0
  %1651 = vmatpush1.msra.mxu0 %v365
  %1652 = vmatprep.subr.mxu0 0.0
  %1653 = vmatpush1.msra.mxu0 %v368
  %1654 = vmatprep.subr.mxu0 0.0
  %1655 = vmatpush1.msra.mxu0 %v371
  %1656 = vmatprep.subr.mxu0 0.0
  %1657 = vmatpush1.msra.mxu0 %v374
  %1658 = vmatprep.subr.mxu0 0.0
  %1659 = vmatpush1.msra.mxu0 %v377
  %1660 = vmatprep.subr.mxu0 0.0
  %1661 = vmatpush1.msra.mxu0 %v380
  %1662 = vmatprep.subr.mxu0 0.0
  %1663 = vmatpush1.msra.mxu0 %v383
  %1664 = vmatprep.subr.mxu0 0.0
  %1665 = vmatpush1.msra.mxu0 %v386
  %1666 = vmatprep.subr.mxu0 0.0
  %1667 = vmatpush1.msra.mxu0 %v389
  %1668 = vmatprep.subr.mxu0 0.0
  %1669 = vmatpush1.msra.mxu0 0.0
  %1670 = vmatprep.subr.mxu0 0.0
  %1671 = vmatpush1.msra.mxu0 0.0
  %1672 = vmatprep.subr.mxu0 0.0
  %1673 = vmatpush1.msra.mxu0 0.0
  %1674 = vmatprep.subr.mxu0 0.0
  %1675 = vmatpush1.msra.mxu0 0.0
  %1676 = vmatprep.subr.mxu0 0.0
  %1677 = vmatpush1.msra.mxu0 0.0
  %1678 = vmatprep.subr.mxu0 0.0
  %1679 = vmatpush1.msra.mxu0 0.0
  %1680 = vmatprep.subr.mxu0 0.0
  %1681 = vmatpush1.msra.mxu0 0.0
  %1682 = vmatprep.subr.mxu0 0.0
  %1683 = vmatpush1.msra.mxu0 0.0
  %1684 = vmatprep.subr.mxu0 0.0
  %1685 = vmatpush1.msra.mxu0 0.0
  %1686 = vmatprep.subr.mxu0 0.0
  %1687 = vmatpush1.msra.mxu0 0.0
  %1688 = vmatprep.subr.mxu0 0.0
  %1689 = vmatpush1.msra.mxu0 0.0
  %1690 = vmatprep.subr.mxu0 0.0
  %1691 = vmatpush1.msra.mxu0 0.0
  %1692 = vmatprep.subr.mxu0 0.0
  %1693 = vmatpush1.msra.mxu0 0.0
  %1694 = vmatprep.subr.mxu0 0.0
  %1695 = vmatpush1.msra.mxu0 0.0
  %1696 = vmatprep.subr.mxu0 0.0
  %1697 = vmatpush1.msra.mxu0 0.0
  %1698 = vmatprep.subr.mxu0 0.0
  %1699 = vmatpush1.msra.mxu0 0.0
  %1700 = vmatprep.mubr.f32.mxu0 0.0
  %1701 = vmatmul.mubr.f32.gmra.mrb[0].mxu0 %v1556
  %v1702 = vpop.f32.mrb[0].mxu0
  %v1703 = vadd.f32 0.0, %v1702
  %v1704 = vpop.f32.mrb[0].mxu0
  %1705 = vdwg.mxu0
  %v1706 = vadd.f32 %v1562, %v1632
  %v1707 = vmul.f32 %v1706, 0.5
  %v1708 = vtanh.pop %v1707
  %v1709 = vmul.f32 %v1708, 0.5
  %v1710 = vadd.f32 %v1709, 0.5
  %v1711 = vadd.f32 %v1563, %v1634
  %v1712 = vmul.f32 %v1711, 0.5
  %v1713 = vtanh.pop %v1712
  %v1714 = vmul.f32 %v1713, 0.5
  %v1715 = vadd.f32 %v1714, 0.5
  %v1716 = vadd.f32 %v1703, %v395
  %v1717 = vmul.f32 %v1710, %v1716
  %v1718 = vadd.f32 %v1564, %v1717
  %v1719 = vtanh.pop %v1718
  %v1720 = vsub.f32 %v1556, %v1719
  %v1721 = vmul.f32 %v1715, %v1720
  %v1722 = vadd.f32 %v1719, %v1721
  %s1723 = scalar_lea.vmem %s5, 56
  %1724 = vst [vmem:[%s1723] sm:$0xff] %v1722
  %1725 = vst [vmem:[#allocation2] sm:$0xff] %v1722
  // Predicated region
  $region26: #{seq2seq_encoder_forward.3} parent=0 // pred_check
    %p1726 = pneg %p22
  $region27: #{seq2seq_encoder_forward.3} parent=0 // pred_check_branch
    %1728 = sbr.rel (%p1726) target = $region29
  $region28: #{seq2seq_encoder_forward.3} parent=0 // pred_region
    %1729 = vst [vmem:[%s6] sm:$0xff] %v1722
  $region29: #{seq2seq_encoder_forward.3} parent=0 // pred_fallthru
    _
  // Predicated region
  $region30: #{seq2seq_encoder_forward.3} parent=0 // pred_check
    _
  $region31: #{seq2seq_encoder_forward.3} parent=0 // pred_check_branch
    %1731 = sbr.rel (0) target = $region33
  $region32: #{seq2seq_encoder_forward.3} parent=0 // pred_region
    _
  $region33: #{seq2seq_encoder_forward.3} parent=0 // pred_fallthru
    _
  // Predicated region
  $region34: #{seq2seq_encoder_forward.3} parent=0 // pred_check
    _
  $region35: #{seq2seq_encoder_forward.3} parent=0 // pred_check_branch
    %1733 = sbr.rel (0) target = $region37
  $region36: #{seq2seq_encoder_forward.3} parent=0 // pred_region
    _
  $region37: #{seq2seq_encoder_forward.3} parent=0 // pred_fallthru
    _
  // Predicated region
  $region38: #{seq2seq_encoder_forward.3} parent=0 // pred_check
    _
  $region39: #{seq2seq_encoder_forward.3} parent=0 // pred_check_branch
    %1735 = sbr.rel (0) target = $region41
  $region40: #{seq2seq_encoder_forward.3} parent=0 // pred_region
    _
  $region41: #{seq2seq_encoder_forward.3} parent=0 // pred_fallthru
    _
  // Predicated region
  $region42: #{seq2seq_encoder_forward.3} parent=0 // pred_check
    _
  $region43: #{seq2seq_encoder_forward.3} parent=0 // pred_check_branch
    %1737 = sbr.rel (0) target = $region45
  $region44: #{seq2seq_encoder_forward.3} parent=0 // pred_region
    _
  $region45: #{seq2seq_encoder_forward.3} parent=0 // pred_fallthru
    _

</llo_original>
